<compile_context>
chip_gen: v7x
topology: tpu7x:2x2x1
jax: 0.10.0
libtpu: 0.0.40
codegen_flags: <defaults>
</compile_context>

<pallas_src>
import math
from functools import partial

import jax
import jax.numpy as jnp
from jax import lax
from jax.experimental import pallas as pl
from jax.experimental.pallas import tpu as pltpu


def _taps_3x3(fm3, H, W, C):
    """fm3: (H, W, C) value -> 9 zero-padded 'same' taps (order ky*3 + kx)."""
    dt = fm3.dtype
    zrow = jnp.zeros((1, W, C), dt)
    vpad = jnp.concatenate([zrow, fm3, zrow], axis=0)          # (H+2, W, C)
    zcol = jnp.zeros((H + 2, 1, C), dt)
    hpad = jnp.concatenate([zcol, vpad, zcol], axis=1)         # (H+2, W+2, C)
    return [hpad[ky:ky + H, kx:kx + W, :] for ky in range(3) for kx in range(3)]


def _fused_layer_kernel(attn_ref, lb_ref, enc_ref, mod_ref,
                        wproj_ref, wmix_ref, lw_ref, o_ref,
                        *, H, W, C, N, eps, compute_dtype):
    f32 = jnp.float32
    HW = H * W
    b = pl.program_id(0)

    # --- per-batch weight prep: kernel-attention mix of the N base kernels.
    #     Grid has no spatial axis, so this runs exactly once per batch.
    w_mix = wmix_ref[0].astype(f32) * attn_ref[b, 0]
    for n in range(1, N):
        w_mix = w_mix + wmix_ref[n].astype(f32) * attn_ref[b, n]      # (9C, C)

    # --- modulation / demodulation algebra:
    #     (mod+1) goes onto the activations; the demod becomes a per-output-channel
    #     scale  inv_norm[o] = rsqrt( sum_{k,i} ((mod_i+1) * w_mix[k,i,o])^2 )
    #     computed with one MXU matvec over the squared mixed weights.
    m = mod_ref[0].astype(f32) + 1.0                                   # (1, C)
    msq = jnp.concatenate([m * m] * 9, axis=1)                         # (1, 9C)
    ssq = jnp.dot(msq, w_mix * w_mix, preferred_element_type=f32)      # (1, C)
    inv_norm = lax.rsqrt(jnp.maximum(ssq, eps))                        # (1, C)

    # --- RandomFixedProjection fused with the cls-token broadcast add ---
    tokens = enc_ref[0].astype(f32)                                    # (1+HW, D)
    x = tokens[1:, :] + tokens[:1, :]                                  # (HW, D)
    fmap = jnp.dot(x.astype(compute_dtype), wproj_ref[...],
                   preferred_element_type=f32)                         # (HW, C)
    fmap = (fmap * m).astype(compute_dtype)                            # modulated

    # --- AdaptiveConv2DMod 3x3 "same": in-VMEM halo taps folded into one
    #     K = 9*C matmul, demod scale applied to the output ---
    taps = _taps_3x3(fmap.reshape(H, W, C), H, W, C)
    patch = jnp.concatenate(taps, axis=-1).reshape(HW, 9 * C)          # (HW, 9C)
    y = jnp.dot(patch, w_mix.astype(compute_dtype),
                preferred_element_type=f32) * inv_norm                 # (HW, C)

    # --- to_logits: conv2d_3x3(C -> 1) + bias ---
    taps = _taps_3x3(y.astype(compute_dtype).reshape(H, W, C), H, W, C)
    patch = jnp.concatenate(taps, axis=-1).reshape(HW, 9 * C)
    logit = jnp.dot(patch, lw_ref[...].astype(compute_dtype),
                    preferred_element_type=f32) + lb_ref[0]            # (HW, 1)
    o_ref[0] = logit.astype(o_ref.dtype)


def vision_aided_layer(image_encoding, text_embeds, p, *, eps=1e-8,
                       compute_dtype=jnp.float32):
    """image_encoding: (B, 1+HW, D) CLIP hidden states (cls first); returns (B, H, W)."""
    B, T, D = image_encoding.shape
    HW = T - 1
    H = W = int(math.sqrt(HW))
    assert H * W == HW, "non-square token grid"
    N, Co, Ci = p["conv_w"].shape[0], p["conv_w"].shape[1], p["conv_w"].shape[2]
    C = p["proj_w"].shape[1]
    assert C == Ci == Co, "module uses conv_dim throughout"

    # Tiny text-conditioning heads: plain jnp (a pallas_call is pure launch overhead).
    mod = (text_embeds @ p["mod_w"] + p["mod_b"]).astype(jnp.float32)          # (B, C)
    attn = jax.nn.softmax(text_embeds @ p["kmod_w"] + p["kmod_b"], axis=-1)
    attn = attn.astype(jnp.float32)                                            # (B, N)

    # Weight layout plumbing: conv taps flattened onto the matmul K axis (ky, kx, i).
    w_taps = jnp.transpose(p["conv_w"], (0, 3, 4, 2, 1)).reshape(N, 9 * C, C)
    w_taps = w_taps.astype(compute_dtype)
    w_proj = p["proj_w"].astype(compute_dtype)                                 # (D, C)
    lw = jnp.transpose(p["logit_w"], (2, 3, 1, 0)).reshape(9 * C, 1)
    lw = lw.astype(compute_dtype)
    lb = p["logit_b"].astype(jnp.float32)                                      # (1,)
    mod3 = mod.reshape(B, 1, C)

    # Explicit VMEM budget: blocks (double-buffered) + in-kernel temporaries.
    cb = jnp.dtype(compute_dtype).itemsize
    est = (2 * T * D * 4 + 2 * D * C * cb + 2 * N * 9 * C * C * cb
           + 2 * 9 * C * cb + 2 * C * 4 + 2 * HW * 4
           + 3 * 9 * C * C * 4 + 3 * HW * 9 * C * cb + 6 * HW * C * 4)
    vmem_limit = int(min(64 * 2 ** 20, max(32 * 2 ** 20, 2 * est)))

    out = pl.pallas_call(
        partial(_fused_layer_kernel, H=H, W=W, C=C, N=N, eps=eps,
                compute_dtype=compute_dtype),
        out_shape=jax.ShapeDtypeStruct((B, HW, 1), jnp.float32),
        grid=(B,),
        in_specs=[
            pl.BlockSpec(memory_space=pltpu.MemorySpace.SMEM),   # kernel attention (B, N)
            pl.BlockSpec(memory_space=pltpu.MemorySpace.SMEM),   # logit bias (1,)
            pl.BlockSpec((1, T, D), lambda b: (b, 0, 0)),        # CLIP tokens (cls + rest)
            pl.BlockSpec((1, 1, C), lambda b: (b, 0, 0)),        # mod (lane-dense)
            pl.BlockSpec((D, C), lambda b: (0, 0)),              # proj weights (resident)
            pl.BlockSpec((N, 9 * C, C), lambda b: (0, 0, 0)),    # base conv kernels
            pl.BlockSpec((9 * C, 1), lambda b: (0, 0)),          # logits conv weights
        ],
        out_specs=pl.BlockSpec((1, HW, 1), lambda b: (b, 0, 0)),
        compiler_params=pltpu.CompilerParams(
            dimension_semantics=("parallel",),                   # batch across TCs (v7x)
            vmem_limit_bytes=vmem_limit,
        ),
    )(attn, lb, image_encoding, mod3, w_proj, w_taps, lw)
    return out.reshape(B, H, W)


def vision_aided_discriminator_forward(image_encodings, text_embeds, params,
                                       *, layer_indices,
                                       compute_dtype=jnp.float32):
    # TODO(synk): self.clip.embed_images (frozen OpenCLIP ViT) has no Pallas
    # equivalent; `image_encodings` stands in for its per-layer hidden states.
    logits = []
    for layer_index, p in zip(layer_indices, params):
        logits.append(vision_aided_layer(image_encodings[layer_index],
                                         text_embeds, p,
                                         compute_dtype=compute_dtype))
    return logits


# ----------------------------------------------------------------------------
# Pure-JAX reference mirroring the PyTorch forward
# ----------------------------------------------------------------------------
def _conv3x3_nchw(x, w, groups=1):
    return lax.conv_general_dilated(
        x, w, window_strides=(1, 1), padding=((1, 1), (1, 1)),
        dimension_numbers=("NCHW", "OIHW", "NCHW"), feature_group_count=groups)


def reference_forward(image_encodings, text_embeds, params, *, layer_indices):
    logits = []
    for layer_index, p in zip(layer_indices, params):
        enc = image_encodings[layer_index]
        cls_token, rest_tokens = enc[:, :1], enc[:, 1:]
        B, HW, D = rest_tokens.shape
        H = W = int(math.sqrt(HW))
        fmap = jnp.transpose(rest_tokens, (0, 2, 1)).reshape(B, D, H, W)
        fmap = fmap + cls_token[:, 0][:, :, None, None]
        fmap = jnp.einsum("bchw,cd->bdhw", fmap, p["proj_w"])
        mod = text_embeds @ p["mod_w"] + p["mod_b"]
        attn = jax.nn.softmax(text_embeds @ p["kmod_w"] + p["kmod_b"], axis=-1)
        w = jnp.einsum("noikl,bn->boikl", p["conv_w"], attn)
        w = w * (mod[:, None, :, None, None] + 1.0)
        ssq = jnp.sum(w ** 2, axis=(2, 3, 4), keepdims=True)
        w = w * lax.rsqrt(jnp.maximum(ssq, 1e-8))
        Co, Ci = w.shape[1], w.shape[2]
        conv_out = _conv3x3_nchw(fmap.reshape(1, B * Ci, H, W),
                                 w.reshape(B * Co, Ci, 3, 3), groups=B)
        conv_out = conv_out.reshape(B, Co, H, W)
        lg = _conv3x3_nchw(conv_out, p["logit_w"]) + p["logit_b"].reshape(1, 1, 1, 1)
        logits.append(lg[:, 0])
    return logits


if __name__ == "__main__":
    B, DIM, CONV_DIM, TEXT_DIM = 2, 128, 128, 64
    NUM_KERNELS, H, W = 2, 8, 8
    HW = H * W
    LAYER_INDICES = (-1, -2, -3)
    NUM_CLIP_LAYERS = 4

    key = jax.random.PRNGKey(0)
    key, ktext, *kenc = jax.random.split(key, 2 + NUM_CLIP_LAYERS)
    # TODO(synk): stand-in for self.clip.embed_images (frozen OpenCLIP ViT).
    image_encodings = [
        jax.random.normal(k, (B, 1 + HW, DIM), dtype=jnp.float32) for k in kenc
    ]
    text_embeds = jax.random.normal(ktext, (B, TEXT_DIM), dtype=jnp.float32)

    params = []
    for _ in LAYER_INDICES:
        key, k1, k2, k3, k4, k5, k6, k7, k8 = jax.random.split(key, 9)
        params.append(dict(
            proj_w=jax.random.normal(k1, (DIM, CONV_DIM)) / math.sqrt(DIM),
            conv_w=jax.random.normal(k2, (NUM_KERNELS, CONV_DIM, CONV_DIM, 3, 3))
                   * math.sqrt(2.0 / (CONV_DIM * 9)),
            mod_w=jax.random.normal(k3, (TEXT_DIM, CONV_DIM)) / math.sqrt(TEXT_DIM),
            mod_b=0.1 * jax.random.normal(k4, (CONV_DIM,)),
            kmod_w=jax.random.normal(k5, (TEXT_DIM, NUM_KERNELS)) / math.sqrt(TEXT_DIM),
            kmod_b=0.1 * jax.random.normal(k6, (NUM_KERNELS,)),
            logit_w=jax.random.normal(k7, (1, CONV_DIM, 3, 3))
                    * math.sqrt(2.0 / (CONV_DIM * 9)),
            logit_b=0.1 * jax.random.normal(k8, (1,)),
        ))

    fwd = jax.jit(partial(vision_aided_discriminator_forward,
                          layer_indices=LAYER_INDICES))
    logits = jax.block_until_ready(fwd(image_encodings, text_embeds, params))

    ref = reference_forward(image_encodings, text_embeds, params,
                            layer_indices=LAYER_INDICES)
    for out, r in zip(logits, ref):
        assert out.shape == (B, H, W)
        assert jnp.allclose(out, r, atol=2e-3, rtol=2e-3), "mismatch vs reference"

    print("KERNEL_OK")
</pallas_src>

<mosaic_0001>
module attributes {stable_mosaic.version = 11 : i64} {
  func.func @_fused_layer_kernel(%arg0: i32, %arg1: memref<2x2xf32, #tpu.memory_space<smem>>, %arg2: memref<1xf32, #tpu.memory_space<smem>>, %arg3: memref<1x65x128xf32, #tpu.memory_space<vmem>>, %arg4: memref<1x1x128xf32, #tpu.memory_space<vmem>>, %arg5: memref<128x128xf32, #tpu.memory_space<vmem>>, %arg6: memref<2x1152x128xf32, #tpu.memory_space<vmem>>, %arg7: memref<1152x1xf32, #tpu.memory_space<vmem>>, %arg8: memref<1x64x1xf32, #tpu.memory_space<vmem>>) attributes {dimension_semantics = [#tpu.dimension_semantics<parallel>], iteration_bounds = array<i64: 2>, scalar_prefetch = 0 : i64, scratch_operands = 0 : i64, tpu.core_type = #tpu.core_type<tc>, window_params = [{transform_indices = @transform_0, window_bounds = array<i64: 2, 2>}, {transform_indices = @transform_1, window_bounds = array<i64: 1>}, {transform_indices = @transform_2, window_bounds = array<i64: 1, 65, 128>}, {transform_indices = @transform_3, window_bounds = array<i64: 1, 1, 128>}, {pipeline_mode = #tpu.pipeline_mode<synchronous>, transform_indices = @transform_4, window_bounds = array<i64: 128, 128>}, {pipeline_mode = #tpu.pipeline_mode<synchronous>, transform_indices = @transform_5, window_bounds = array<i64: 2, 1152, 128>}, {pipeline_mode = #tpu.pipeline_mode<synchronous>, transform_indices = @transform_6, window_bounds = array<i64: 1152, 1>}, {transform_indices = @transform_7, window_bounds = array<i64: 1, 64, 1>}]} {
    %c0 = arith.constant 0 : index
    %c0_0 = arith.constant 0 : index
    %c0_1 = arith.constant 0 : index
    %0 = vector.load %arg6[%c0, %c0_0, %c0_1] : memref<2x1152x128xf32, #tpu.memory_space<vmem>>, vector<1x1152x128xf32>
    %1 = vector.shape_cast %0 : vector<1x1152x128xf32> to vector<1152x128xf32>
    %2 = arith.index_cast %arg0 : i32 to index
    %c0_2 = arith.constant 0 : index
    %3 = memref.load %arg1[%2, %c0_2] : memref<2x2xf32, #tpu.memory_space<smem>>
    %4 = vector.broadcast %3 : f32 to vector<1152x128xf32>
    %5 = arith.mulf %1, %4 : vector<1152x128xf32>
    %c1 = arith.constant 1 : index
    %c0_3 = arith.constant 0 : index
    %c0_4 = arith.constant 0 : index
    %6 = vector.load %arg6[%c1, %c0_3, %c0_4] : memref<2x1152x128xf32, #tpu.memory_space<vmem>>, vector<1x1152x128xf32>
    %7 = vector.shape_cast %6 : vector<1x1152x128xf32> to vector<1152x128xf32>
    %8 = arith.index_cast %arg0 : i32 to index
    %c1_5 = arith.constant 1 : index
    %9 = memref.load %arg1[%8, %c1_5] : memref<2x2xf32, #tpu.memory_space<smem>>
    %10 = vector.broadcast %9 : f32 to vector<1152x128xf32>
    %11 = arith.mulf %7, %10 : vector<1152x128xf32>
    %12 = arith.addf %5, %11 : vector<1152x128xf32>
    %c0_6 = arith.constant 0 : index
    %c0_7 = arith.constant 0 : index
    %c0_8 = arith.constant 0 : index
    %13 = vector.load %arg4[%c0_6, %c0_7, %c0_8] : memref<1x1x128xf32, #tpu.memory_space<vmem>>, vector<1x1x128xf32>
    %14 = vector.shape_cast %13 : vector<1x1x128xf32> to vector<1x128xf32>
    %cst = arith.constant 1.000000e+00 : f32
    %15 = vector.broadcast %cst : f32 to vector<1x128xf32>
    %16 = arith.addf %14, %15 : vector<1x128xf32>
    %17 = arith.mulf %16, %16 : vector<1x128xf32>
    %18 = tpu.concatenate %17, %17, %17, %17, %17, %17, %17, %17, %17 in 1 : vector<1x128xf32>, vector<1x128xf32>, vector<1x128xf32>, vector<1x128xf32>, vector<1x128xf32>, vector<1x128xf32>, vector<1x128xf32>, vector<1x128xf32>, vector<1x128xf32> -> vector<1x1152xf32>
    %19 = arith.mulf %12, %12 : vector<1152x128xf32>
    %cst_9 = arith.constant dense<0.000000e+00> : vector<1x128xf32>
    %20 = tpu.matmul %18, %19, %cst_9 {dimension_numbers = #tpu.dot_dimension_numbers<[1], [0], [0], [1], [0, 0, 1, 1], [], []>} : vector<1x1152xf32>, vector<1152x128xf32>, vector<1x128xf32> -> vector<1x128xf32>
    %cst_10 = arith.constant 9.99999993E-9 : f32
    %21 = vector.broadcast %cst_10 : f32 to vector<1x128xf32>
    %22 = arith.maximumf %20, %21 : vector<1x128xf32>
    %23 = math.rsqrt %22 : vector<1x128xf32>
    %c0_11 = arith.constant 0 : index
    %c0_12 = arith.constant 0 : index
    %c0_13 = arith.constant 0 : index
    %24 = vector.load %arg3[%c0_11, %c0_12, %c0_13] : memref<1x65x128xf32, #tpu.memory_space<vmem>>, vector<1x65x128xf32>
    %25 = vector.shape_cast %24 : vector<1x65x128xf32> to vector<65x128xf32>
    %26 = vector.extract_strided_slice %25 {offsets = [1, 0], sizes = [64, 128], strides = [1, 1]} : vector<65x128xf32> to vector<64x128xf32>
    %27 = vector.extract_strided_slice %25 {offsets = [0, 0], sizes = [1, 128], strides = [1, 1]} : vector<65x128xf32> to vector<1x128xf32>
    %28 = vector.broadcast %27 : vector<1x128xf32> to vector<64x128xf32>
    %29 = arith.addf %26, %28 : vector<64x128xf32>
    %c0_14 = arith.constant 0 : index
    %c0_15 = arith.constant 0 : index
    %30 = vector.load %arg5[%c0_14, %c0_15] : memref<128x128xf32, #tpu.memory_space<vmem>>, vector<128x128xf32>
    %cst_16 = arith.constant dense<0.000000e+00> : vector<64x128xf32>
    %31 = tpu.matmul %29, %30, %cst_16 {dimension_numbers = #tpu.dot_dimension_numbers<[1], [0], [0], [1], [0, 0, 1, 1], [], []>} : vector<64x128xf32>, vector<128x128xf32>, vector<64x128xf32> -> vector<64x128xf32>
    %32 = vector.broadcast %16 : vector<1x128xf32> to vector<64x128xf32>
    %33 = arith.mulf %31, %32 : vector<64x128xf32>
    %34 = vector.shape_cast %33 : vector<64x128xf32> to vector<8x8x128xf32>
    %cst_17 = arith.constant 0.000000e+00 : f32
    %35 = vector.broadcast %cst_17 : f32 to vector<1x8x128xf32>
    %36 = tpu.concatenate %35, %34, %35 in 0 : vector<1x8x128xf32>, vector<8x8x128xf32>, vector<1x8x128xf32> -> vector<10x8x128xf32>
    %cst_18 = arith.constant 0.000000e+00 : f32
    %37 = vector.broadcast %cst_18 : f32 to vector<10x1x128xf32>
    %38 = tpu.concatenate %37, %36, %37 in 1 : vector<10x1x128xf32>, vector<10x8x128xf32>, vector<10x1x128xf32> -> vector<10x10x128xf32>
    %39 = vector.extract_strided_slice %38 {offsets = [0, 0, 0], sizes = [8, 8, 128], strides = [1, 1, 1]} : vector<10x10x128xf32> to vector<8x8x128xf32>
    %40 = vector.extract_strided_slice %38 {offsets = [0, 1, 0], sizes = [8, 8, 128], strides = [1, 1, 1]} : vector<10x10x128xf32> to vector<8x8x128xf32>
    %41 = vector.extract_strided_slice %38 {offsets = [0, 2, 0], sizes = [8, 8, 128], strides = [1, 1, 1]} : vector<10x10x128xf32> to vector<8x8x128xf32>
    %42 = vector.extract_strided_slice %38 {offsets = [1, 0, 0], sizes = [8, 8, 128], strides = [1, 1, 1]} : vector<10x10x128xf32> to vector<8x8x128xf32>
    %43 = vector.extract_strided_slice %38 {offsets = [1, 1, 0], sizes = [8, 8, 128], strides = [1, 1, 1]} : vector<10x10x128xf32> to vector<8x8x128xf32>
    %44 = vector.extract_strided_slice %38 {offsets = [1, 2, 0], sizes = [8, 8, 128], strides = [1, 1, 1]} : vector<10x10x128xf32> to vector<8x8x128xf32>
    %45 = vector.extract_strided_slice %38 {offsets = [2, 0, 0], sizes = [8, 8, 128], strides = [1, 1, 1]} : vector<10x10x128xf32> to vector<8x8x128xf32>
    %46 = vector.extract_strided_slice %38 {offsets = [2, 1, 0], sizes = [8, 8, 128], strides = [1, 1, 1]} : vector<10x10x128xf32> to vector<8x8x128xf32>
    %47 = vector.extract_strided_slice %38 {offsets = [2, 2, 0], sizes = [8, 8, 128], strides = [1, 1, 1]} : vector<10x10x128xf32> to vector<8x8x128xf32>
    %48 = tpu.concatenate %39, %40, %41, %42, %43, %44, %45, %46, %47 in 2 : vector<8x8x128xf32>, vector<8x8x128xf32>, vector<8x8x128xf32>, vector<8x8x128xf32>, vector<8x8x128xf32>, vector<8x8x128xf32>, vector<8x8x128xf32>, vector<8x8x128xf32>, vector<8x8x128xf32> -> vector<8x8x1152xf32>
    %49 = vector.shape_cast %48 : vector<8x8x1152xf32> to vector<64x1152xf32>
    %cst_19 = arith.constant dense<0.000000e+00> : vector<64x128xf32>
    %50 = tpu.matmul %49, %12, %cst_19 {dimension_numbers = #tpu.dot_dimension_numbers<[1], [0], [0], [1], [0, 0, 1, 1], [], []>} : vector<64x1152xf32>, vector<1152x128xf32>, vector<64x128xf32> -> vector<64x128xf32>
    %51 = vector.broadcast %23 : vector<1x128xf32> to vector<64x128xf32>
    %52 = arith.mulf %50, %51 : vector<64x128xf32>
    %53 = vector.shape_cast %52 : vector<64x128xf32> to vector<8x8x128xf32>
    %cst_20 = arith.constant 0.000000e+00 : f32
    %54 = vector.broadcast %cst_20 : f32 to vector<1x8x128xf32>
    %55 = tpu.concatenate %54, %53, %54 in 0 : vector<1x8x128xf32>, vector<8x8x128xf32>, vector<1x8x128xf32> -> vector<10x8x128xf32>
    %cst_21 = arith.constant 0.000000e+00 : f32
    %56 = vector.broadcast %cst_21 : f32 to vector<10x1x128xf32>
    %57 = tpu.concatenate %56, %55, %56 in 1 : vector<10x1x128xf32>, vector<10x8x128xf32>, vector<10x1x128xf32> -> vector<10x10x128xf32>
    %58 = vector.extract_strided_slice %57 {offsets = [0, 0, 0], sizes = [8, 8, 128], strides = [1, 1, 1]} : vector<10x10x128xf32> to vector<8x8x128xf32>
    %59 = vector.extract_strided_slice %57 {offsets = [0, 1, 0], sizes = [8, 8, 128], strides = [1, 1, 1]} : vector<10x10x128xf32> to vector<8x8x128xf32>
    %60 = vector.extract_strided_slice %57 {offsets = [0, 2, 0], sizes = [8, 8, 128], strides = [1, 1, 1]} : vector<10x10x128xf32> to vector<8x8x128xf32>
    %61 = vector.extract_strided_slice %57 {offsets = [1, 0, 0], sizes = [8, 8, 128], strides = [1, 1, 1]} : vector<10x10x128xf32> to vector<8x8x128xf32>
    %62 = vector.extract_strided_slice %57 {offsets = [1, 1, 0], sizes = [8, 8, 128], strides = [1, 1, 1]} : vector<10x10x128xf32> to vector<8x8x128xf32>
    %63 = vector.extract_strided_slice %57 {offsets = [1, 2, 0], sizes = [8, 8, 128], strides = [1, 1, 1]} : vector<10x10x128xf32> to vector<8x8x128xf32>
    %64 = vector.extract_strided_slice %57 {offsets = [2, 0, 0], sizes = [8, 8, 128], strides = [1, 1, 1]} : vector<10x10x128xf32> to vector<8x8x128xf32>
    %65 = vector.extract_strided_slice %57 {offsets = [2, 1, 0], sizes = [8, 8, 128], strides = [1, 1, 1]} : vector<10x10x128xf32> to vector<8x8x128xf32>
    %66 = vector.extract_strided_slice %57 {offsets = [2, 2, 0], sizes = [8, 8, 128], strides = [1, 1, 1]} : vector<10x10x128xf32> to vector<8x8x128xf32>
    %67 = tpu.concatenate %58, %59, %60, %61, %62, %63, %64, %65, %66 in 2 : vector<8x8x128xf32>, vector<8x8x128xf32>, vector<8x8x128xf32>, vector<8x8x128xf32>, vector<8x8x128xf32>, vector<8x8x128xf32>, vector<8x8x128xf32>, vector<8x8x128xf32>, vector<8x8x128xf32> -> vector<8x8x1152xf32>
    %68 = vector.shape_cast %67 : vector<8x8x1152xf32> to vector<64x1152xf32>
    %c0_22 = arith.constant 0 : index
    %c0_23 = arith.constant 0 : index
    %69 = vector.load %arg7[%c0_22, %c0_23] : memref<1152x1xf32, #tpu.memory_space<vmem>>, vector<1152x1xf32>
    %cst_24 = arith.constant dense<0.000000e+00> : vector<64x1xf32>
    %70 = tpu.matmul %68, %69, %cst_24 {dimension_numbers = #tpu.dot_dimension_numbers<[1], [0], [0], [1], [0, 0, 1, 1], [], []>} : vector<64x1152xf32>, vector<1152x1xf32>, vector<64x1xf32> -> vector<64x1xf32>
    %c0_25 = arith.constant 0 : index
    %71 = memref.load %arg2[%c0_25] : memref<1xf32, #tpu.memory_space<smem>>
    %72 = vector.broadcast %71 : f32 to vector<64x1xf32>
    %73 = arith.addf %70, %72 : vector<64x1xf32>
    %c0_26 = arith.constant 0 : index
    %c0_27 = arith.constant 0 : index
    %c0_28 = arith.constant 0 : index
    %74 = vector.load %arg8[%c0_26, %c0_27, %c0_28] : memref<1x64x1xf32, #tpu.memory_space<vmem>>, vector<1x64x1xf32>
    %75 = vector.shape_cast %74 : vector<1x64x1xf32> to vector<64x1xf32>
    %76 = vector.shape_cast %73 : vector<64x1xf32> to vector<1x64x1xf32>
    tpu.vector_store %arg8[%c0_26, %c0_27, %c0_28], %76 {strides = array<i32>} : memref<1x64x1xf32, #tpu.memory_space<vmem>>, vector<1x64x1xf32>,
    return
  }
  func.func @transform_0(%arg0: i32) -> (i32, i32) {
    %c0_i32 = arith.constant 0 : i32
    %c0_i32_0 = arith.constant 0 : i32
    %c0_i32_1 = arith.constant 0 : i32
    return %c0_i32, %c0_i32_0 : i32, i32
  }
  func.func @transform_1(%arg0: i32) -> i32 {
    %c0_i32 = arith.constant 0 : i32
    %c0_i32_0 = arith.constant 0 : i32
    return %c0_i32 : i32
  }
  func.func @transform_2(%arg0: i32) -> (i32, i32, i32) {
    %c0_i32 = arith.constant 0 : i32
    %c0_i32_0 = arith.constant 0 : i32
    %c0_i32_1 = arith.constant 0 : i32
    return %arg0, %c0_i32, %c0_i32_0 : i32, i32, i32
  }
  func.func @transform_3(%arg0: i32) -> (i32, i32, i32) {
    %c0_i32 = arith.constant 0 : i32
    %c0_i32_0 = arith.constant 0 : i32
    %c0_i32_1 = arith.constant 0 : i32
    return %arg0, %c0_i32, %c0_i32_0 : i32, i32, i32
  }
  func.func @transform_4(%arg0: i32) -> (i32, i32) {
    %c0_i32 = arith.constant 0 : i32
    %c0_i32_0 = arith.constant 0 : i32
    %c0_i32_1 = arith.constant 0 : i32
    return %c0_i32, %c0_i32_0 : i32, i32
  }
  func.func @transform_5(%arg0: i32) -> (i32, i32, i32) {
    %c0_i32 = arith.constant 0 : i32
    %c0_i32_0 = arith.constant 0 : i32
    %c0_i32_1 = arith.constant 0 : i32
    %c0_i32_2 = arith.constant 0 : i32
    return %c0_i32, %c0_i32_0, %c0_i32_1 : i32, i32, i32
  }
  func.func @transform_6(%arg0: i32) -> (i32, i32) {
    %c0_i32 = arith.constant 0 : i32
    %c0_i32_0 = arith.constant 0 : i32
    %c0_i32_1 = arith.constant 0 : i32
    return %c0_i32, %c0_i32_0 : i32, i32
  }
  func.func @transform_7(%arg0: i32) -> (i32, i32, i32) {
    %c0_i32 = arith.constant 0 : i32
    %c0_i32_0 = arith.constant 0 : i32
    %c0_i32_1 = arith.constant 0 : i32
    return %arg0, %c0_i32, %c0_i32_0 : i32, i32, i32
  }
}

</mosaic_0001>

<llo_original>
// kernel: vision_aided_discriminator_forward.4
$region0: #{vision_aided_discriminator_forward.4}
  #allocation0 [shape = 'u32[]', space=smem, size = 0x4, offset = 0x4, fixed_abs, tag = 'smem constant byte address 0x4 - core index']
  #allocation1 [shape = 'u32[144,128]{1,0:T(1,128)}', space=vmem, size = 0x12000, scoped, tag = 'internal scratch']
  #allocation2 [shape = 'f32[1]{0:T(128)S(6)}', space=smem, size = 0x200, scoped, tag = 'scoped memory for vision_aided_discriminator_forward.4']
  %s0 = inlined_call_operand.vmem [shape: f32[2,2], index: 0, kind: input, shape index: {}]
  %s1 = inlined_call_operand.<no memory space> [shape: f32[1], index: 1, kind: input, shape index: {}]
  %s2 = inlined_call_operand.vmem [shape: f32[2,65,128], index: 2, kind: input, shape index: {}]
  %s3 = inlined_call_operand.vmem [shape: f32[2,1,128], index: 3, kind: input, shape index: {}]
  %s4 = inlined_call_operand.vmem [shape: f32[128,128], index: 4, kind: input, shape index: {}]
  %s5 = inlined_call_operand.vmem [shape: f32[2,1152,128], index: 5, kind: input, shape index: {}]
  %s6 = inlined_call_operand.vmem [shape: f32[1152,1], index: 6, kind: input, shape index: {}]
  %s7 = inlined_call_operand.vmem [shape: f32[2,64,1], index: 7, kind: output, shape index: {}]
  %s8 = sld [smem:[#allocation0]]
  $region65: #{vision_aided_discriminator_forward.4} parent=0
    _
  %s10 = ssub.s32 1, %s8
  %s11 = scalar_select 0, %s10, %s8
  %12 = sst [smem:[#allocation2]] %s1
  $region1: #{vision_aided_discriminator_forward.4} parent=0
    #allocation3 [shape = 'u8[1024]{0}', space=smem, size = 0x400, scoped, tag = 'input window, operand 0, single buffered']
    #allocation4 [shape = 's32[2]{0}', space=sflag, size = 0x8, scoped, tag = 'scoped memory for vision_aided_discriminator_forward.4']
    %13 = vsyncpa [#allocation4], 0
    loop: start=0, step=1, limit=4
    $region2: #{vision_aided_discriminator_forward.4} parent=1 // loop_pre_header
      _
    $region3: #{vision_aided_discriminator_forward.4} parent=1 // loop_header
      %s15 = sphi 0, %s19
      %p16 = scmp.ge.s32.totalorder %s15, 4
      %s23 = sphi 0, %s23
      %s25 = sphi 0, %s23
      %s26 = sphi 0, %s25
      %s40 = sphi 0, %s26
      %s44 = sphi 0, %s44
      %s46 = sphi 0, %s44
      %s47 = sphi 0, %s46
      %s61 = sphi 0, %s47
      %s67 = sphi 0, %s69
      %s70 = sphi 0, %s67
      %s71 = sphi 0, %s70
      %s87 = sphi 0, %s71
      %s93 = sphi 0, %s95
      %s96 = sphi 0, %s93
      %s97 = sphi 0, %s96
      %s113 = sphi 0, %s97
      %s117 = sphi 0, %s117
      %s119 = sphi 0, %s117
      %s120 = sphi 0, %s119
      %s134 = sphi 0, %s120
      %s138 = sphi 0, %s138
      %s140 = sphi 0, %s138
      %s141 = sphi 0, %s140
      %s155 = sphi 0, %s141
      %s159 = sphi 0, %s159
      %s161 = sphi 0, %s159
      %s162 = sphi 0, %s161
      %s176 = sphi 0, %s162
      %s182 = sphi 0, %s184
      %s185 = sphi 0, %s182
      %s186 = sphi 0, %s185
      %s202 = sphi 0, %s186
    $region4: #{vision_aided_discriminator_forward.4} parent=1 // loop_header_branch
      %18 = sbr.rel (%p16) target = $region8
    $region5: #{vision_aided_discriminator_forward.4} parent=1 // loop_body
      %s20 = ssub.s32 %s15, 1
      %s21 = ssub.s32 %s15, 2
      %s22 = sadd.s32 %s15, 1
      %s24 = sadd.s32 %s23, 1
      %p27 = scmp.eq.s32.totalorder %s15, 1
      %p28 = scmp.ne.s32.totalorder %s23, %s25
      %p29 = scmp.eq.s32.totalorder %s15, 0
      %p30 = por %p28, %p29
      %p31 = scmp.ne.s32.totalorder %s23, %s25
      %p32 = scmp.eq.s32.totalorder %s20, 1
      %p33 = por %p31, %p32
      %p34 = scmp.ne.s32.totalorder %s25, %s26
      %p35 = scmp.eq.s32.totalorder %s20, 0
      %p36 = por %p34, %p35
      %p37 = scmp.ne.s32.totalorder %s25, %s26
      %p38 = scmp.eq.s32.totalorder %s21, 1
      %p39 = por %p37, %p38
      %p41 = scmp.ne.s32.totalorder %s26, %s40
      %p42 = scmp.eq.s32.totalorder %s21, 0
      %p43 = por %p41, %p42
      %s45 = sadd.s32 %s44, 1
      %p48 = scmp.eq.s32.totalorder %s15, 1
      %p49 = scmp.ne.s32.totalorder %s44, %s46
      %p50 = scmp.eq.s32.totalorder %s15, 0
      %p51 = por %p49, %p50
      %p52 = scmp.ne.s32.totalorder %s44, %s46
      %p53 = scmp.eq.s32.totalorder %s20, 1
      %p54 = por %p52, %p53
      %p55 = scmp.ne.s32.totalorder %s46, %s47
      %p56 = scmp.eq.s32.totalorder %s20, 0
      %p57 = por %p55, %p56
      %p58 = scmp.ne.s32.totalorder %s46, %s47
      %p59 = scmp.eq.s32.totalorder %s21, 1
      %p60 = por %p58, %p59
      %p62 = scmp.ne.s32.totalorder %s47, %s61
      %p63 = scmp.eq.s32.totalorder %s21, 0
      %p64 = por %p62, %p63
      %s65 = ssub.s32 %s15, %s22
      %p66 = scmp.eq.s32.totalorder %s65, 0
      %s68 = sadd.s32 %s67, 1
      %s69 = scalar_select %p66, %s67, %s68
      %p72 = pneg %p66
      %p73 = scmp.eq.s32.totalorder %s15, 1
      %p74 = por %p72, %p73
      %p75 = scmp.ne.s32.totalorder %s67, %s70
      %p76 = scmp.eq.s32.totalorder %s15, 0
      %p77 = por %p75, %p76
      %p78 = scmp.ne.s32.totalorder %s67, %s70
      %p79 = scmp.eq.s32.totalorder %s20, 1
      %p80 = por %p78, %p79
      %p81 = scmp.ne.s32.totalorder %s70, %s71
      %p82 = scmp.eq.s32.totalorder %s20, 0
      %p83 = por %p81, %p82
      %p84 = scmp.ne.s32.totalorder %s70, %s71
      %p85 = scmp.eq.s32.totalorder %s21, 1
      %p86 = por %p84, %p85
      %p88 = scmp.ne.s32.totalorder %s71, %s87
      %p89 = scmp.eq.s32.totalorder %s21, 0
      %p90 = por %p88, %p89
      %s91 = ssub.s32 %s15, %s22
      %p92 = scmp.eq.s32.totalorder %s91, 0
      %s94 = sadd.s32 %s93, 1
      %s95 = scalar_select %p92, %s93, %s94
      %p98 = pneg %p92
      %p99 = scmp.eq.s32.totalorder %s15, 1
      %p100 = por %p98, %p99
      %p101 = scmp.ne.s32.totalorder %s93, %s96
      %p102 = scmp.eq.s32.totalorder %s15, 0
      %p103 = por %p101, %p102
      %p104 = scmp.ne.s32.totalorder %s93, %s96
      %p105 = scmp.eq.s32.totalorder %s20, 1
      %p106 = por %p104, %p105
      %p107 = scmp.ne.s32.totalorder %s96, %s97
      %p108 = scmp.eq.s32.totalorder %s20, 0
      %p109 = por %p107, %p108
      %p110 = scmp.ne.s32.totalorder %s96, %s97
      %p111 = scmp.eq.s32.totalorder %s21, 1
      %p112 = por %p110, %p111
      %p114 = scmp.ne.s32.totalorder %s97, %s113
      %p115 = scmp.eq.s32.totalorder %s21, 0
      %p116 = por %p114, %p115
      %s118 = sadd.s32 %s117, 1
      %p121 = scmp.eq.s32.totalorder %s15, 1
      %p122 = scmp.ne.s32.totalorder %s117, %s119
      %p123 = scmp.eq.s32.totalorder %s15, 0
      %p124 = por %p122, %p123
      %p125 = scmp.ne.s32.totalorder %s117, %s119
      %p126 = scmp.eq.s32.totalorder %s20, 1
      %p127 = por %p125, %p126
      %p128 = scmp.ne.s32.totalorder %s119, %s120
      %p129 = scmp.eq.s32.totalorder %s20, 0
      %p130 = por %p128, %p129
      %p131 = scmp.ne.s32.totalorder %s119, %s120
      %p132 = scmp.eq.s32.totalorder %s21, 1
      %p133 = por %p131, %p132
      %p135 = scmp.ne.s32.totalorder %s120, %s134
      %p136 = scmp.eq.s32.totalorder %s21, 0
      %p137 = por %p135, %p136
      %s139 = sadd.s32 %s138, 1
      %p142 = scmp.eq.s32.totalorder %s15, 1
      %p143 = scmp.ne.s32.totalorder %s138, %s140
      %p144 = scmp.eq.s32.totalorder %s15, 0
      %p145 = por %p143, %p144
      %p146 = scmp.ne.s32.totalorder %s138, %s140
      %p147 = scmp.eq.s32.totalorder %s20, 1
      %p148 = por %p146, %p147
      %p149 = scmp.ne.s32.totalorder %s140, %s141
      %p150 = scmp.eq.s32.totalorder %s20, 0
      %p151 = por %p149, %p150
      %p152 = scmp.ne.s32.totalorder %s140, %s141
      %p153 = scmp.eq.s32.totalorder %s21, 1
      %p154 = por %p152, %p153
      %p156 = scmp.ne.s32.totalorder %s141, %s155
      %p157 = scmp.eq.s32.totalorder %s21, 0
      %p158 = por %p156, %p157
      %s160 = sadd.s32 %s159, 1
      %p163 = scmp.eq.s32.totalorder %s15, 1
      %p164 = scmp.ne.s32.totalorder %s159, %s161
      %p165 = scmp.eq.s32.totalorder %s15, 0
      %p166 = por %p164, %p165
      %p167 = scmp.ne.s32.totalorder %s159, %s161
      %p168 = scmp.eq.s32.totalorder %s20, 1
      %p169 = por %p167, %p168
      %p170 = scmp.ne.s32.totalorder %s161, %s162
      %p171 = scmp.eq.s32.totalorder %s20, 0
      %p172 = por %p170, %p171
      %p173 = scmp.ne.s32.totalorder %s161, %s162
      %p174 = scmp.eq.s32.totalorder %s21, 1
      %p175 = por %p173, %p174
      %p177 = scmp.ne.s32.totalorder %s162, %s176
      %p178 = scmp.eq.s32.totalorder %s21, 0
      %p179 = por %p177, %p178
      %s180 = ssub.s32 %s15, %s22
      %p181 = scmp.eq.s32.totalorder %s180, 0
      %s183 = sadd.s32 %s182, 1
      %s184 = scalar_select %p181, %s182, %s183
      %p187 = pneg %p181
      %p188 = scmp.eq.s32.totalorder %s15, 1
      %p189 = por %p187, %p188
      %p190 = scmp.ne.s32.totalorder %s182, %s185
      %p191 = scmp.eq.s32.totalorder %s15, 0
      %p192 = por %p190, %p191
      %p193 = scmp.ne.s32.totalorder %s182, %s185
      %p194 = scmp.eq.s32.totalorder %s20, 1
      %p195 = por %p193, %p194
      %p196 = scmp.ne.s32.totalorder %s185, %s186
      %p197 = scmp.eq.s32.totalorder %s20, 0
      %p198 = por %p196, %p197
      %p199 = scmp.ne.s32.totalorder %s185, %s186
      %p200 = scmp.eq.s32.totalorder %s21, 1
      %p201 = por %p199, %p200
      %p203 = scmp.ne.s32.totalorder %s186, %s202
      %p204 = scmp.eq.s32.totalorder %s21, 0
      %p205 = por %p203, %p204
      %p206 = scmp.le.s32.totalorder 1, %s15
      %p207 = scmp.lt.s32.totalorder %s15, 3
      %p208 = pnand %p206, %p207
      %p209 = pneg %p208
      // Predicated region
      $region9: #{vision_aided_discriminator_forward.4} parent=5 // pred_check
        _
      $region10: #{vision_aided_discriminator_forward.4} parent=5 // pred_check_branch
        %211 = sbr.rel (%p208) target = $region12
      $region11: #{vision_aided_discriminator_forward.4} parent=5 // pred_region
        %s212 = ssub.s32 %s15, 1
        // Predicated region
        $region13: #{vision_aided_discriminator_forward.4} parent=11 // pred_check
          %p213 = pneg %p36
        $region14: #{vision_aided_discriminator_forward.4} parent=11 // pred_check_branch
          %215 = sbr.rel (%p213) target = $region16
        $region15: #{vision_aided_discriminator_forward.4} parent=11 // pred_region
          %s217 = ssub.s32 32, 32
          %218 = vsyncadd [#allocation4], %s217
          %s220 = sshll.u32 %s0, 4
          %s221 = int_to_ptr.vmem [resolvable:$true] %s220
          %223 = dma.vmem_to_smem %s221, 32, [#allocation3], [#allocation4]
        $region16: #{vision_aided_discriminator_forward.4} parent=11 // pred_fallthru
          _
        // Predicated region
        $region17: #{vision_aided_discriminator_forward.4} parent=11 // pred_check
          %p224 = pneg %p57
        $region18: #{vision_aided_discriminator_forward.4} parent=11 // pred_check_branch
          %226 = sbr.rel (%p224) target = $region20
        $region19: #{vision_aided_discriminator_forward.4} parent=11 // pred_region
          _
        $region20: #{vision_aided_discriminator_forward.4} parent=11 // pred_fallthru
          _
        // Predicated region
        $region21: #{vision_aided_discriminator_forward.4} parent=11 // pred_check
          %p227 = pneg %p130
        $region22: #{vision_aided_discriminator_forward.4} parent=11 // pred_check_branch
          %229 = sbr.rel (%p227) target = $region24
        $region23: #{vision_aided_discriminator_forward.4} parent=11 // pred_region
          _
        $region24: #{vision_aided_discriminator_forward.4} parent=11 // pred_fallthru
          _
        // Predicated region
        $region25: #{vision_aided_discriminator_forward.4} parent=11 // pred_check
          %p230 = pneg %p151
        $region26: #{vision_aided_discriminator_forward.4} parent=11 // pred_check_branch
          %232 = sbr.rel (%p230) target = $region28
        $region27: #{vision_aided_discriminator_forward.4} parent=11 // pred_region
          _
        $region28: #{vision_aided_discriminator_forward.4} parent=11 // pred_fallthru
          _
        // Predicated region
        $region29: #{vision_aided_discriminator_forward.4} parent=11 // pred_check
          %p233 = pneg %p172
        $region30: #{vision_aided_discriminator_forward.4} parent=11 // pred_check_branch
          %235 = sbr.rel (%p233) target = $region32
        $region31: #{vision_aided_discriminator_forward.4} parent=11 // pred_region
          _
        $region32: #{vision_aided_discriminator_forward.4} parent=11 // pred_fallthru
          _
      $region12: #{vision_aided_discriminator_forward.4} parent=5 // pred_fallthru
        _
      %p236 = scmp.lt.s32.totalorder %s15, 2
      // Predicated region
      $region33: #{vision_aided_discriminator_forward.4} parent=5 // pred_check
        %p237 = pneg %p236
      $region34: #{vision_aided_discriminator_forward.4} parent=5 // pred_check_branch
        %239 = sbr.rel (%p237) target = $region36
      $region35: #{vision_aided_discriminator_forward.4} parent=5 // pred_region
        // Predicated region
        $region37: #{vision_aided_discriminator_forward.4} parent=35 // pred_check
          %p240 = pneg %p77
        $region38: #{vision_aided_discriminator_forward.4} parent=35 // pred_check_branch
          %242 = sbr.rel (%p240) target = $region40
        $region39: #{vision_aided_discriminator_forward.4} parent=35 // pred_region
          %p243 = scmp.lt.s32.totalorder %s15, 1
          %s244 = scalar_select %p243, %s15, 1
          %s245 = smul.addr %s244, 9
          %s246 = smul.addr %s245, 8
          %s247 = scalar_lea.vmem %s2, %s246
        $region40: #{vision_aided_discriminator_forward.4} parent=35 // pred_fallthru
          _
        // Predicated region
        $region41: #{vision_aided_discriminator_forward.4} parent=35 // pred_check
          %p248 = pneg %p103
        $region42: #{vision_aided_discriminator_forward.4} parent=35 // pred_check_branch
          %250 = sbr.rel (%p248) target = $region44
        $region43: #{vision_aided_discriminator_forward.4} parent=35 // pred_region
          %p251 = scmp.lt.s32.totalorder %s15, 1
          %s252 = scalar_select %p251, %s15, 1
          %s253 = scalar_lea.vmem %s3, %s252
        $region44: #{vision_aided_discriminator_forward.4} parent=35 // pred_fallthru
          _
      $region36: #{vision_aided_discriminator_forward.4} parent=5 // pred_fallthru
        _
      %p254 = scmp.le.s32.totalorder 1, %s15
      %p255 = scmp.lt.s32.totalorder %s15, 3
      %p256 = pnand %p254, %p255
      %p257 = pneg %p256
      // Predicated region
      $region45: #{vision_aided_discriminator_forward.4} parent=5 // pred_check
        _
      $region46: #{vision_aided_discriminator_forward.4} parent=5 // pred_check_branch
        %259 = sbr.rel (%p256) target = $region48
      $region47: #{vision_aided_discriminator_forward.4} parent=5 // pred_region
        %s260 = ssub.s32 %s15, 1
        // Predicated region
        $region49: #{vision_aided_discriminator_forward.4} parent=47 // pred_check
          %p261 = pneg %p36
        $region50: #{vision_aided_discriminator_forward.4} parent=47 // pred_check_branch
          %263 = sbr.rel (%p261) target = $region52
        $region51: #{vision_aided_discriminator_forward.4} parent=47 // pred_region
          %264 = dma.done [#allocation4], 32
        $region52: #{vision_aided_discriminator_forward.4} parent=47 // pred_fallthru
          _
        %265 = sfence
        %p266 = pneg %p36
        %p267 = pneg %p33
        %p268 = pneg %p57
        %p269 = pneg %p54
        %p270 = scmp.lt.s32.totalorder %s20, 1
        %s271 = scalar_select %p270, %s20, 1
        %s272 = smul.addr %s271, 9
        %s273 = smul.addr %s272, 8
        %s274 = scalar_lea.vmem %s2, %s273
        %p275 = pneg %p83
        %p276 = pneg %p80
        %p277 = scmp.lt.s32.totalorder %s20, 1
        %s278 = scalar_select %p277, %s20, 1
        %s279 = scalar_lea.vmem %s3, %s278
        %p280 = pneg %p109
        %p281 = pneg %p106
        %p282 = pneg %p130
        %p283 = pneg %p127
        %p284 = pneg %p151
        %p285 = pneg %p148
        %p286 = pneg %p172
        %p287 = pneg %p169
        %p288 = pneg %p198
        %p289 = pneg %p195
        %p290 = scmp.lt.s32.totalorder %s20, 1
        %s291 = scalar_select %p290, %s20, 1
        %s292 = smul.addr %s291, 8
        %s293 = smul.addr %s292, 8
        %s294 = scalar_lea.vmem %s7, %s293
        %p295 = scmp.lt.s32.totalorder %s20, 1
        %s296 = scalar_select %p295, %s20, 1
        %s297 = smul.addr %s296, 9
        %s298 = smul.addr %s297, 8
        %s299 = scalar_lea.vmem %s2, %s298
        %p300 = scmp.lt.s32.totalorder %s20, 1
        %s301 = scalar_select %p300, %s20, 1
        %s302 = scalar_lea.vmem %s3, %s301
        %p303 = scmp.lt.s32.totalorder %s20, 1
        %s304 = scalar_select %p303, %s20, 1
        %s305 = smul.addr %s304, 8
        %s306 = smul.addr %s305, 8
        %s307 = scalar_lea.vmem %s7, %s306
        %v308 = vld [vmem:[%s5] sm:$0xff]
        %v309 = vld [vmem:[%s5 + $0x8] sm:$0xff]
        %v310 = vld [vmem:[%s5 + $0x10] sm:$0xff]
        %v311 = vld [vmem:[%s5 + $0x18] sm:$0xff]
        %v312 = vld [vmem:[%s5 + $0x20] sm:$0xff]
        %v313 = vld [vmem:[%s5 + $0x28] sm:$0xff]
        %v314 = vld [vmem:[%s5 + $0x30] sm:$0xff]
        %v315 = vld [vmem:[%s5 + $0x38] sm:$0xff]
        %v316 = vld [vmem:[%s5 + $0x40] sm:$0xff]
        %v317 = vld [vmem:[%s5 + $0x48] sm:$0xff]
        %v318 = vld [vmem:[%s5 + $0x50] sm:$0xff]
        %v319 = vld [vmem:[%s5 + $0x58] sm:$0xff]
        %v320 = vld [vmem:[%s5 + $0x60] sm:$0xff]
        %v321 = vld [vmem:[%s5 + $0x68] sm:$0xff]
        %v322 = vld [vmem:[%s5 + $0x70] sm:$0xff]
        %v323 = vld [vmem:[%s5 + $0x78] sm:$0xff]
        %v324 = vld [vmem:[%s5 + $0x80] sm:$0xff]
        %v325 = vld [vmem:[%s5 + $0x88] sm:$0xff]
        %v326 = vld [vmem:[%s5 + $0x90] sm:$0xff]
        %v327 = vld [vmem:[%s5 + $0x98] sm:$0xff]
        %v328 = vld [vmem:[%s5 + $0xa0] sm:$0xff]
        %v329 = vld [vmem:[%s5 + $0xa8] sm:$0xff]
        %v330 = vld [vmem:[%s5 + $0xb0] sm:$0xff]
        %v331 = vld [vmem:[%s5 + $0xb8] sm:$0xff]
        %v332 = vld [vmem:[%s5 + $0xc0] sm:$0xff]
        %v333 = vld [vmem:[%s5 + $0xc8] sm:$0xff]
        %v334 = vld [vmem:[%s5 + $0xd0] sm:$0xff]
        %v335 = vld [vmem:[%s5 + $0xd8] sm:$0xff]
        %v336 = vld [vmem:[%s5 + $0xe0] sm:$0xff]
        %v337 = vld [vmem:[%s5 + $0xe8] sm:$0xff]
        %v338 = vld [vmem:[%s5 + $0xf0] sm:$0xff]
        %v339 = vld [vmem:[%s5 + $0xf8] sm:$0xff]
        %v340 = vld [vmem:[%s5 + $0x100] sm:$0xff]
        %v341 = vld [vmem:[%s5 + $0x108] sm:$0xff]
        %v342 = vld [vmem:[%s5 + $0x110] sm:$0xff]
        %v343 = vld [vmem:[%s5 + $0x118] sm:$0xff]
        %v344 = vld [vmem:[%s5 + $0x120] sm:$0xff]
        %v345 = vld [vmem:[%s5 + $0x128] sm:$0xff]
        %v346 = vld [vmem:[%s5 + $0x130] sm:$0xff]
        %v347 = vld [vmem:[%s5 + $0x138] sm:$0xff]
        %v348 = vld [vmem:[%s5 + $0x140] sm:$0xff]
        %v349 = vld [vmem:[%s5 + $0x148] sm:$0xff]
        %v350 = vld [vmem:[%s5 + $0x150] sm:$0xff]
        %v351 = vld [vmem:[%s5 + $0x158] sm:$0xff]
        %v352 = vld [vmem:[%s5 + $0x160] sm:$0xff]
        %v353 = vld [vmem:[%s5 + $0x168] sm:$0xff]
        %v354 = vld [vmem:[%s5 + $0x170] sm:$0xff]
        %v355 = vld [vmem:[%s5 + $0x178] sm:$0xff]
        %v356 = vld [vmem:[%s5 + $0x180] sm:$0xff]
        %v357 = vld [vmem:[%s5 + $0x188] sm:$0xff]
        %v358 = vld [vmem:[%s5 + $0x190] sm:$0xff]
        %v359 = vld [vmem:[%s5 + $0x198] sm:$0xff]
        %v360 = vld [vmem:[%s5 + $0x1a0] sm:$0xff]
        %v361 = vld [vmem:[%s5 + $0x1a8] sm:$0xff]
        %v362 = vld [vmem:[%s5 + $0x1b0] sm:$0xff]
        %v363 = vld [vmem:[%s5 + $0x1b8] sm:$0xff]
        %v364 = vld [vmem:[%s5 + $0x1c0] sm:$0xff]
        %v365 = vld [vmem:[%s5 + $0x1c8] sm:$0xff]
        %v366 = vld [vmem:[%s5 + $0x1d0] sm:$0xff]
        %v367 = vld [vmem:[%s5 + $0x1d8] sm:$0xff]
        %v368 = vld [vmem:[%s5 + $0x1e0] sm:$0xff]
        %v369 = vld [vmem:[%s5 + $0x1e8] sm:$0xff]
        %v370 = vld [vmem:[%s5 + $0x1f0] sm:$0xff]
        %v371 = vld [vmem:[%s5 + $0x1f8] sm:$0xff]
        %v372 = vld [vmem:[%s5 + $0x200] sm:$0xff]
        %v373 = vld [vmem:[%s5 + $0x208] sm:$0xff]
        %v374 = vld [vmem:[%s5 + $0x210] sm:$0xff]
        %v375 = vld [vmem:[%s5 + $0x218] sm:$0xff]
        %v376 = vld [vmem:[%s5 + $0x220] sm:$0xff]
        %v377 = vld [vmem:[%s5 + $0x228] sm:$0xff]
        %v378 = vld [vmem:[%s5 + $0x230] sm:$0xff]
        %v379 = vld [vmem:[%s5 + $0x238] sm:$0xff]
        %v380 = vld [vmem:[%s5 + $0x240] sm:$0xff]
        %v381 = vld [vmem:[%s5 + $0x248] sm:$0xff]
        %v382 = vld [vmem:[%s5 + $0x250] sm:$0xff]
        %v383 = vld [vmem:[%s5 + $0x258] sm:$0xff]
        %v384 = vld [vmem:[%s5 + $0x260] sm:$0xff]
        %v385 = vld [vmem:[%s5 + $0x268] sm:$0xff]
        %v386 = vld [vmem:[%s5 + $0x270] sm:$0xff]
        %v387 = vld [vmem:[%s5 + $0x278] sm:$0xff]
        %v388 = vld [vmem:[%s5 + $0x280] sm:$0xff]
        %v389 = vld [vmem:[%s5 + $0x288] sm:$0xff]
        %v390 = vld [vmem:[%s5 + $0x290] sm:$0xff]
        %v391 = vld [vmem:[%s5 + $0x298] sm:$0xff]
        %v392 = vld [vmem:[%s5 + $0x2a0] sm:$0xff]
        %v393 = vld [vmem:[%s5 + $0x2a8] sm:$0xff]
        %v394 = vld [vmem:[%s5 + $0x2b0] sm:$0xff]
        %v395 = vld [vmem:[%s5 + $0x2b8] sm:$0xff]
        %v396 = vld [vmem:[%s5 + $0x2c0] sm:$0xff]
        %v397 = vld [vmem:[%s5 + $0x2c8] sm:$0xff]
        %v398 = vld [vmem:[%s5 + $0x2d0] sm:$0xff]
        %v399 = vld [vmem:[%s5 + $0x2d8] sm:$0xff]
        %v400 = vld [vmem:[%s5 + $0x2e0] sm:$0xff]
        %v401 = vld [vmem:[%s5 + $0x2e8] sm:$0xff]
        %v402 = vld [vmem:[%s5 + $0x2f0] sm:$0xff]
        %v403 = vld [vmem:[%s5 + $0x2f8] sm:$0xff]
        %v404 = vld [vmem:[%s5 + $0x300] sm:$0xff]
        %v405 = vld [vmem:[%s5 + $0x308] sm:$0xff]
        %v406 = vld [vmem:[%s5 + $0x310] sm:$0xff]
        %v407 = vld [vmem:[%s5 + $0x318] sm:$0xff]
        %v408 = vld [vmem:[%s5 + $0x320] sm:$0xff]
        %v409 = vld [vmem:[%s5 + $0x328] sm:$0xff]
        %v410 = vld [vmem:[%s5 + $0x330] sm:$0xff]
        %v411 = vld [vmem:[%s5 + $0x338] sm:$0xff]
        %v412 = vld [vmem:[%s5 + $0x340] sm:$0xff]
        %v413 = vld [vmem:[%s5 + $0x348] sm:$0xff]
        %v414 = vld [vmem:[%s5 + $0x350] sm:$0xff]
        %v415 = vld [vmem:[%s5 + $0x358] sm:$0xff]
        %v416 = vld [vmem:[%s5 + $0x360] sm:$0xff]
        %v417 = vld [vmem:[%s5 + $0x368] sm:$0xff]
        %v418 = vld [vmem:[%s5 + $0x370] sm:$0xff]
        %v419 = vld [vmem:[%s5 + $0x378] sm:$0xff]
        %v420 = vld [vmem:[%s5 + $0x380] sm:$0xff]
        %v421 = vld [vmem:[%s5 + $0x388] sm:$0xff]
        %v422 = vld [vmem:[%s5 + $0x390] sm:$0xff]
        %v423 = vld [vmem:[%s5 + $0x398] sm:$0xff]
        %v424 = vld [vmem:[%s5 + $0x3a0] sm:$0xff]
        %v425 = vld [vmem:[%s5 + $0x3a8] sm:$0xff]
        %v426 = vld [vmem:[%s5 + $0x3b0] sm:$0xff]
        %v427 = vld [vmem:[%s5 + $0x3b8] sm:$0xff]
        %v428 = vld [vmem:[%s5 + $0x3c0] sm:$0xff]
        %v429 = vld [vmem:[%s5 + $0x3c8] sm:$0xff]
        %v430 = vld [vmem:[%s5 + $0x3d0] sm:$0xff]
        %v431 = vld [vmem:[%s5 + $0x3d8] sm:$0xff]
        %v432 = vld [vmem:[%s5 + $0x3e0] sm:$0xff]
        %v433 = vld [vmem:[%s5 + $0x3e8] sm:$0xff]
        %v434 = vld [vmem:[%s5 + $0x3f0] sm:$0xff]
        %v435 = vld [vmem:[%s5 + $0x3f8] sm:$0xff]
        %v436 = vld [vmem:[%s5 + $0x400] sm:$0xff]
        %v437 = vld [vmem:[%s5 + $0x408] sm:$0xff]
        %v438 = vld [vmem:[%s5 + $0x410] sm:$0xff]
        %v439 = vld [vmem:[%s5 + $0x418] sm:$0xff]
        %v440 = vld [vmem:[%s5 + $0x420] sm:$0xff]
        %v441 = vld [vmem:[%s5 + $0x428] sm:$0xff]
        %v442 = vld [vmem:[%s5 + $0x430] sm:$0xff]
        %v443 = vld [vmem:[%s5 + $0x438] sm:$0xff]
        %v444 = vld [vmem:[%s5 + $0x440] sm:$0xff]
        %v445 = vld [vmem:[%s5 + $0x448] sm:$0xff]
        %v446 = vld [vmem:[%s5 + $0x450] sm:$0xff]
        %v447 = vld [vmem:[%s5 + $0x458] sm:$0xff]
        %v448 = vld [vmem:[%s5 + $0x460] sm:$0xff]
        %v449 = vld [vmem:[%s5 + $0x468] sm:$0xff]
        %v450 = vld [vmem:[%s5 + $0x470] sm:$0xff]
        %v451 = vld [vmem:[%s5 + $0x478] sm:$0xff]
        %s452 = smul.u32 %s20, 128
        %s453 = sld [smem:[#allocation3 + %s452]]
        %v454 = vstv %s453
        %v455 = vmul.f32 %v308, %v454
        %v456 = vmul.f32 %v309, %v454
        %v457 = vmul.f32 %v310, %v454
        %v458 = vmul.f32 %v311, %v454
        %v459 = vmul.f32 %v312, %v454
        %v460 = vmul.f32 %v313, %v454
        %v461 = vmul.f32 %v314, %v454
        %v462 = vmul.f32 %v315, %v454
        %v463 = vmul.f32 %v316, %v454
        %v464 = vmul.f32 %v317, %v454
        %v465 = vmul.f32 %v318, %v454
        %v466 = vmul.f32 %v319, %v454
        %v467 = vmul.f32 %v320, %v454
        %v468 = vmul.f32 %v321, %v454
        %v469 = vmul.f32 %v322, %v454
        %v470 = vmul.f32 %v323, %v454
        %v471 = vmul.f32 %v324, %v454
        %v472 = vmul.f32 %v325, %v454
        %v473 = vmul.f32 %v326, %v454
        %v474 = vmul.f32 %v327, %v454
        %v475 = vmul.f32 %v328, %v454
        %v476 = vmul.f32 %v329, %v454
        %v477 = vmul.f32 %v330, %v454
        %v478 = vmul.f32 %v331, %v454
        %v479 = vmul.f32 %v332, %v454
        %v480 = vmul.f32 %v333, %v454
        %v481 = vmul.f32 %v334, %v454
        %v482 = vmul.f32 %v335, %v454
        %v483 = vmul.f32 %v336, %v454
        %v484 = vmul.f32 %v337, %v454
        %v485 = vmul.f32 %v338, %v454
        %v486 = vmul.f32 %v339, %v454
        %v487 = vmul.f32 %v340, %v454
        %v488 = vmul.f32 %v341, %v454
        %v489 = vmul.f32 %v342, %v454
        %v490 = vmul.f32 %v343, %v454
        %v491 = vmul.f32 %v344, %v454
        %v492 = vmul.f32 %v345, %v454
        %v493 = vmul.f32 %v346, %v454
        %v494 = vmul.f32 %v347, %v454
        %v495 = vmul.f32 %v348, %v454
        %v496 = vmul.f32 %v349, %v454
        %v497 = vmul.f32 %v350, %v454
        %v498 = vmul.f32 %v351, %v454
        %v499 = vmul.f32 %v352, %v454
        %v500 = vmul.f32 %v353, %v454
        %v501 = vmul.f32 %v354, %v454
        %v502 = vmul.f32 %v355, %v454
        %v503 = vmul.f32 %v356, %v454
        %v504 = vmul.f32 %v357, %v454
        %v505 = vmul.f32 %v358, %v454
        %v506 = vmul.f32 %v359, %v454
        %v507 = vmul.f32 %v360, %v454
        %v508 = vmul.f32 %v361, %v454
        %v509 = vmul.f32 %v362, %v454
        %v510 = vmul.f32 %v363, %v454
        %v511 = vmul.f32 %v364, %v454
        %v512 = vmul.f32 %v365, %v454
        %v513 = vmul.f32 %v366, %v454
        %v514 = vmul.f32 %v367, %v454
        %v515 = vmul.f32 %v368, %v454
        %v516 = vmul.f32 %v369, %v454
        %v517 = vmul.f32 %v370, %v454
        %v518 = vmul.f32 %v371, %v454
        %v519 = vmul.f32 %v372, %v454
        %v520 = vmul.f32 %v373, %v454
        %v521 = vmul.f32 %v374, %v454
        %v522 = vmul.f32 %v375, %v454
        %v523 = vmul.f32 %v376, %v454
        %v524 = vmul.f32 %v377, %v454
        %v525 = vmul.f32 %v378, %v454
        %v526 = vmul.f32 %v379, %v454
        %v527 = vmul.f32 %v380, %v454
        %v528 = vmul.f32 %v381, %v454
        %v529 = vmul.f32 %v382, %v454
        %v530 = vmul.f32 %v383, %v454
        %v531 = vmul.f32 %v384, %v454
        %v532 = vmul.f32 %v385, %v454
        %v533 = vmul.f32 %v386, %v454
        %v534 = vmul.f32 %v387, %v454
        %v535 = vmul.f32 %v388, %v454
        %v536 = vmul.f32 %v389, %v454
        %v537 = vmul.f32 %v390, %v454
        %v538 = vmul.f32 %v391, %v454
        %v539 = vmul.f32 %v392, %v454
        %v540 = vmul.f32 %v393, %v454
        %v541 = vmul.f32 %v394, %v454
        %v542 = vmul.f32 %v395, %v454
        %v543 = vmul.f32 %v396, %v454
        %v544 = vmul.f32 %v397, %v454
        %v545 = vmul.f32 %v398, %v454
        %v546 = vmul.f32 %v399, %v454
        %v547 = vmul.f32 %v400, %v454
        %v548 = vmul.f32 %v401, %v454
        %v549 = vmul.f32 %v402, %v454
        %v550 = vmul.f32 %v403, %v454
        %v551 = vmul.f32 %v404, %v454
        %v552 = vmul.f32 %v405, %v454
        %v553 = vmul.f32 %v406, %v454
        %v554 = vmul.f32 %v407, %v454
        %v555 = vmul.f32 %v408, %v454
        %v556 = vmul.f32 %v409, %v454
        %v557 = vmul.f32 %v410, %v454
        %v558 = vmul.f32 %v411, %v454
        %v559 = vmul.f32 %v412, %v454
        %v560 = vmul.f32 %v413, %v454
        %v561 = vmul.f32 %v414, %v454
        %v562 = vmul.f32 %v415, %v454
        %v563 = vmul.f32 %v416, %v454
        %v564 = vmul.f32 %v417, %v454
        %v565 = vmul.f32 %v418, %v454
        %v566 = vmul.f32 %v419, %v454
        %v567 = vmul.f32 %v420, %v454
        %v568 = vmul.f32 %v421, %v454
        %v569 = vmul.f32 %v422, %v454
        %v570 = vmul.f32 %v423, %v454
        %v571 = vmul.f32 %v424, %v454
        %v572 = vmul.f32 %v425, %v454
        %v573 = vmul.f32 %v426, %v454
        %v574 = vmul.f32 %v427, %v454
        %v575 = vmul.f32 %v428, %v454
        %v576 = vmul.f32 %v429, %v454
        %v577 = vmul.f32 %v430, %v454
        %v578 = vmul.f32 %v431, %v454
        %v579 = vmul.f32 %v432, %v454
        %v580 = vmul.f32 %v433, %v454
        %v581 = vmul.f32 %v434, %v454
        %v582 = vmul.f32 %v435, %v454
        %v583 = vmul.f32 %v436, %v454
        %v584 = vmul.f32 %v437, %v454
        %v585 = vmul.f32 %v438, %v454
        %v586 = vmul.f32 %v439, %v454
        %v587 = vmul.f32 %v440, %v454
        %v588 = vmul.f32 %v441, %v454
        %v589 = vmul.f32 %v442, %v454
        %v590 = vmul.f32 %v443, %v454
        %v591 = vmul.f32 %v444, %v454
        %v592 = vmul.f32 %v445, %v454
        %v593 = vmul.f32 %v446, %v454
        %v594 = vmul.f32 %v447, %v454
        %v595 = vmul.f32 %v448, %v454
        %v596 = vmul.f32 %v449, %v454
        %v597 = vmul.f32 %v450, %v454
        %v598 = vmul.f32 %v451, %v454
        %s599 = scalar_lea.vmem %s5, 1152
        %v600 = vld [vmem:[%s599] sm:$0xff]
        %v601 = vld [vmem:[%s599 + $0x8] sm:$0xff]
        %v602 = vld [vmem:[%s599 + $0x10] sm:$0xff]
        %v603 = vld [vmem:[%s599 + $0x18] sm:$0xff]
        %v604 = vld [vmem:[%s599 + $0x20] sm:$0xff]
        %v605 = vld [vmem:[%s599 + $0x28] sm:$0xff]
        %v606 = vld [vmem:[%s599 + $0x30] sm:$0xff]
        %v607 = vld [vmem:[%s599 + $0x38] sm:$0xff]
        %v608 = vld [vmem:[%s599 + $0x40] sm:$0xff]
        %v609 = vld [vmem:[%s599 + $0x48] sm:$0xff]
        %v610 = vld [vmem:[%s599 + $0x50] sm:$0xff]
        %v611 = vld [vmem:[%s599 + $0x58] sm:$0xff]
        %v612 = vld [vmem:[%s599 + $0x60] sm:$0xff]
        %v613 = vld [vmem:[%s599 + $0x68] sm:$0xff]
        %v614 = vld [vmem:[%s599 + $0x70] sm:$0xff]
        %v615 = vld [vmem:[%s599 + $0x78] sm:$0xff]
        %v616 = vld [vmem:[%s599 + $0x80] sm:$0xff]
        %v617 = vld [vmem:[%s599 + $0x88] sm:$0xff]
        %v618 = vld [vmem:[%s599 + $0x90] sm:$0xff]
        %v619 = vld [vmem:[%s599 + $0x98] sm:$0xff]
        %v620 = vld [vmem:[%s599 + $0xa0] sm:$0xff]
        %v621 = vld [vmem:[%s599 + $0xa8] sm:$0xff]
        %v622 = vld [vmem:[%s599 + $0xb0] sm:$0xff]
        %v623 = vld [vmem:[%s599 + $0xb8] sm:$0xff]
        %v624 = vld [vmem:[%s599 + $0xc0] sm:$0xff]
        %v625 = vld [vmem:[%s599 + $0xc8] sm:$0xff]
        %v626 = vld [vmem:[%s599 + $0xd0] sm:$0xff]
        %v627 = vld [vmem:[%s599 + $0xd8] sm:$0xff]
        %v628 = vld [vmem:[%s599 + $0xe0] sm:$0xff]
        %v629 = vld [vmem:[%s599 + $0xe8] sm:$0xff]
        %v630 = vld [vmem:[%s599 + $0xf0] sm:$0xff]
        %v631 = vld [vmem:[%s599 + $0xf8] sm:$0xff]
        %v632 = vld [vmem:[%s599 + $0x100] sm:$0xff]
        %v633 = vld [vmem:[%s599 + $0x108] sm:$0xff]
        %v634 = vld [vmem:[%s599 + $0x110] sm:$0xff]
        %v635 = vld [vmem:[%s599 + $0x118] sm:$0xff]
        %v636 = vld [vmem:[%s599 + $0x120] sm:$0xff]
        %v637 = vld [vmem:[%s599 + $0x128] sm:$0xff]
        %v638 = vld [vmem:[%s599 + $0x130] sm:$0xff]
        %v639 = vld [vmem:[%s599 + $0x138] sm:$0xff]
        %v640 = vld [vmem:[%s599 + $0x140] sm:$0xff]
        %v641 = vld [vmem:[%s599 + $0x148] sm:$0xff]
        %v642 = vld [vmem:[%s599 + $0x150] sm:$0xff]
        %v643 = vld [vmem:[%s599 + $0x158] sm:$0xff]
        %v644 = vld [vmem:[%s599 + $0x160] sm:$0xff]
        %v645 = vld [vmem:[%s599 + $0x168] sm:$0xff]
        %v646 = vld [vmem:[%s599 + $0x170] sm:$0xff]
        %v647 = vld [vmem:[%s599 + $0x178] sm:$0xff]
        %v648 = vld [vmem:[%s599 + $0x180] sm:$0xff]
        %v649 = vld [vmem:[%s599 + $0x188] sm:$0xff]
        %v650 = vld [vmem:[%s599 + $0x190] sm:$0xff]
        %v651 = vld [vmem:[%s599 + $0x198] sm:$0xff]
        %v652 = vld [vmem:[%s599 + $0x1a0] sm:$0xff]
        %v653 = vld [vmem:[%s599 + $0x1a8] sm:$0xff]
        %v654 = vld [vmem:[%s599 + $0x1b0] sm:$0xff]
        %v655 = vld [vmem:[%s599 + $0x1b8] sm:$0xff]
        %v656 = vld [vmem:[%s599 + $0x1c0] sm:$0xff]
        %v657 = vld [vmem:[%s599 + $0x1c8] sm:$0xff]
        %v658 = vld [vmem:[%s599 + $0x1d0] sm:$0xff]
        %v659 = vld [vmem:[%s599 + $0x1d8] sm:$0xff]
        %v660 = vld [vmem:[%s599 + $0x1e0] sm:$0xff]
        %v661 = vld [vmem:[%s599 + $0x1e8] sm:$0xff]
        %v662 = vld [vmem:[%s599 + $0x1f0] sm:$0xff]
        %v663 = vld [vmem:[%s599 + $0x1f8] sm:$0xff]
        %v664 = vld [vmem:[%s599 + $0x200] sm:$0xff]
        %v665 = vld [vmem:[%s599 + $0x208] sm:$0xff]
        %v666 = vld [vmem:[%s599 + $0x210] sm:$0xff]
        %v667 = vld [vmem:[%s599 + $0x218] sm:$0xff]
        %v668 = vld [vmem:[%s599 + $0x220] sm:$0xff]
        %v669 = vld [vmem:[%s599 + $0x228] sm:$0xff]
        %v670 = vld [vmem:[%s599 + $0x230] sm:$0xff]
        %v671 = vld [vmem:[%s599 + $0x238] sm:$0xff]
        %v672 = vld [vmem:[%s599 + $0x240] sm:$0xff]
        %v673 = vld [vmem:[%s599 + $0x248] sm:$0xff]
        %v674 = vld [vmem:[%s599 + $0x250] sm:$0xff]
        %v675 = vld [vmem:[%s599 + $0x258] sm:$0xff]
        %v676 = vld [vmem:[%s599 + $0x260] sm:$0xff]
        %v677 = vld [vmem:[%s599 + $0x268] sm:$0xff]
        %v678 = vld [vmem:[%s599 + $0x270] sm:$0xff]
        %v679 = vld [vmem:[%s599 + $0x278] sm:$0xff]
        %v680 = vld [vmem:[%s599 + $0x280] sm:$0xff]
        %v681 = vld [vmem:[%s599 + $0x288] sm:$0xff]
        %v682 = vld [vmem:[%s599 + $0x290] sm:$0xff]
        %v683 = vld [vmem:[%s599 + $0x298] sm:$0xff]
        %v684 = vld [vmem:[%s599 + $0x2a0] sm:$0xff]
        %v685 = vld [vmem:[%s599 + $0x2a8] sm:$0xff]
        %v686 = vld [vmem:[%s599 + $0x2b0] sm:$0xff]
        %v687 = vld [vmem:[%s599 + $0x2b8] sm:$0xff]
        %v688 = vld [vmem:[%s599 + $0x2c0] sm:$0xff]
        %v689 = vld [vmem:[%s599 + $0x2c8] sm:$0xff]
        %v690 = vld [vmem:[%s599 + $0x2d0] sm:$0xff]
        %v691 = vld [vmem:[%s599 + $0x2d8] sm:$0xff]
        %v692 = vld [vmem:[%s599 + $0x2e0] sm:$0xff]
        %v693 = vld [vmem:[%s599 + $0x2e8] sm:$0xff]
        %v694 = vld [vmem:[%s599 + $0x2f0] sm:$0xff]
        %v695 = vld [vmem:[%s599 + $0x2f8] sm:$0xff]
        %v696 = vld [vmem:[%s599 + $0x300] sm:$0xff]
        %v697 = vld [vmem:[%s599 + $0x308] sm:$0xff]
        %v698 = vld [vmem:[%s599 + $0x310] sm:$0xff]
        %v699 = vld [vmem:[%s599 + $0x318] sm:$0xff]
        %v700 = vld [vmem:[%s599 + $0x320] sm:$0xff]
        %v701 = vld [vmem:[%s599 + $0x328] sm:$0xff]
        %v702 = vld [vmem:[%s599 + $0x330] sm:$0xff]
        %v703 = vld [vmem:[%s599 + $0x338] sm:$0xff]
        %v704 = vld [vmem:[%s599 + $0x340] sm:$0xff]
        %v705 = vld [vmem:[%s599 + $0x348] sm:$0xff]
        %v706 = vld [vmem:[%s599 + $0x350] sm:$0xff]
        %v707 = vld [vmem:[%s599 + $0x358] sm:$0xff]
        %v708 = vld [vmem:[%s599 + $0x360] sm:$0xff]
        %v709 = vld [vmem:[%s599 + $0x368] sm:$0xff]
        %v710 = vld [vmem:[%s599 + $0x370] sm:$0xff]
        %v711 = vld [vmem:[%s599 + $0x378] sm:$0xff]
        %v712 = vld [vmem:[%s599 + $0x380] sm:$0xff]
        %v713 = vld [vmem:[%s599 + $0x388] sm:$0xff]
        %v714 = vld [vmem:[%s599 + $0x390] sm:$0xff]
        %v715 = vld [vmem:[%s599 + $0x398] sm:$0xff]
        %v716 = vld [vmem:[%s599 + $0x3a0] sm:$0xff]
        %v717 = vld [vmem:[%s599 + $0x3a8] sm:$0xff]
        %v718 = vld [vmem:[%s599 + $0x3b0] sm:$0xff]
        %v719 = vld [vmem:[%s599 + $0x3b8] sm:$0xff]
        %v720 = vld [vmem:[%s599 + $0x3c0] sm:$0xff]
        %v721 = vld [vmem:[%s599 + $0x3c8] sm:$0xff]
        %v722 = vld [vmem:[%s599 + $0x3d0] sm:$0xff]
        %v723 = vld [vmem:[%s599 + $0x3d8] sm:$0xff]
        %v724 = vld [vmem:[%s599 + $0x3e0] sm:$0xff]
        %v725 = vld [vmem:[%s599 + $0x3e8] sm:$0xff]
        %v726 = vld [vmem:[%s599 + $0x3f0] sm:$0xff]
        %v727 = vld [vmem:[%s599 + $0x3f8] sm:$0xff]
        %v728 = vld [vmem:[%s599 + $0x400] sm:$0xff]
        %v729 = vld [vmem:[%s599 + $0x408] sm:$0xff]
        %v730 = vld [vmem:[%s599 + $0x410] sm:$0xff]
        %v731 = vld [vmem:[%s599 + $0x418] sm:$0xff]
        %v732 = vld [vmem:[%s599 + $0x420] sm:$0xff]
        %v733 = vld [vmem:[%s599 + $0x428] sm:$0xff]
        %v734 = vld [vmem:[%s599 + $0x430] sm:$0xff]
        %v735 = vld [vmem:[%s599 + $0x438] sm:$0xff]
        %v736 = vld [vmem:[%s599 + $0x440] sm:$0xff]
        %v737 = vld [vmem:[%s599 + $0x448] sm:$0xff]
        %v738 = vld [vmem:[%s599 + $0x450] sm:$0xff]
        %v739 = vld [vmem:[%s599 + $0x458] sm:$0xff]
        %v740 = vld [vmem:[%s599 + $0x460] sm:$0xff]
        %v741 = vld [vmem:[%s599 + $0x468] sm:$0xff]
        %v742 = vld [vmem:[%s599 + $0x470] sm:$0xff]
        %v743 = vld [vmem:[%s599 + $0x478] sm:$0xff]
        %s744 = sadd.s32 %s452, 1
        %s745 = sld [smem:[#allocation3 + %s744]]
        %v746 = vstv %s745
        %v747 = vmul.f32 %v600, %v746
        %v748 = vmul.f32 %v601, %v746
        %v749 = vmul.f32 %v602, %v746
        %v750 = vmul.f32 %v603, %v746
        %v751 = vmul.f32 %v604, %v746
        %v752 = vmul.f32 %v605, %v746
        %v753 = vmul.f32 %v606, %v746
        %v754 = vmul.f32 %v607, %v746
        %v755 = vmul.f32 %v608, %v746
        %v756 = vmul.f32 %v609, %v746
        %v757 = vmul.f32 %v610, %v746
        %v758 = vmul.f32 %v611, %v746
        %v759 = vmul.f32 %v612, %v746
        %v760 = vmul.f32 %v613, %v746
        %v761 = vmul.f32 %v614, %v746
        %v762 = vmul.f32 %v615, %v746
        %v763 = vmul.f32 %v616, %v746
        %v764 = vmul.f32 %v617, %v746
        %v765 = vmul.f32 %v618, %v746
        %v766 = vmul.f32 %v619, %v746
        %v767 = vmul.f32 %v620, %v746
        %v768 = vmul.f32 %v621, %v746
        %v769 = vmul.f32 %v622, %v746
        %v770 = vmul.f32 %v623, %v746
        %v771 = vmul.f32 %v624, %v746
        %v772 = vmul.f32 %v625, %v746
        %v773 = vmul.f32 %v626, %v746
        %v774 = vmul.f32 %v627, %v746
        %v775 = vmul.f32 %v628, %v746
        %v776 = vmul.f32 %v629, %v746
        %v777 = vmul.f32 %v630, %v746
        %v778 = vmul.f32 %v631, %v746
        %v779 = vmul.f32 %v632, %v746
        %v780 = vmul.f32 %v633, %v746
        %v781 = vmul.f32 %v634, %v746
        %v782 = vmul.f32 %v635, %v746
        %v783 = vmul.f32 %v636, %v746
        %v784 = vmul.f32 %v637, %v746
        %v785 = vmul.f32 %v638, %v746
        %v786 = vmul.f32 %v639, %v746
        %v787 = vmul.f32 %v640, %v746
        %v788 = vmul.f32 %v641, %v746
        %v789 = vmul.f32 %v642, %v746
        %v790 = vmul.f32 %v643, %v746
        %v791 = vmul.f32 %v644, %v746
        %v792 = vmul.f32 %v645, %v746
        %v793 = vmul.f32 %v646, %v746
        %v794 = vmul.f32 %v647, %v746
        %v795 = vmul.f32 %v648, %v746
        %v796 = vmul.f32 %v649, %v746
        %v797 = vmul.f32 %v650, %v746
        %v798 = vmul.f32 %v651, %v746
        %v799 = vmul.f32 %v652, %v746
        %v800 = vmul.f32 %v653, %v746
        %v801 = vmul.f32 %v654, %v746
        %v802 = vmul.f32 %v655, %v746
        %v803 = vmul.f32 %v656, %v746
        %v804 = vmul.f32 %v657, %v746
        %v805 = vmul.f32 %v658, %v746
        %v806 = vmul.f32 %v659, %v746
        %v807 = vmul.f32 %v660, %v746
        %v808 = vmul.f32 %v661, %v746
        %v809 = vmul.f32 %v662, %v746
        %v810 = vmul.f32 %v663, %v746
        %v811 = vmul.f32 %v664, %v746
        %v812 = vmul.f32 %v665, %v746
        %v813 = vmul.f32 %v666, %v746
        %v814 = vmul.f32 %v667, %v746
        %v815 = vmul.f32 %v668, %v746
        %v816 = vmul.f32 %v669, %v746
        %v817 = vmul.f32 %v670, %v746
        %v818 = vmul.f32 %v671, %v746
        %v819 = vmul.f32 %v672, %v746
        %v820 = vmul.f32 %v673, %v746
        %v821 = vmul.f32 %v674, %v746
        %v822 = vmul.f32 %v675, %v746
        %v823 = vmul.f32 %v676, %v746
        %v824 = vmul.f32 %v677, %v746
        %v825 = vmul.f32 %v678, %v746
        %v826 = vmul.f32 %v679, %v746
        %v827 = vmul.f32 %v680, %v746
        %v828 = vmul.f32 %v681, %v746
        %v829 = vmul.f32 %v682, %v746
        %v830 = vmul.f32 %v683, %v746
        %v831 = vmul.f32 %v684, %v746
        %v832 = vmul.f32 %v685, %v746
        %v833 = vmul.f32 %v686, %v746
        %v834 = vmul.f32 %v687, %v746
        %v835 = vmul.f32 %v688, %v746
        %v836 = vmul.f32 %v689, %v746
        %v837 = vmul.f32 %v690, %v746
        %v838 = vmul.f32 %v691, %v746
        %v839 = vmul.f32 %v692, %v746
        %v840 = vmul.f32 %v693, %v746
        %v841 = vmul.f32 %v694, %v746
        %v842 = vmul.f32 %v695, %v746
        %v843 = vmul.f32 %v696, %v746
        %v844 = vmul.f32 %v697, %v746
        %v845 = vmul.f32 %v698, %v746
        %v846 = vmul.f32 %v699, %v746
        %v847 = vmul.f32 %v700, %v746
        %v848 = vmul.f32 %v701, %v746
        %v849 = vmul.f32 %v702, %v746
        %v850 = vmul.f32 %v703, %v746
        %v851 = vmul.f32 %v704, %v746
        %v852 = vmul.f32 %v705, %v746
        %v853 = vmul.f32 %v706, %v746
        %v854 = vmul.f32 %v707, %v746
        %v855 = vmul.f32 %v708, %v746
        %v856 = vmul.f32 %v709, %v746
        %v857 = vmul.f32 %v710, %v746
        %v858 = vmul.f32 %v711, %v746
        %v859 = vmul.f32 %v712, %v746
        %v860 = vmul.f32 %v713, %v746
        %v861 = vmul.f32 %v714, %v746
        %v862 = vmul.f32 %v715, %v746
        %v863 = vmul.f32 %v716, %v746
        %v864 = vmul.f32 %v717, %v746
        %v865 = vmul.f32 %v718, %v746
        %v866 = vmul.f32 %v719, %v746
        %v867 = vmul.f32 %v720, %v746
        %v868 = vmul.f32 %v721, %v746
        %v869 = vmul.f32 %v722, %v746
        %v870 = vmul.f32 %v723, %v746
        %v871 = vmul.f32 %v724, %v746
        %v872 = vmul.f32 %v725, %v746
        %v873 = vmul.f32 %v726, %v746
        %v874 = vmul.f32 %v727, %v746
        %v875 = vmul.f32 %v728, %v746
        %v876 = vmul.f32 %v729, %v746
        %v877 = vmul.f32 %v730, %v746
        %v878 = vmul.f32 %v731, %v746
        %v879 = vmul.f32 %v732, %v746
        %v880 = vmul.f32 %v733, %v746
        %v881 = vmul.f32 %v734, %v746
        %v882 = vmul.f32 %v735, %v746
        %v883 = vmul.f32 %v736, %v746
        %v884 = vmul.f32 %v737, %v746
        %v885 = vmul.f32 %v738, %v746
        %v886 = vmul.f32 %v739, %v746
        %v887 = vmul.f32 %v740, %v746
        %v888 = vmul.f32 %v741, %v746
        %v889 = vmul.f32 %v742, %v746
        %v890 = vmul.f32 %v743, %v746
        %v891 = vadd.f32 %v455, %v747
        %v892 = vadd.f32 %v456, %v748
        %v893 = vadd.f32 %v457, %v749
        %v894 = vadd.f32 %v458, %v750
        %v895 = vadd.f32 %v459, %v751
        %v896 = vadd.f32 %v460, %v752
        %v897 = vadd.f32 %v461, %v753
        %v898 = vadd.f32 %v462, %v754
        %v899 = vadd.f32 %v463, %v755
        %v900 = vadd.f32 %v464, %v756
        %v901 = vadd.f32 %v465, %v757
        %v902 = vadd.f32 %v466, %v758
        %v903 = vadd.f32 %v467, %v759
        %v904 = vadd.f32 %v468, %v760
        %v905 = vadd.f32 %v469, %v761
        %v906 = vadd.f32 %v470, %v762
        %v907 = vadd.f32 %v471, %v763
        %v908 = vadd.f32 %v472, %v764
        %v909 = vadd.f32 %v473, %v765
        %v910 = vadd.f32 %v474, %v766
        %v911 = vadd.f32 %v475, %v767
        %v912 = vadd.f32 %v476, %v768
        %v913 = vadd.f32 %v477, %v769
        %v914 = vadd.f32 %v478, %v770
        %v915 = vadd.f32 %v479, %v771
        %v916 = vadd.f32 %v480, %v772
        %v917 = vadd.f32 %v481, %v773
        %v918 = vadd.f32 %v482, %v774
        %v919 = vadd.f32 %v483, %v775
        %v920 = vadd.f32 %v484, %v776
        %v921 = vadd.f32 %v485, %v777
        %v922 = vadd.f32 %v486, %v778
        %v923 = vadd.f32 %v487, %v779
        %v924 = vadd.f32 %v488, %v780
        %v925 = vadd.f32 %v489, %v781
        %v926 = vadd.f32 %v490, %v782
        %v927 = vadd.f32 %v491, %v783
        %v928 = vadd.f32 %v492, %v784
        %v929 = vadd.f32 %v493, %v785
        %v930 = vadd.f32 %v494, %v786
        %v931 = vadd.f32 %v495, %v787
        %v932 = vadd.f32 %v496, %v788
        %v933 = vadd.f32 %v497, %v789
        %v934 = vadd.f32 %v498, %v790
        %v935 = vadd.f32 %v499, %v791
        %v936 = vadd.f32 %v500, %v792
        %v937 = vadd.f32 %v501, %v793
        %v938 = vadd.f32 %v502, %v794
        %v939 = vadd.f32 %v503, %v795
        %v940 = vadd.f32 %v504, %v796
        %v941 = vadd.f32 %v505, %v797
        %v942 = vadd.f32 %v506, %v798
        %v943 = vadd.f32 %v507, %v799
        %v944 = vadd.f32 %v508, %v800
        %v945 = vadd.f32 %v509, %v801
        %v946 = vadd.f32 %v510, %v802
        %v947 = vadd.f32 %v511, %v803
        %v948 = vadd.f32 %v512, %v804
        %v949 = vadd.f32 %v513, %v805
        %v950 = vadd.f32 %v514, %v806
        %v951 = vadd.f32 %v515, %v807
        %v952 = vadd.f32 %v516, %v808
        %v953 = vadd.f32 %v517, %v809
        %v954 = vadd.f32 %v518, %v810
        %v955 = vadd.f32 %v519, %v811
        %v956 = vadd.f32 %v520, %v812
        %v957 = vadd.f32 %v521, %v813
        %v958 = vadd.f32 %v522, %v814
        %v959 = vadd.f32 %v523, %v815
        %v960 = vadd.f32 %v524, %v816
        %v961 = vadd.f32 %v525, %v817
        %v962 = vadd.f32 %v526, %v818
        %v963 = vadd.f32 %v527, %v819
        %v964 = vadd.f32 %v528, %v820
        %v965 = vadd.f32 %v529, %v821
        %v966 = vadd.f32 %v530, %v822
        %v967 = vadd.f32 %v531, %v823
        %v968 = vadd.f32 %v532, %v824
        %v969 = vadd.f32 %v533, %v825
        %v970 = vadd.f32 %v534, %v826
        %v971 = vadd.f32 %v535, %v827
        %v972 = vadd.f32 %v536, %v828
        %v973 = vadd.f32 %v537, %v829
        %v974 = vadd.f32 %v538, %v830
        %v975 = vadd.f32 %v539, %v831
        %v976 = vadd.f32 %v540, %v832
        %v977 = vadd.f32 %v541, %v833
        %v978 = vadd.f32 %v542, %v834
        %v979 = vadd.f32 %v543, %v835
        %v980 = vadd.f32 %v544, %v836
        %v981 = vadd.f32 %v545, %v837
        %v982 = vadd.f32 %v546, %v838
        %v983 = vadd.f32 %v547, %v839
        %v984 = vadd.f32 %v548, %v840
        %v985 = vadd.f32 %v549, %v841
        %v986 = vadd.f32 %v550, %v842
        %v987 = vadd.f32 %v551, %v843
        %v988 = vadd.f32 %v552, %v844
        %v989 = vadd.f32 %v553, %v845
        %v990 = vadd.f32 %v554, %v846
        %v991 = vadd.f32 %v555, %v847
        %v992 = vadd.f32 %v556, %v848
        %v993 = vadd.f32 %v557, %v849
        %v994 = vadd.f32 %v558, %v850
        %v995 = vadd.f32 %v559, %v851
        %v996 = vadd.f32 %v560, %v852
        %v997 = vadd.f32 %v561, %v853
        %v998 = vadd.f32 %v562, %v854
        %v999 = vadd.f32 %v563, %v855
        %v1000 = vadd.f32 %v564, %v856
        %v1001 = vadd.f32 %v565, %v857
        %v1002 = vadd.f32 %v566, %v858
        %v1003 = vadd.f32 %v567, %v859
        %v1004 = vadd.f32 %v568, %v860
        %v1005 = vadd.f32 %v569, %v861
        %v1006 = vadd.f32 %v570, %v862
        %v1007 = vadd.f32 %v571, %v863
        %v1008 = vadd.f32 %v572, %v864
        %v1009 = vadd.f32 %v573, %v865
        %v1010 = vadd.f32 %v574, %v866
        %v1011 = vadd.f32 %v575, %v867
        %v1012 = vadd.f32 %v576, %v868
        %v1013 = vadd.f32 %v577, %v869
        %v1014 = vadd.f32 %v578, %v870
        %v1015 = vadd.f32 %v579, %v871
        %v1016 = vadd.f32 %v580, %v872
        %v1017 = vadd.f32 %v581, %v873
        %v1018 = vadd.f32 %v582, %v874
        %v1019 = vadd.f32 %v583, %v875
        %v1020 = vadd.f32 %v584, %v876
        %v1021 = vadd.f32 %v585, %v877
        %v1022 = vadd.f32 %v586, %v878
        %v1023 = vadd.f32 %v587, %v879
        %v1024 = vadd.f32 %v588, %v880
        %v1025 = vadd.f32 %v589, %v881
        %v1026 = vadd.f32 %v590, %v882
        %v1027 = vadd.f32 %v591, %v883
        %v1028 = vadd.f32 %v592, %v884
        %v1029 = vadd.f32 %v593, %v885
        %v1030 = vadd.f32 %v594, %v886
        %v1031 = vadd.f32 %v595, %v887
        %v1032 = vadd.f32 %v596, %v888
        %v1033 = vadd.f32 %v597, %v889
        %v1034 = vadd.f32 %v598, %v890
        %v1035 = vld [vmem:[%s302] sm:$0x1]
        %v1036 = vadd.f32 %v1035, 1.0
        %v1037 = vmul.f32 %v1036, %v1036
        %v1038 = vmul.f32 %v891, %v891
        %v1039 = vmul.f32 %v892, %v892
        %v1040 = vmul.f32 %v893, %v893
        %v1041 = vmul.f32 %v894, %v894
        %v1042 = vmul.f32 %v895, %v895
        %v1043 = vmul.f32 %v896, %v896
        %v1044 = vmul.f32 %v897, %v897
        %v1045 = vmul.f32 %v898, %v898
        %v1046 = vmul.f32 %v899, %v899
        %v1047 = vmul.f32 %v900, %v900
        %v1048 = vmul.f32 %v901, %v901
        %v1049 = vmul.f32 %v902, %v902
        %v1050 = vmul.f32 %v903, %v903
        %v1051 = vmul.f32 %v904, %v904
        %v1052 = vmul.f32 %v905, %v905
        %v1053 = vmul.f32 %v906, %v906
        %v1054 = vmul.f32 %v907, %v907
        %v1055 = vmul.f32 %v908, %v908
        %v1056 = vmul.f32 %v909, %v909
        %v1057 = vmul.f32 %v910, %v910
        %v1058 = vmul.f32 %v911, %v911
        %v1059 = vmul.f32 %v912, %v912
        %v1060 = vmul.f32 %v913, %v913
        %v1061 = vmul.f32 %v914, %v914
        %v1062 = vmul.f32 %v915, %v915
        %v1063 = vmul.f32 %v916, %v916
        %v1064 = vmul.f32 %v917, %v917
        %v1065 = vmul.f32 %v918, %v918
        %v1066 = vmul.f32 %v919, %v919
        %v1067 = vmul.f32 %v920, %v920
        %v1068 = vmul.f32 %v921, %v921
        %v1069 = vmul.f32 %v922, %v922
        %v1070 = vmul.f32 %v923, %v923
        %v1071 = vmul.f32 %v924, %v924
        %v1072 = vmul.f32 %v925, %v925
        %v1073 = vmul.f32 %v926, %v926
        %v1074 = vmul.f32 %v927, %v927
        %v1075 = vmul.f32 %v928, %v928
        %v1076 = vmul.f32 %v929, %v929
        %v1077 = vmul.f32 %v930, %v930
        %v1078 = vmul.f32 %v931, %v931
        %v1079 = vmul.f32 %v932, %v932
        %v1080 = vmul.f32 %v933, %v933
        %v1081 = vmul.f32 %v934, %v934
        %v1082 = vmul.f32 %v935, %v935
        %v1083 = vmul.f32 %v936, %v936
        %v1084 = vmul.f32 %v937, %v937
        %v1085 = vmul.f32 %v938, %v938
        %v1086 = vmul.f32 %v939, %v939
        %v1087 = vmul.f32 %v940, %v940
        %v1088 = vmul.f32 %v941, %v941
        %v1089 = vmul.f32 %v942, %v942
        %v1090 = vmul.f32 %v943, %v943
        %v1091 = vmul.f32 %v944, %v944
        %v1092 = vmul.f32 %v945, %v945
        %v1093 = vmul.f32 %v946, %v946
        %v1094 = vmul.f32 %v947, %v947
        %v1095 = vmul.f32 %v948, %v948
        %v1096 = vmul.f32 %v949, %v949
        %v1097 = vmul.f32 %v950, %v950
        %v1098 = vmul.f32 %v951, %v951
        %v1099 = vmul.f32 %v952, %v952
        %v1100 = vmul.f32 %v953, %v953
        %v1101 = vmul.f32 %v954, %v954
        %v1102 = vmul.f32 %v955, %v955
        %v1103 = vmul.f32 %v956, %v956
        %v1104 = vmul.f32 %v957, %v957
        %v1105 = vmul.f32 %v958, %v958
        %v1106 = vmul.f32 %v959, %v959
        %v1107 = vmul.f32 %v960, %v960
        %v1108 = vmul.f32 %v961, %v961
        %v1109 = vmul.f32 %v962, %v962
        %v1110 = vmul.f32 %v963, %v963
        %v1111 = vmul.f32 %v964, %v964
        %v1112 = vmul.f32 %v965, %v965
        %v1113 = vmul.f32 %v966, %v966
        %v1114 = vmul.f32 %v967, %v967
        %v1115 = vmul.f32 %v968, %v968
        %v1116 = vmul.f32 %v969, %v969
        %v1117 = vmul.f32 %v970, %v970
        %v1118 = vmul.f32 %v971, %v971
        %v1119 = vmul.f32 %v972, %v972
        %v1120 = vmul.f32 %v973, %v973
        %v1121 = vmul.f32 %v974, %v974
        %v1122 = vmul.f32 %v975, %v975
        %v1123 = vmul.f32 %v976, %v976
        %v1124 = vmul.f32 %v977, %v977
        %v1125 = vmul.f32 %v978, %v978
        %v1126 = vmul.f32 %v979, %v979
        %v1127 = vmul.f32 %v980, %v980
        %v1128 = vmul.f32 %v981, %v981
        %v1129 = vmul.f32 %v982, %v982
        %v1130 = vmul.f32 %v983, %v983
        %v1131 = vmul.f32 %v984, %v984
        %v1132 = vmul.f32 %v985, %v985
        %v1133 = vmul.f32 %v986, %v986
        %v1134 = vmul.f32 %v987, %v987
        %v1135 = vmul.f32 %v988, %v988
        %v1136 = vmul.f32 %v989, %v989
        %v1137 = vmul.f32 %v990, %v990
        %v1138 = vmul.f32 %v991, %v991
        %v1139 = vmul.f32 %v992, %v992
        %v1140 = vmul.f32 %v993, %v993
        %v1141 = vmul.f32 %v994, %v994
        %v1142 = vmul.f32 %v995, %v995
        %v1143 = vmul.f32 %v996, %v996
        %v1144 = vmul.f32 %v997, %v997
        %v1145 = vmul.f32 %v998, %v998
        %v1146 = vmul.f32 %v999, %v999
        %v1147 = vmul.f32 %v1000, %v1000
        %v1148 = vmul.f32 %v1001, %v1001
        %v1149 = vmul.f32 %v1002, %v1002
        %v1150 = vmul.f32 %v1003, %v1003
        %v1151 = vmul.f32 %v1004, %v1004
        %v1152 = vmul.f32 %v1005, %v1005
        %v1153 = vmul.f32 %v1006, %v1006
        %v1154 = vmul.f32 %v1007, %v1007
        %v1155 = vmul.f32 %v1008, %v1008
        %v1156 = vmul.f32 %v1009, %v1009
        %v1157 = vmul.f32 %v1010, %v1010
        %v1158 = vmul.f32 %v1011, %v1011
        %v1159 = vmul.f32 %v1012, %v1012
        %v1160 = vmul.f32 %v1013, %v1013
        %v1161 = vmul.f32 %v1014, %v1014
        %v1162 = vmul.f32 %v1015, %v1015
        %v1163 = vmul.f32 %v1016, %v1016
        %v1164 = vmul.f32 %v1017, %v1017
        %v1165 = vmul.f32 %v1018, %v1018
        %v1166 = vmul.f32 %v1019, %v1019
        %v1167 = vmul.f32 %v1020, %v1020
        %v1168 = vmul.f32 %v1021, %v1021
        %v1169 = vmul.f32 %v1022, %v1022
        %v1170 = vmul.f32 %v1023, %v1023
        %v1171 = vmul.f32 %v1024, %v1024
        %v1172 = vmul.f32 %v1025, %v1025
        %v1173 = vmul.f32 %v1026, %v1026
        %v1174 = vmul.f32 %v1027, %v1027
        %v1175 = vmul.f32 %v1028, %v1028
        %v1176 = vmul.f32 %v1029, %v1029
        %v1177 = vmul.f32 %v1030, %v1030
        %v1178 = vmul.f32 %v1031, %v1031
        %v1179 = vmul.f32 %v1032, %v1032
        %v1180 = vmul.f32 %v1033, %v1033
        %v1181 = vmul.f32 %v1034, %v1034
        %1182 = vmatprep.subr.mxu0 0.0
        %1183 = vmatpush1.msra.mxu0 %v1038
        %1184 = vmatprep.subr.mxu0 0.0
        %1185 = vmatpush1.msra.mxu0 %v1039
        %1186 = vmatprep.subr.mxu0 0.0
        %1187 = vmatpush1.msra.mxu0 %v1040
        %1188 = vmatprep.subr.mxu0 0.0
        %1189 = vmatpush1.msra.mxu0 %v1041
        %1190 = vmatprep.subr.mxu0 0.0
        %1191 = vmatpush1.msra.mxu0 %v1042
        %1192 = vmatprep.subr.mxu0 0.0
        %1193 = vmatpush1.msra.mxu0 %v1043
        %1194 = vmatprep.subr.mxu0 0.0
        %1195 = vmatpush1.msra.mxu0 %v1044
        %1196 = vmatprep.subr.mxu0 0.0
        %1197 = vmatpush1.msra.mxu0 %v1045
        %1198 = vmatprep.subr.mxu0 0.0
        %1199 = vmatpush1.msra.mxu0 %v1046
        %1200 = vmatprep.subr.mxu0 0.0
        %1201 = vmatpush1.msra.mxu0 %v1047
        %1202 = vmatprep.subr.mxu0 0.0
        %1203 = vmatpush1.msra.mxu0 %v1048
        %1204 = vmatprep.subr.mxu0 0.0
        %1205 = vmatpush1.msra.mxu0 %v1049
        %1206 = vmatprep.subr.mxu0 0.0
        %1207 = vmatpush1.msra.mxu0 %v1050
        %1208 = vmatprep.subr.mxu0 0.0
        %1209 = vmatpush1.msra.mxu0 %v1051
        %1210 = vmatprep.subr.mxu0 0.0
        %1211 = vmatpush1.msra.mxu0 %v1052
        %1212 = vmatprep.subr.mxu0 0.0
        %1213 = vmatpush1.msra.mxu0 %v1053
        %1214 = vmatprep.subr.mxu0 0.0
        %1215 = vmatpush1.msra.mxu0 %v1054
        %1216 = vmatprep.subr.mxu0 0.0
        %1217 = vmatpush1.msra.mxu0 %v1055
        %1218 = vmatprep.subr.mxu0 0.0
        %1219 = vmatpush1.msra.mxu0 %v1056
        %1220 = vmatprep.subr.mxu0 0.0
        %1221 = vmatpush1.msra.mxu0 %v1057
        %1222 = vmatprep.subr.mxu0 0.0
        %1223 = vmatpush1.msra.mxu0 %v1058
        %1224 = vmatprep.subr.mxu0 0.0
        %1225 = vmatpush1.msra.mxu0 %v1059
        %1226 = vmatprep.subr.mxu0 0.0
        %1227 = vmatpush1.msra.mxu0 %v1060
        %1228 = vmatprep.subr.mxu0 0.0
        %1229 = vmatpush1.msra.mxu0 %v1061
        %1230 = vmatprep.subr.mxu0 0.0
        %1231 = vmatpush1.msra.mxu0 %v1062
        %1232 = vmatprep.subr.mxu0 0.0
        %1233 = vmatpush1.msra.mxu0 %v1063
        %1234 = vmatprep.subr.mxu0 0.0
        %1235 = vmatpush1.msra.mxu0 %v1064
        %1236 = vmatprep.subr.mxu0 0.0
        %1237 = vmatpush1.msra.mxu0 %v1065
        %1238 = vmatprep.subr.mxu0 0.0
        %1239 = vmatpush1.msra.mxu0 %v1066
        %1240 = vmatprep.subr.mxu0 0.0
        %1241 = vmatpush1.msra.mxu0 %v1067
        %1242 = vmatprep.subr.mxu0 0.0
        %1243 = vmatpush1.msra.mxu0 %v1068
        %1244 = vmatprep.subr.mxu0 0.0
        %1245 = vmatpush1.msra.mxu0 %v1069
        %1246 = vmatprep.mubr.f32.mxu0 %v1037
        %1247 = vmatmul.mubr.f32.gmra.mrb[0].mxu0 %v1037
        %v1248 = vpop.f32.mrb[0].mxu0
        %v1249 = vadd.f32 0.0, %v1248
        %v1250 = vpop.f32.mrb[0].mxu0
        %1251 = vdwg.mxu0
        %1252 = vmatprep.subr.mxu0 0.0
        %1253 = vmatpush1.msra.mxu0 %v1070
        %1254 = vmatprep.subr.mxu0 0.0
        %1255 = vmatpush1.msra.mxu0 %v1071
        %1256 = vmatprep.subr.mxu0 0.0
        %1257 = vmatpush1.msra.mxu0 %v1072
        %1258 = vmatprep.subr.mxu0 0.0
        %1259 = vmatpush1.msra.mxu0 %v1073
        %1260 = vmatprep.subr.mxu0 0.0
        %1261 = vmatpush1.msra.mxu0 %v1074
        %1262 = vmatprep.subr.mxu0 0.0
        %1263 = vmatpush1.msra.mxu0 %v1075
        %1264 = vmatprep.subr.mxu0 0.0
        %1265 = vmatpush1.msra.mxu0 %v1076
        %1266 = vmatprep.subr.mxu0 0.0
        %1267 = vmatpush1.msra.mxu0 %v1077
        %1268 = vmatprep.subr.mxu0 0.0
        %1269 = vmatpush1.msra.mxu0 %v1078
        %1270 = vmatprep.subr.mxu0 0.0
        %1271 = vmatpush1.msra.mxu0 %v1079
        %1272 = vmatprep.subr.mxu0 0.0
        %1273 = vmatpush1.msra.mxu0 %v1080
        %1274 = vmatprep.subr.mxu0 0.0
        %1275 = vmatpush1.msra.mxu0 %v1081
        %1276 = vmatprep.subr.mxu0 0.0
        %1277 = vmatpush1.msra.mxu0 %v1082
        %1278 = vmatprep.subr.mxu0 0.0
        %1279 = vmatpush1.msra.mxu0 %v1083
        %1280 = vmatprep.subr.mxu0 0.0
        %1281 = vmatpush1.msra.mxu0 %v1084
        %1282 = vmatprep.subr.mxu0 0.0
        %1283 = vmatpush1.msra.mxu0 %v1085
        %1284 = vmatprep.subr.mxu0 0.0
        %1285 = vmatpush1.msra.mxu0 %v1086
        %1286 = vmatprep.subr.mxu0 0.0
        %1287 = vmatpush1.msra.mxu0 %v1087
        %1288 = vmatprep.subr.mxu0 0.0
        %1289 = vmatpush1.msra.mxu0 %v1088
        %1290 = vmatprep.subr.mxu0 0.0
        %1291 = vmatpush1.msra.mxu0 %v1089
        %1292 = vmatprep.subr.mxu0 0.0
        %1293 = vmatpush1.msra.mxu0 %v1090
        %1294 = vmatprep.subr.mxu0 0.0
        %1295 = vmatpush1.msra.mxu0 %v1091
        %1296 = vmatprep.subr.mxu0 0.0
        %1297 = vmatpush1.msra.mxu0 %v1092
        %1298 = vmatprep.subr.mxu0 0.0
        %1299 = vmatpush1.msra.mxu0 %v1093
        %1300 = vmatprep.subr.mxu0 0.0
        %1301 = vmatpush1.msra.mxu0 %v1094
        %1302 = vmatprep.subr.mxu0 0.0
        %1303 = vmatpush1.msra.mxu0 %v1095
        %1304 = vmatprep.subr.mxu0 0.0
        %1305 = vmatpush1.msra.mxu0 %v1096
        %1306 = vmatprep.subr.mxu0 0.0
        %1307 = vmatpush1.msra.mxu0 %v1097
        %1308 = vmatprep.subr.mxu0 0.0
        %1309 = vmatpush1.msra.mxu0 %v1098
        %1310 = vmatprep.subr.mxu0 0.0
        %1311 = vmatpush1.msra.mxu0 %v1099
        %1312 = vmatprep.subr.mxu0 0.0
        %1313 = vmatpush1.msra.mxu0 %v1100
        %1314 = vmatprep.subr.mxu0 0.0
        %1315 = vmatpush1.msra.mxu0 %v1101
        %1316 = vmatprep.mubr.f32.mxu0 %v1037
        %1317 = vmatmul.mubr.f32.gmra.mrb[0].mxu0 %v1037
        %v1318 = vpop.f32.mrb[0].mxu0
        %v1319 = vadd.f32 %v1249, %v1318
        %v1320 = vpop.f32.mrb[0].mxu0
        %1321 = vdwg.mxu0
        %1322 = vmatprep.subr.mxu0 0.0
        %1323 = vmatpush1.msra.mxu0 %v1102
        %1324 = vmatprep.subr.mxu0 0.0
        %1325 = vmatpush1.msra.mxu0 %v1103
        %1326 = vmatprep.subr.mxu0 0.0
        %1327 = vmatpush1.msra.mxu0 %v1104
        %1328 = vmatprep.subr.mxu0 0.0
        %1329 = vmatpush1.msra.mxu0 %v1105
        %1330 = vmatprep.subr.mxu0 0.0
        %1331 = vmatpush1.msra.mxu0 %v1106
        %1332 = vmatprep.subr.mxu0 0.0
        %1333 = vmatpush1.msra.mxu0 %v1107
        %1334 = vmatprep.subr.mxu0 0.0
        %1335 = vmatpush1.msra.mxu0 %v1108
        %1336 = vmatprep.subr.mxu0 0.0
        %1337 = vmatpush1.msra.mxu0 %v1109
        %1338 = vmatprep.subr.mxu0 0.0
        %1339 = vmatpush1.msra.mxu0 %v1110
        %1340 = vmatprep.subr.mxu0 0.0
        %1341 = vmatpush1.msra.mxu0 %v1111
        %1342 = vmatprep.subr.mxu0 0.0
        %1343 = vmatpush1.msra.mxu0 %v1112
        %1344 = vmatprep.subr.mxu0 0.0
        %1345 = vmatpush1.msra.mxu0 %v1113
        %1346 = vmatprep.subr.mxu0 0.0
        %1347 = vmatpush1.msra.mxu0 %v1114
        %1348 = vmatprep.subr.mxu0 0.0
        %1349 = vmatpush1.msra.mxu0 %v1115
        %1350 = vmatprep.subr.mxu0 0.0
        %1351 = vmatpush1.msra.mxu0 %v1116
        %1352 = vmatprep.subr.mxu0 0.0
        %1353 = vmatpush1.msra.mxu0 %v1117
        %1354 = vmatprep.subr.mxu0 0.0
        %1355 = vmatpush1.msra.mxu0 %v1118
        %1356 = vmatprep.subr.mxu0 0.0
        %1357 = vmatpush1.msra.mxu0 %v1119
        %1358 = vmatprep.subr.mxu0 0.0
        %1359 = vmatpush1.msra.mxu0 %v1120
        %1360 = vmatprep.subr.mxu0 0.0
        %1361 = vmatpush1.msra.mxu0 %v1121
        %1362 = vmatprep.subr.mxu0 0.0
        %1363 = vmatpush1.msra.mxu0 %v1122
        %1364 = vmatprep.subr.mxu0 0.0
        %1365 = vmatpush1.msra.mxu0 %v1123
        %1366 = vmatprep.subr.mxu0 0.0
        %1367 = vmatpush1.msra.mxu0 %v1124
        %1368 = vmatprep.subr.mxu0 0.0
        %1369 = vmatpush1.msra.mxu0 %v1125
        %1370 = vmatprep.subr.mxu0 0.0
        %1371 = vmatpush1.msra.mxu0 %v1126
        %1372 = vmatprep.subr.mxu0 0.0
        %1373 = vmatpush1.msra.mxu0 %v1127
        %1374 = vmatprep.subr.mxu0 0.0
        %1375 = vmatpush1.msra.mxu0 %v1128
        %1376 = vmatprep.subr.mxu0 0.0
        %1377 = vmatpush1.msra.mxu0 %v1129
        %1378 = vmatprep.subr.mxu0 0.0
        %1379 = vmatpush1.msra.mxu0 %v1130
        %1380 = vmatprep.subr.mxu0 0.0
        %1381 = vmatpush1.msra.mxu0 %v1131
        %1382 = vmatprep.subr.mxu0 0.0
        %1383 = vmatpush1.msra.mxu0 %v1132
        %1384 = vmatprep.subr.mxu0 0.0
        %1385 = vmatpush1.msra.mxu0 %v1133
        %1386 = vmatprep.mubr.f32.mxu0 %v1037
        %1387 = vmatmul.mubr.f32.gmra.mrb[0].mxu0 %v1037
        %v1388 = vpop.f32.mrb[0].mxu0
        %v1389 = vadd.f32 %v1319, %v1388
        %v1390 = vpop.f32.mrb[0].mxu0
        %1391 = vdwg.mxu0
        %1392 = vmatprep.subr.mxu0 0.0
        %1393 = vmatpush1.msra.mxu0 %v1134
        %1394 = vmatprep.subr.mxu0 0.0
        %1395 = vmatpush1.msra.mxu0 %v1135
        %1396 = vmatprep.subr.mxu0 0.0
        %1397 = vmatpush1.msra.mxu0 %v1136
        %1398 = vmatprep.subr.mxu0 0.0
        %1399 = vmatpush1.msra.mxu0 %v1137
        %1400 = vmatprep.subr.mxu0 0.0
        %1401 = vmatpush1.msra.mxu0 %v1138
        %1402 = vmatprep.subr.mxu0 0.0
        %1403 = vmatpush1.msra.mxu0 %v1139
        %1404 = vmatprep.subr.mxu0 0.0
        %1405 = vmatpush1.msra.mxu0 %v1140
        %1406 = vmatprep.subr.mxu0 0.0
        %1407 = vmatpush1.msra.mxu0 %v1141
        %1408 = vmatprep.subr.mxu0 0.0
        %1409 = vmatpush1.msra.mxu0 %v1142
        %1410 = vmatprep.subr.mxu0 0.0
        %1411 = vmatpush1.msra.mxu0 %v1143
        %1412 = vmatprep.subr.mxu0 0.0
        %1413 = vmatpush1.msra.mxu0 %v1144
        %1414 = vmatprep.subr.mxu0 0.0
        %1415 = vmatpush1.msra.mxu0 %v1145
        %1416 = vmatprep.subr.mxu0 0.0
        %1417 = vmatpush1.msra.mxu0 %v1146
        %1418 = vmatprep.subr.mxu0 0.0
        %1419 = vmatpush1.msra.mxu0 %v1147
        %1420 = vmatprep.subr.mxu0 0.0
        %1421 = vmatpush1.msra.mxu0 %v1148
        %1422 = vmatprep.subr.mxu0 0.0
        %1423 = vmatpush1.msra.mxu0 %v1149
        %1424 = vmatprep.subr.mxu0 0.0
        %1425 = vmatpush1.msra.mxu0 %v1150
        %1426 = vmatprep.subr.mxu0 0.0
        %1427 = vmatpush1.msra.mxu0 %v1151
        %1428 = vmatprep.subr.mxu0 0.0
        %1429 = vmatpush1.msra.mxu0 %v1152
        %1430 = vmatprep.subr.mxu0 0.0
        %1431 = vmatpush1.msra.mxu0 %v1153
        %1432 = vmatprep.subr.mxu0 0.0
        %1433 = vmatpush1.msra.mxu0 %v1154
        %1434 = vmatprep.subr.mxu0 0.0
        %1435 = vmatpush1.msra.mxu0 %v1155
        %1436 = vmatprep.subr.mxu0 0.0
        %1437 = vmatpush1.msra.mxu0 %v1156
        %1438 = vmatprep.subr.mxu0 0.0
        %1439 = vmatpush1.msra.mxu0 %v1157
        %1440 = vmatprep.subr.mxu0 0.0
        %1441 = vmatpush1.msra.mxu0 %v1158
        %1442 = vmatprep.subr.mxu0 0.0
        %1443 = vmatpush1.msra.mxu0 %v1159
        %1444 = vmatprep.subr.mxu0 0.0
        %1445 = vmatpush1.msra.mxu0 %v1160
        %1446 = vmatprep.subr.mxu0 0.0
        %1447 = vmatpush1.msra.mxu0 %v1161
        %1448 = vmatprep.subr.mxu0 0.0
        %1449 = vmatpush1.msra.mxu0 %v1162
        %1450 = vmatprep.subr.mxu0 0.0
        %1451 = vmatpush1.msra.mxu0 %v1163
        %1452 = vmatprep.subr.mxu0 0.0
        %1453 = vmatpush1.msra.mxu0 %v1164
        %1454 = vmatprep.subr.mxu0 0.0
        %1455 = vmatpush1.msra.mxu0 %v1165
        %1456 = vmatprep.mubr.f32.mxu0 %v1037
        %1457 = vmatmul.mubr.f32.gmra.mrb[0].mxu0 %v1037
        %v1458 = vpop.f32.mrb[0].mxu0
        %v1459 = vadd.f32 %v1389, %v1458
        %v1460 = vpop.f32.mrb[0].mxu0
        %1461 = vdwg.mxu0
        %1462 = vmatprep.subr.mxu0 0.0
        %1463 = vmatpush1.msra.mxu0 %v1166
        %1464 = vmatprep.subr.mxu0 0.0
        %1465 = vmatpush1.msra.mxu0 %v1167
        %1466 = vmatprep.subr.mxu0 0.0
        %1467 = vmatpush1.msra.mxu0 %v1168
        %1468 = vmatprep.subr.mxu0 0.0
        %1469 = vmatpush1.msra.mxu0 %v1169
        %1470 = vmatprep.subr.mxu0 0.0
        %1471 = vmatpush1.msra.mxu0 %v1170
        %1472 = vmatprep.subr.mxu0 0.0
        %1473 = vmatpush1.msra.mxu0 %v1171
        %1474 = vmatprep.subr.mxu0 0.0
        %1475 = vmatpush1.msra.mxu0 %v1172
        %1476 = vmatprep.subr.mxu0 0.0
        %1477 = vmatpush1.msra.mxu0 %v1173
        %1478 = vmatprep.subr.mxu0 0.0
        %1479 = vmatpush1.msra.mxu0 %v1174
        %1480 = vmatprep.subr.mxu0 0.0
        %1481 = vmatpush1.msra.mxu0 %v1175
        %1482 = vmatprep.subr.mxu0 0.0
        %1483 = vmatpush1.msra.mxu0 %v1176
        %1484 = vmatprep.subr.mxu0 0.0
        %1485 = vmatpush1.msra.mxu0 %v1177
        %1486 = vmatprep.subr.mxu0 0.0
        %1487 = vmatpush1.msra.mxu0 %v1178
        %1488 = vmatprep.subr.mxu0 0.0
        %1489 = vmatpush1.msra.mxu0 %v1179
        %1490 = vmatprep.subr.mxu0 0.0
        %1491 = vmatpush1.msra.mxu0 %v1180
        %1492 = vmatprep.subr.mxu0 0.0
        %1493 = vmatpush1.msra.mxu0 %v1181
        %1494 = vmatprep.subr.mxu0 0.0
        %1495 = vmatpush1.msra.mxu0 0.0
        %1496 = vmatprep.subr.mxu0 0.0
        %1497 = vmatpush1.msra.mxu0 0.0
        %1498 = vmatprep.subr.mxu0 0.0
        %1499 = vmatpush1.msra.mxu0 0.0
        %1500 = vmatprep.subr.mxu0 0.0
        %1501 = vmatpush1.msra.mxu0 0.0
        %1502 = vmatprep.subr.mxu0 0.0
        %1503 = vmatpush1.msra.mxu0 0.0
        %1504 = vmatprep.subr.mxu0 0.0
        %1505 = vmatpush1.msra.mxu0 0.0
        %1506 = vmatprep.subr.mxu0 0.0
        %1507 = vmatpush1.msra.mxu0 0.0
        %1508 = vmatprep.subr.mxu0 0.0
        %1509 = vmatpush1.msra.mxu0 0.0
        %1510 = vmatprep.subr.mxu0 0.0
        %1511 = vmatpush1.msra.mxu0 0.0
        %1512 = vmatprep.subr.mxu0 0.0
        %1513 = vmatpush1.msra.mxu0 0.0
        %1514 = vmatprep.subr.mxu0 0.0
        %1515 = vmatpush1.msra.mxu0 0.0
        %1516 = vmatprep.subr.mxu0 0.0
        %1517 = vmatpush1.msra.mxu0 0.0
        %1518 = vmatprep.subr.mxu0 0.0
        %1519 = vmatpush1.msra.mxu0 0.0
        %1520 = vmatprep.subr.mxu0 0.0
        %1521 = vmatpush1.msra.mxu0 0.0
        %1522 = vmatprep.subr.mxu0 0.0
        %1523 = vmatpush1.msra.mxu0 0.0
        %1524 = vmatprep.subr.mxu0 0.0
        %1525 = vmatpush1.msra.mxu0 0.0
        %1526 = vmatprep.mubr.f32.mxu0 0.0
        %1527 = vmatmul.mubr.f32.gmra.mrb[0].mxu0 %v1037
        %v1528 = vpop.f32.mrb[0].mxu0
        %v1529 = vadd.f32 %v1459, %v1528
        %v1530 = vpop.f32.mrb[0].mxu0
        %1531 = vdwg.mxu0
        %v1532 = vmax.f32 %v1529, 1e-08
        %v1533 = vrsqrt.pop %v1532
        %v1534 = vld [vmem:[%s299] sm:$0xff]
        %v1535 = vld [vmem:[%s299 + $0x8] sm:$0xff]
        %v1536 = vld [vmem:[%s299 + $0x10] sm:$0xff]
        %v1537 = vld [vmem:[%s299 + $0x18] sm:$0xff]
        %v1538 = vld [vmem:[%s299 + $0x20] sm:$0xff]
        %v1539 = vld [vmem:[%s299 + $0x28] sm:$0xff]
        %v1540 = vld [vmem:[%s299 + $0x30] sm:$0xff]
        %v1541 = vld [vmem:[%s299 + $0x38] sm:$0xff]
        %v1542 = vld [vmem:[%s299 + $0x40] sm:$0x1]
        %v1543 = vlaneseq
        %v1544 = vshrl.u32 %v1543, 7
        %v1545 = vsub.s32 0, %v1544
        %v1546 = vrot.slane %v1534, %v1545
        %v1547 = vadd.f32 %v1534, %v1546
        %v1548 = vadd.f32 %v1535, %v1546
        %v1549 = vadd.f32 %v1536, %v1546
        %v1550 = vadd.f32 %v1537, %v1546
        %v1551 = vadd.f32 %v1538, %v1546
        %v1552 = vadd.f32 %v1539, %v1546
        %v1553 = vadd.f32 %v1540, %v1546
        %v1554 = vadd.f32 %v1541, %v1546
        %v1555 = vadd.f32 %v1542, %v1546
        %v1556 = vld [vmem:[%s4] sm:$0xff]
        %v1557 = vld [vmem:[%s4 + $0x8] sm:$0xff]
        %v1558 = vld [vmem:[%s4 + $0x10] sm:$0xff]
        %v1559 = vld [vmem:[%s4 + $0x18] sm:$0xff]
        %v1560 = vld [vmem:[%s4 + $0x20] sm:$0xff]
        %v1561 = vld [vmem:[%s4 + $0x28] sm:$0xff]
        %v1562 = vld [vmem:[%s4 + $0x30] sm:$0xff]
        %v1563 = vld [vmem:[%s4 + $0x38] sm:$0xff]
        %v1564 = vld [vmem:[%s4 + $0x40] sm:$0xff]
        %v1565 = vld [vmem:[%s4 + $0x48] sm:$0xff]
        %v1566 = vld [vmem:[%s4 + $0x50] sm:$0xff]
        %v1567 = vld [vmem:[%s4 + $0x58] sm:$0xff]
        %v1568 = vld [vmem:[%s4 + $0x60] sm:$0xff]
        %v1569 = vld [vmem:[%s4 + $0x68] sm:$0xff]
        %v1570 = vld [vmem:[%s4 + $0x70] sm:$0xff]
        %v1571 = vld [vmem:[%s4 + $0x78] sm:$0xff]
        %vm1581 = vcmask 1046528
        %v1582 = vrot.slane %v1547, 1
        %v1583 = vrot.slane %v1548, 1
        %v1584 = vsel %vm1581, %v1582, %v1583
        %v1585 = vrot.slane %v1549, 1
        %v1586 = vsel %vm1581, %v1583, %v1585
        %v1587 = vrot.slane %v1550, 1
        %v1588 = vsel %vm1581, %v1585, %v1587
        %v1589 = vrot.slane %v1551, 1
        %v1590 = vsel %vm1581, %v1587, %v1589
        %v1591 = vrot.slane %v1552, 1
        %v1592 = vsel %vm1581, %v1589, %v1591
        %v1593 = vrot.slane %v1553, 1
        %v1594 = vsel %vm1581, %v1591, %v1593
        %v1595 = vrot.slane %v1554, 1
        %v1596 = vsel %vm1581, %v1593, %v1595
        %v1597 = vrot.slane %v1555, 1
        %v1598 = vsel %vm1581, %v1595, %v1597
        %1607 = vmatprep.subr.mxu0 0.0
        %1608 = vmatpush1.msra.mxu0 %v1556
        %1609 = vmatprep.subr.mxu0 0.0
        %1610 = vmatpush1.msra.mxu0 %v1557
        %1611 = vmatprep.subr.mxu0 0.0
        %1612 = vmatpush1.msra.mxu0 %v1558
        %1613 = vmatprep.subr.mxu0 0.0
        %1614 = vmatpush1.msra.mxu0 %v1559
        %1615 = vmatprep.subr.mxu0 0.0
        %1616 = vmatpush1.msra.mxu0 %v1560
        %1617 = vmatprep.subr.mxu0 0.0
        %1618 = vmatpush1.msra.mxu0 %v1561
        %1619 = vmatprep.subr.mxu0 0.0
        %1620 = vmatpush1.msra.mxu0 %v1562
        %1621 = vmatprep.subr.mxu0 0.0
        %1622 = vmatpush1.msra.mxu0 %v1563
        %1623 = vmatprep.subr.mxu0 0.0
        %1624 = vmatpush1.msra.mxu0 %v1564
        %1625 = vmatprep.subr.mxu0 0.0
        %1626 = vmatpush1.msra.mxu0 %v1565
        %1627 = vmatprep.subr.mxu0 0.0
        %1628 = vmatpush1.msra.mxu0 %v1566
        %1629 = vmatprep.subr.mxu0 0.0
        %1630 = vmatpush1.msra.mxu0 %v1567
        %1631 = vmatprep.subr.mxu0 0.0
        %1632 = vmatpush1.msra.mxu0 %v1568
        %1633 = vmatprep.subr.mxu0 0.0
        %1634 = vmatpush1.msra.mxu0 %v1569
        %1635 = vmatprep.subr.mxu0 0.0
        %1636 = vmatpush1.msra.mxu0 %v1570
        %1637 = vmatprep.subr.mxu0 0.0
        %1638 = vmatpush1.msra.mxu0 %v1571
        %1639 = vmatprep.subr.mxu0 0.0
        %1640 = vmatpush1.msra.mxu0 0.0
        %1641 = vmatprep.subr.mxu0 0.0
        %1642 = vmatpush1.msra.mxu0 0.0
        %1643 = vmatprep.subr.mxu0 0.0
        %1644 = vmatpush1.msra.mxu0 0.0
        %1645 = vmatprep.subr.mxu0 0.0
        %1646 = vmatpush1.msra.mxu0 0.0
        %1647 = vmatprep.subr.mxu0 0.0
        %1648 = vmatpush1.msra.mxu0 0.0
        %1649 = vmatprep.subr.mxu0 0.0
        %1650 = vmatpush1.msra.mxu0 0.0
        %1651 = vmatprep.subr.mxu0 0.0
        %1652 = vmatpush1.msra.mxu0 0.0
        %1653 = vmatprep.subr.mxu0 0.0
        %1654 = vmatpush1.msra.mxu0 0.0
        %1655 = vmatprep.subr.mxu0 0.0
        %1656 = vmatpush1.msra.mxu0 0.0
        %1657 = vmatprep.subr.mxu0 0.0
        %1658 = vmatpush1.msra.mxu0 0.0
        %1659 = vmatprep.subr.mxu0 0.0
        %1660 = vmatpush1.msra.mxu0 0.0
        %1661 = vmatprep.subr.mxu0 0.0
        %1662 = vmatpush1.msra.mxu0 0.0
        %1663 = vmatprep.subr.mxu0 0.0
        %1664 = vmatpush1.msra.mxu0 0.0
        %1665 = vmatprep.subr.mxu0 0.0
        %1666 = vmatpush1.msra.mxu0 0.0
        %1667 = vmatprep.subr.mxu0 0.0
        %1668 = vmatpush1.msra.mxu0 0.0
        %1669 = vmatprep.subr.mxu0 0.0
        %1670 = vmatpush1.msra.mxu0 0.0
        %1671 = vmatprep.mubr.f32.mxu0 0.0
        %1672 = vmatmul.mubr.f32.gmra.mrb[0].mxu0 %v1584
        %v1673 = vpop.f32.mrb[0].mxu0
        %v1674 = vadd.f32 0.0, %v1673
        %v1675 = vpop.f32.mrb[0].mxu0
        %1676 = vmatprep.mubr.f32.mxu0 0.0
        %1677 = vmatmul.mubr.f32.gmra.mrb[0].mxu0 %v1586
        %v1678 = vpop.f32.mrb[0].mxu0
        %v1679 = vadd.f32 0.0, %v1678
        %v1680 = vpop.f32.mrb[0].mxu0
        %1681 = vmatprep.mubr.f32.mxu0 0.0
        %1682 = vmatmul.mubr.f32.gmra.mrb[0].mxu0 %v1588
        %v1683 = vpop.f32.mrb[0].mxu0
        %v1684 = vadd.f32 0.0, %v1683
        %v1685 = vpop.f32.mrb[0].mxu0
        %1686 = vmatprep.mubr.f32.mxu0 0.0
        %1687 = vmatmul.mubr.f32.gmra.mrb[0].mxu0 %v1590
        %v1688 = vpop.f32.mrb[0].mxu0
        %v1689 = vadd.f32 0.0, %v1688
        %v1690 = vpop.f32.mrb[0].mxu0
        %1691 = vmatprep.mubr.f32.mxu0 0.0
        %1692 = vmatmul.mubr.f32.gmra.mrb[0].mxu0 %v1592
        %v1693 = vpop.f32.mrb[0].mxu0
        %v1694 = vadd.f32 0.0, %v1693
        %v1695 = vpop.f32.mrb[0].mxu0
        %1696 = vmatprep.mubr.f32.mxu0 0.0
        %1697 = vmatmul.mubr.f32.gmra.mrb[0].mxu0 %v1594
        %v1698 = vpop.f32.mrb[0].mxu0
        %v1699 = vadd.f32 0.0, %v1698
        %v1700 = vpop.f32.mrb[0].mxu0
        %1701 = vmatprep.mubr.f32.mxu0 0.0
        %1702 = vmatmul.mubr.f32.gmra.mrb[0].mxu0 %v1596
        %v1703 = vpop.f32.mrb[0].mxu0
        %v1704 = vadd.f32 0.0, %v1703
        %v1705 = vpop.f32.mrb[0].mxu0
        %1706 = vmatprep.mubr.f32.mxu0 0.0
        %1707 = vmatmul.mubr.f32.gmra.mrb[0].mxu0 %v1598
        %v1708 = vpop.f32.mrb[0].mxu0
        %v1709 = vadd.f32 0.0, %v1708
        %v1710 = vpop.f32.mrb[0].mxu0
        %1711 = vdwg.mxu0
        %v1713 = vlaneseq
        %v1714 = vshrl.u32 %v1713, 7
        %v1715 = vsub.s32 0, %v1714
        %v1716 = vrot.slane %v1036, %v1715
        %v1718 = vmul.f32 %v1674, %v1716
        %v1719 = vmul.f32 %v1679, %v1716
        %v1720 = vmul.f32 %v1684, %v1716
        %v1721 = vmul.f32 %v1689, %v1716
        %v1722 = vmul.f32 %v1694, %v1716
        %v1723 = vmul.f32 %v1699, %v1716
        %v1724 = vmul.f32 %v1704, %v1716
        %v1725 = vmul.f32 %v1709, %v1716
        %v1735 = vrot.slane 0.0, 7
        %v1736 = vrot.slane %v1718, 7
        %v1737 = vrot.slane %v1719, 7
        %v1738 = vrot.slane %v1720, 7
        %v1739 = vrot.slane %v1721, 7
        %v1740 = vrot.slane %v1722, 7
        %v1741 = vrot.slane %v1723, 7
        %v1742 = vrot.slane %v1724, 7
        %v1743 = vrot.slane %v1725, 7
        %vm1753 = vcmask 1040384
        %v1754 = vsel %vm1753, 0.0, %v1735
        %v1755 = vsel %vm1753, 0.0, %v1736
        %v1756 = vsel %vm1753, 0.0, %v1737
        %v1757 = vsel %vm1753, 0.0, %v1738
        %v1758 = vsel %vm1753, 0.0, %v1739
        %v1759 = vsel %vm1753, 0.0, %v1740
        %v1760 = vsel %vm1753, 0.0, %v1741
        %v1761 = vsel %vm1753, 0.0, %v1742
        %v1762 = vsel %vm1753, 0.0, %v1743
        %v1763 = vsel %vm1753, %v1735, 0.0
        %v1764 = vsel %vm1753, %v1736, 0.0
        %v1765 = vsel %vm1753, %v1737, 0.0
        %v1766 = vsel %vm1753, %v1738, 0.0
        %v1767 = vsel %vm1753, %v1739, 0.0
        %v1768 = vsel %vm1753, %v1740, 0.0
        %v1769 = vsel %vm1753, %v1741, 0.0
        %v1770 = vsel %vm1753, %v1742, 0.0
        %v1771 = vsel %vm1753, %v1743, 0.0
        %v1788 = vrot.slane %v1754, 1
        %v1789 = vrot.slane %v1763, 1
        %v1790 = vsel %vm1581, %v1788, %v1789
        %v1791 = vrot.slane %v1755, 1
        %v1792 = vrot.slane %v1764, 1
        %v1793 = vsel %vm1581, %v1791, %v1792
        %v1794 = vrot.slane %v1756, 1
        %v1795 = vrot.slane %v1765, 1
        %v1796 = vsel %vm1581, %v1794, %v1795
        %v1797 = vrot.slane %v1757, 1
        %v1798 = vrot.slane %v1766, 1
        %v1799 = vsel %vm1581, %v1797, %v1798
        %v1800 = vrot.slane %v1758, 1
        %v1801 = vrot.slane %v1767, 1
        %v1802 = vsel %vm1581, %v1800, %v1801
        %v1803 = vrot.slane %v1759, 1
        %v1804 = vrot.slane %v1768, 1
        %v1805 = vsel %vm1581, %v1803, %v1804
        %v1806 = vrot.slane %v1760, 1
        %v1807 = vrot.slane %v1769, 1
        %v1808 = vsel %vm1581, %v1806, %v1807
        %v1809 = vrot.slane %v1761, 1
        %v1810 = vrot.slane %v1770, 1
        %v1811 = vsel %vm1581, %v1809, %v1810
        %vm1820 = vcmask 1045504
        %v1821 = vrot.slane %v1754, 2
        %v1822 = vrot.slane %v1763, 2
        %v1823 = vsel %vm1820, %v1821, %v1822
        %v1824 = vrot.slane %v1755, 2
        %v1825 = vrot.slane %v1764, 2
        %v1826 = vsel %vm1820, %v1824, %v1825
        %v1827 = vrot.slane %v1756, 2
        %v1828 = vrot.slane %v1765, 2
        %v1829 = vsel %vm1820, %v1827, %v1828
        %v1830 = vrot.slane %v1757, 2
        %v1831 = vrot.slane %v1766, 2
        %v1832 = vsel %vm1820, %v1830, %v1831
        %v1833 = vrot.slane %v1758, 2
        %v1834 = vrot.slane %v1767, 2
        %v1835 = vsel %vm1820, %v1833, %v1834
        %v1836 = vrot.slane %v1759, 2
        %v1837 = vrot.slane %v1768, 2
        %v1838 = vsel %vm1820, %v1836, %v1837
        %v1839 = vrot.slane %v1760, 2
        %v1840 = vrot.slane %v1769, 2
        %v1841 = vsel %vm1820, %v1839, %v1840
        %v1842 = vrot.slane %v1761, 2
        %v1843 = vrot.slane %v1770, 2
        %v1844 = vsel %vm1820, %v1842, %v1843
        %v1855 = vrot.slane %v1762, 1
        %v1856 = vrot.slane %v1771, 1
        %v1857 = vsel %vm1581, %v1855, %v1856
        %v1859 = vrot.slane %v1762, 2
        %v1860 = vrot.slane %v1771, 2
        %v1861 = vsel %vm1820, %v1859, %v1860
        %1863 = vmatprep.subr.mxu0 0.0
        %1864 = vmatpush1.msra.mxu0 %v891
        %1865 = vmatprep.subr.mxu0 0.0
        %1866 = vmatpush1.msra.mxu0 %v892
        %1867 = vmatprep.subr.mxu0 0.0
        %1868 = vmatpush1.msra.mxu0 %v893
        %1869 = vmatprep.subr.mxu0 0.0
        %1870 = vmatpush1.msra.mxu0 %v894
        %1871 = vmatprep.subr.mxu0 0.0
        %1872 = vmatpush1.msra.mxu0 %v895
        %1873 = vmatprep.subr.mxu0 0.0
        %1874 = vmatpush1.msra.mxu0 %v896
        %1875 = vmatprep.subr.mxu0 0.0
        %1876 = vmatpush1.msra.mxu0 %v897
        %1877 = vmatprep.subr.mxu0 0.0
        %1878 = vmatpush1.msra.mxu0 %v898
        %1879 = vmatprep.subr.mxu0 0.0
        %1880 = vmatpush1.msra.mxu0 %v899
        %1881 = vmatprep.subr.mxu0 0.0
        %1882 = vmatpush1.msra.mxu0 %v900
        %1883 = vmatprep.subr.mxu0 0.0
        %1884 = vmatpush1.msra.mxu0 %v901
        %1885 = vmatprep.subr.mxu0 0.0
        %1886 = vmatpush1.msra.mxu0 %v902
        %1887 = vmatprep.subr.mxu0 0.0
        %1888 = vmatpush1.msra.mxu0 %v903
        %1889 = vmatprep.subr.mxu0 0.0
        %1890 = vmatpush1.msra.mxu0 %v904
        %1891 = vmatprep.subr.mxu0 0.0
        %1892 = vmatpush1.msra.mxu0 %v905
        %1893 = vmatprep.subr.mxu0 0.0
        %1894 = vmatpush1.msra.mxu0 %v906
        %1895 = vmatprep.subr.mxu0 0.0
        %1896 = vmatpush1.msra.mxu0 %v907
        %1897 = vmatprep.subr.mxu0 0.0
        %1898 = vmatpush1.msra.mxu0 %v908
        %1899 = vmatprep.subr.mxu0 0.0
        %1900 = vmatpush1.msra.mxu0 %v909
        %1901 = vmatprep.subr.mxu0 0.0
        %1902 = vmatpush1.msra.mxu0 %v910
        %1903 = vmatprep.subr.mxu0 0.0
        %1904 = vmatpush1.msra.mxu0 %v911
        %1905 = vmatprep.subr.mxu0 0.0
        %1906 = vmatpush1.msra.mxu0 %v912
        %1907 = vmatprep.subr.mxu0 0.0
        %1908 = vmatpush1.msra.mxu0 %v913
        %1909 = vmatprep.subr.mxu0 0.0
        %1910 = vmatpush1.msra.mxu0 %v914
        %1911 = vmatprep.subr.mxu0 0.0
        %1912 = vmatpush1.msra.mxu0 %v915
        %1913 = vmatprep.subr.mxu0 0.0
        %1914 = vmatpush1.msra.mxu0 %v916
        %1915 = vmatprep.subr.mxu0 0.0
        %1916 = vmatpush1.msra.mxu0 %v917
        %1917 = vmatprep.subr.mxu0 0.0
        %1918 = vmatpush1.msra.mxu0 %v918
        %1919 = vmatprep.subr.mxu0 0.0
        %1920 = vmatpush1.msra.mxu0 %v919
        %1921 = vmatprep.subr.mxu0 0.0
        %1922 = vmatpush1.msra.mxu0 %v920
        %1923 = vmatprep.subr.mxu0 0.0
        %1924 = vmatpush1.msra.mxu0 %v921
        %1925 = vmatprep.subr.mxu0 0.0
        %1926 = vmatpush1.msra.mxu0 %v922
        %1927 = vmatprep.mubr.f32.mxu0 %v1790
        %1928 = vmatmul.mubr.f32.gmra.mrb[0].mxu0 %v1754
        %v1929 = vpop.f32.mrb[0].mxu0
        %v1930 = vadd.f32 0.0, %v1929
        %v1931 = vpop.f32.mrb[0].mxu0
        %1932 = vmatprep.mubr.f32.mxu0 %v1793
        %1933 = vmatmul.mubr.f32.gmra.mrb[0].mxu0 %v1755
        %v1934 = vpop.f32.mrb[0].mxu0
        %v1935 = vadd.f32 0.0, %v1934
        %v1936 = vpop.f32.mrb[0].mxu0
        %1937 = vmatprep.mubr.f32.mxu0 %v1796
        %1938 = vmatmul.mubr.f32.gmra.mrb[0].mxu0 %v1756
        %v1939 = vpop.f32.mrb[0].mxu0
        %v1940 = vadd.f32 0.0, %v1939
        %v1941 = vpop.f32.mrb[0].mxu0
        %1942 = vmatprep.mubr.f32.mxu0 %v1799
        %1943 = vmatmul.mubr.f32.gmra.mrb[0].mxu0 %v1757
        %v1944 = vpop.f32.mrb[0].mxu0
        %v1945 = vadd.f32 0.0, %v1944
        %v1946 = vpop.f32.mrb[0].mxu0
        %1947 = vmatprep.mubr.f32.mxu0 %v1802
        %1948 = vmatmul.mubr.f32.gmra.mrb[0].mxu0 %v1758
        %v1949 = vpop.f32.mrb[0].mxu0
        %v1950 = vadd.f32 0.0, %v1949
        %v1951 = vpop.f32.mrb[0].mxu0
        %1952 = vmatprep.mubr.f32.mxu0 %v1805
        %1953 = vmatmul.mubr.f32.gmra.mrb[0].mxu0 %v1759
        %v1954 = vpop.f32.mrb[0].mxu0
        %v1955 = vadd.f32 0.0, %v1954
        %v1956 = vpop.f32.mrb[0].mxu0
        %1957 = vmatprep.mubr.f32.mxu0 %v1808
        %1958 = vmatmul.mubr.f32.gmra.mrb[0].mxu0 %v1760
        %v1959 = vpop.f32.mrb[0].mxu0
        %v1960 = vadd.f32 0.0, %v1959
        %v1961 = vpop.f32.mrb[0].mxu0
        %1962 = vmatprep.mubr.f32.mxu0 %v1811
        %1963 = vmatmul.mubr.f32.gmra.mrb[0].mxu0 %v1761
        %v1964 = vpop.f32.mrb[0].mxu0
        %v1965 = vadd.f32 0.0, %v1964
        %v1966 = vpop.f32.mrb[0].mxu0
        %1967 = vdwg.mxu0
        %1968 = vmatprep.subr.mxu0 0.0
        %1969 = vmatpush1.msra.mxu0 %v923
        %1970 = vmatprep.subr.mxu0 0.0
        %1971 = vmatpush1.msra.mxu0 %v924
        %1972 = vmatprep.subr.mxu0 0.0
        %1973 = vmatpush1.msra.mxu0 %v925
        %1974 = vmatprep.subr.mxu0 0.0
        %1975 = vmatpush1.msra.mxu0 %v926
        %1976 = vmatprep.subr.mxu0 0.0
        %1977 = vmatpush1.msra.mxu0 %v927
        %1978 = vmatprep.subr.mxu0 0.0
        %1979 = vmatpush1.msra.mxu0 %v928
        %1980 = vmatprep.subr.mxu0 0.0
        %1981 = vmatpush1.msra.mxu0 %v929
        %1982 = vmatprep.subr.mxu0 0.0
        %1983 = vmatpush1.msra.mxu0 %v930
        %1984 = vmatprep.subr.mxu0 0.0
        %1985 = vmatpush1.msra.mxu0 %v931
        %1986 = vmatprep.subr.mxu0 0.0
        %1987 = vmatpush1.msra.mxu0 %v932
        %1988 = vmatprep.subr.mxu0 0.0
        %1989 = vmatpush1.msra.mxu0 %v933
        %1990 = vmatprep.subr.mxu0 0.0
        %1991 = vmatpush1.msra.mxu0 %v934
        %1992 = vmatprep.subr.mxu0 0.0
        %1993 = vmatpush1.msra.mxu0 %v935
        %1994 = vmatprep.subr.mxu0 0.0
        %1995 = vmatpush1.msra.mxu0 %v936
        %1996 = vmatprep.subr.mxu0 0.0
        %1997 = vmatpush1.msra.mxu0 %v937
        %1998 = vmatprep.subr.mxu0 0.0
        %1999 = vmatpush1.msra.mxu0 %v938
        %2000 = vmatprep.subr.mxu0 0.0
        %2001 = vmatpush1.msra.mxu0 %v939
        %2002 = vmatprep.subr.mxu0 0.0
        %2003 = vmatpush1.msra.mxu0 %v940
        %2004 = vmatprep.subr.mxu0 0.0
        %2005 = vmatpush1.msra.mxu0 %v941
        %2006 = vmatprep.subr.mxu0 0.0
        %2007 = vmatpush1.msra.mxu0 %v942
        %2008 = vmatprep.subr.mxu0 0.0
        %2009 = vmatpush1.msra.mxu0 %v943
        %2010 = vmatprep.subr.mxu0 0.0
        %2011 = vmatpush1.msra.mxu0 %v944
        %2012 = vmatprep.subr.mxu0 0.0
        %2013 = vmatpush1.msra.mxu0 %v945
        %2014 = vmatprep.subr.mxu0 0.0
        %2015 = vmatpush1.msra.mxu0 %v946
        %2016 = vmatprep.subr.mxu0 0.0
        %2017 = vmatpush1.msra.mxu0 %v947
        %2018 = vmatprep.subr.mxu0 0.0
        %2019 = vmatpush1.msra.mxu0 %v948
        %2020 = vmatprep.subr.mxu0 0.0
        %2021 = vmatpush1.msra.mxu0 %v949
        %2022 = vmatprep.subr.mxu0 0.0
        %2023 = vmatpush1.msra.mxu0 %v950
        %2024 = vmatprep.subr.mxu0 0.0
        %2025 = vmatpush1.msra.mxu0 %v951
        %2026 = vmatprep.subr.mxu0 0.0
        %2027 = vmatpush1.msra.mxu0 %v952
        %2028 = vmatprep.subr.mxu0 0.0
        %2029 = vmatpush1.msra.mxu0 %v953
        %2030 = vmatprep.subr.mxu0 0.0
        %2031 = vmatpush1.msra.mxu0 %v954
        %2032 = vmatprep.mubr.f32.mxu0 %v1755
        %2033 = vmatmul.mubr.f32.gmra.mrb[0].mxu0 %v1823
        %v2034 = vpop.f32.mrb[0].mxu0
        %v2035 = vadd.f32 %v1930, %v2034
        %v2036 = vpop.f32.mrb[0].mxu0
        %2037 = vmatprep.mubr.f32.mxu0 %v1756
        %2038 = vmatmul.mubr.f32.gmra.mrb[0].mxu0 %v1826
        %v2039 = vpop.f32.mrb[0].mxu0
        %v2040 = vadd.f32 %v1935, %v2039
        %v2041 = vpop.f32.mrb[0].mxu0
        %2042 = vmatprep.mubr.f32.mxu0 %v1757
        %2043 = vmatmul.mubr.f32.gmra.mrb[0].mxu0 %v1829
        %v2044 = vpop.f32.mrb[0].mxu0
        %v2045 = vadd.f32 %v1940, %v2044
        %v2046 = vpop.f32.mrb[0].mxu0
        %2047 = vmatprep.mubr.f32.mxu0 %v1758
        %2048 = vmatmul.mubr.f32.gmra.mrb[0].mxu0 %v1832
        %v2049 = vpop.f32.mrb[0].mxu0
        %v2050 = vadd.f32 %v1945, %v2049
        %v2051 = vpop.f32.mrb[0].mxu0
        %2052 = vmatprep.mubr.f32.mxu0 %v1759
        %2053 = vmatmul.mubr.f32.gmra.mrb[0].mxu0 %v1835
        %v2054 = vpop.f32.mrb[0].mxu0
        %v2055 = vadd.f32 %v1950, %v2054
        %v2056 = vpop.f32.mrb[0].mxu0
        %2057 = vmatprep.mubr.f32.mxu0 %v1760
        %2058 = vmatmul.mubr.f32.gmra.mrb[0].mxu0 %v1838
        %v2059 = vpop.f32.mrb[0].mxu0
        %v2060 = vadd.f32 %v1955, %v2059
        %v2061 = vpop.f32.mrb[0].mxu0
        %2062 = vmatprep.mubr.f32.mxu0 %v1761
        %2063 = vmatmul.mubr.f32.gmra.mrb[0].mxu0 %v1841
        %v2064 = vpop.f32.mrb[0].mxu0
        %v2065 = vadd.f32 %v1960, %v2064
        %v2066 = vpop.f32.mrb[0].mxu0
        %2067 = vmatprep.mubr.f32.mxu0 %v1762
        %2068 = vmatmul.mubr.f32.gmra.mrb[0].mxu0 %v1844
        %v2069 = vpop.f32.mrb[0].mxu0
        %v2070 = vadd.f32 %v1965, %v2069
        %v2071 = vpop.f32.mrb[0].mxu0
        %2072 = vdwg.mxu0
        %2073 = vmatprep.subr.mxu0 0.0
        %2074 = vmatpush1.msra.mxu0 %v955
        %2075 = vmatprep.subr.mxu0 0.0
        %2076 = vmatpush1.msra.mxu0 %v956
        %2077 = vmatprep.subr.mxu0 0.0
        %2078 = vmatpush1.msra.mxu0 %v957
        %2079 = vmatprep.subr.mxu0 0.0
        %2080 = vmatpush1.msra.mxu0 %v958
        %2081 = vmatprep.subr.mxu0 0.0
        %2082 = vmatpush1.msra.mxu0 %v959
        %2083 = vmatprep.subr.mxu0 0.0
        %2084 = vmatpush1.msra.mxu0 %v960
        %2085 = vmatprep.subr.mxu0 0.0
        %2086 = vmatpush1.msra.mxu0 %v961
        %2087 = vmatprep.subr.mxu0 0.0
        %2088 = vmatpush1.msra.mxu0 %v962
        %2089 = vmatprep.subr.mxu0 0.0
        %2090 = vmatpush1.msra.mxu0 %v963
        %2091 = vmatprep.subr.mxu0 0.0
        %2092 = vmatpush1.msra.mxu0 %v964
        %2093 = vmatprep.subr.mxu0 0.0
        %2094 = vmatpush1.msra.mxu0 %v965
        %2095 = vmatprep.subr.mxu0 0.0
        %2096 = vmatpush1.msra.mxu0 %v966
        %2097 = vmatprep.subr.mxu0 0.0
        %2098 = vmatpush1.msra.mxu0 %v967
        %2099 = vmatprep.subr.mxu0 0.0
        %2100 = vmatpush1.msra.mxu0 %v968
        %2101 = vmatprep.subr.mxu0 0.0
        %2102 = vmatpush1.msra.mxu0 %v969
        %2103 = vmatprep.subr.mxu0 0.0
        %2104 = vmatpush1.msra.mxu0 %v970
        %2105 = vmatprep.subr.mxu0 0.0
        %2106 = vmatpush1.msra.mxu0 %v971
        %2107 = vmatprep.subr.mxu0 0.0
        %2108 = vmatpush1.msra.mxu0 %v972
        %2109 = vmatprep.subr.mxu0 0.0
        %2110 = vmatpush1.msra.mxu0 %v973
        %2111 = vmatprep.subr.mxu0 0.0
        %2112 = vmatpush1.msra.mxu0 %v974
        %2113 = vmatprep.subr.mxu0 0.0
        %2114 = vmatpush1.msra.mxu0 %v975
        %2115 = vmatprep.subr.mxu0 0.0
        %2116 = vmatpush1.msra.mxu0 %v976
        %2117 = vmatprep.subr.mxu0 0.0
        %2118 = vmatpush1.msra.mxu0 %v977
        %2119 = vmatprep.subr.mxu0 0.0
        %2120 = vmatpush1.msra.mxu0 %v978
        %2121 = vmatprep.subr.mxu0 0.0
        %2122 = vmatpush1.msra.mxu0 %v979
        %2123 = vmatprep.subr.mxu0 0.0
        %2124 = vmatpush1.msra.mxu0 %v980
        %2125 = vmatprep.subr.mxu0 0.0
        %2126 = vmatpush1.msra.mxu0 %v981
        %2127 = vmatprep.subr.mxu0 0.0
        %2128 = vmatpush1.msra.mxu0 %v982
        %2129 = vmatprep.subr.mxu0 0.0
        %2130 = vmatpush1.msra.mxu0 %v983
        %2131 = vmatprep.subr.mxu0 0.0
        %2132 = vmatpush1.msra.mxu0 %v984
        %2133 = vmatprep.subr.mxu0 0.0
        %2134 = vmatpush1.msra.mxu0 %v985
        %2135 = vmatprep.subr.mxu0 0.0
        %2136 = vmatpush1.msra.mxu0 %v986
        %2137 = vmatprep.mubr.f32.mxu0 %v1826
        %2138 = vmatmul.mubr.f32.gmra.mrb[0].mxu0 %v1793
        %v2139 = vpop.f32.mrb[0].mxu0
        %v2140 = vadd.f32 %v2035, %v2139
        %v2141 = vpop.f32.mrb[0].mxu0
        %2142 = vmatprep.mubr.f32.mxu0 %v1829
        %2143 = vmatmul.mubr.f32.gmra.mrb[0].mxu0 %v1796
        %v2144 = vpop.f32.mrb[0].mxu0
        %v2145 = vadd.f32 %v2040, %v2144
        %v2146 = vpop.f32.mrb[0].mxu0
        %2147 = vmatprep.mubr.f32.mxu0 %v1832
        %2148 = vmatmul.mubr.f32.gmra.mrb[0].mxu0 %v1799
        %v2149 = vpop.f32.mrb[0].mxu0
        %v2150 = vadd.f32 %v2045, %v2149
        %v2151 = vpop.f32.mrb[0].mxu0
        %2152 = vmatprep.mubr.f32.mxu0 %v1835
        %2153 = vmatmul.mubr.f32.gmra.mrb[0].mxu0 %v1802
        %v2154 = vpop.f32.mrb[0].mxu0
        %v2155 = vadd.f32 %v2050, %v2154
        %v2156 = vpop.f32.mrb[0].mxu0
        %2157 = vmatprep.mubr.f32.mxu0 %v1838
        %2158 = vmatmul.mubr.f32.gmra.mrb[0].mxu0 %v1805
        %v2159 = vpop.f32.mrb[0].mxu0
        %v2160 = vadd.f32 %v2055, %v2159
        %v2161 = vpop.f32.mrb[0].mxu0
        %2162 = vmatprep.mubr.f32.mxu0 %v1841
        %2163 = vmatmul.mubr.f32.gmra.mrb[0].mxu0 %v1808
        %v2164 = vpop.f32.mrb[0].mxu0
        %v2165 = vadd.f32 %v2060, %v2164
        %v2166 = vpop.f32.mrb[0].mxu0
        %2167 = vmatprep.mubr.f32.mxu0 %v1844
        %2168 = vmatmul.mubr.f32.gmra.mrb[0].mxu0 %v1811
        %v2169 = vpop.f32.mrb[0].mxu0
        %v2170 = vadd.f32 %v2065, %v2169
        %v2171 = vpop.f32.mrb[0].mxu0
        %2172 = vmatprep.mubr.f32.mxu0 %v1861
        %2173 = vmatmul.mubr.f32.gmra.mrb[0].mxu0 %v1857
        %v2174 = vpop.f32.mrb[0].mxu0
        %v2175 = vadd.f32 %v2070, %v2174
        %v2176 = vpop.f32.mrb[0].mxu0
        %2177 = vdwg.mxu0
        %2178 = vmatprep.subr.mxu0 0.0
        %2179 = vmatpush1.msra.mxu0 %v987
        %2180 = vmatprep.subr.mxu0 0.0
        %2181 = vmatpush1.msra.mxu0 %v988
        %2182 = vmatprep.subr.mxu0 0.0
        %2183 = vmatpush1.msra.mxu0 %v989
        %2184 = vmatprep.subr.mxu0 0.0
        %2185 = vmatpush1.msra.mxu0 %v990
        %2186 = vmatprep.subr.mxu0 0.0
        %2187 = vmatpush1.msra.mxu0 %v991
        %2188 = vmatprep.subr.mxu0 0.0
        %2189 = vmatpush1.msra.mxu0 %v992
        %2190 = vmatprep.subr.mxu0 0.0
        %2191 = vmatpush1.msra.mxu0 %v993
        %2192 = vmatprep.subr.mxu0 0.0
        %2193 = vmatpush1.msra.mxu0 %v994
        %2194 = vmatprep.subr.mxu0 0.0
        %2195 = vmatpush1.msra.mxu0 %v995
        %2196 = vmatprep.subr.mxu0 0.0
        %2197 = vmatpush1.msra.mxu0 %v996
        %2198 = vmatprep.subr.mxu0 0.0
        %2199 = vmatpush1.msra.mxu0 %v997
        %2200 = vmatprep.subr.mxu0 0.0
        %2201 = vmatpush1.msra.mxu0 %v998
        %2202 = vmatprep.subr.mxu0 0.0
        %2203 = vmatpush1.msra.mxu0 %v999
        %2204 = vmatprep.subr.mxu0 0.0
        %2205 = vmatpush1.msra.mxu0 %v1000
        %2206 = vmatprep.subr.mxu0 0.0
        %2207 = vmatpush1.msra.mxu0 %v1001
        %2208 = vmatprep.subr.mxu0 0.0
        %2209 = vmatpush1.msra.mxu0 %v1002
        %2210 = vmatprep.subr.mxu0 0.0
        %2211 = vmatpush1.msra.mxu0 %v1003
        %2212 = vmatprep.subr.mxu0 0.0
        %2213 = vmatpush1.msra.mxu0 %v1004
        %2214 = vmatprep.subr.mxu0 0.0
        %2215 = vmatpush1.msra.mxu0 %v1005
        %2216 = vmatprep.subr.mxu0 0.0
        %2217 = vmatpush1.msra.mxu0 %v1006
        %2218 = vmatprep.subr.mxu0 0.0
        %2219 = vmatpush1.msra.mxu0 %v1007
        %2220 = vmatprep.subr.mxu0 0.0
        %2221 = vmatpush1.msra.mxu0 %v1008
        %2222 = vmatprep.subr.mxu0 0.0
        %2223 = vmatpush1.msra.mxu0 %v1009
        %2224 = vmatprep.subr.mxu0 0.0
        %2225 = vmatpush1.msra.mxu0 %v1010
        %2226 = vmatprep.subr.mxu0 0.0
        %2227 = vmatpush1.msra.mxu0 %v1011
        %2228 = vmatprep.subr.mxu0 0.0
        %2229 = vmatpush1.msra.mxu0 %v1012
        %2230 = vmatprep.subr.mxu0 0.0
        %2231 = vmatpush1.msra.mxu0 %v1013
        %2232 = vmatprep.subr.mxu0 0.0
        %2233 = vmatpush1.msra.mxu0 %v1014
        %2234 = vmatprep.subr.mxu0 0.0
        %2235 = vmatpush1.msra.mxu0 %v1015
        %2236 = vmatprep.subr.mxu0 0.0
        %2237 = vmatpush1.msra.mxu0 %v1016
        %2238 = vmatprep.subr.mxu0 0.0
        %2239 = vmatpush1.msra.mxu0 %v1017
        %2240 = vmatprep.subr.mxu0 0.0
        %2241 = vmatpush1.msra.mxu0 %v1018
        %2242 = vmatprep.mubr.f32.mxu0 %v1796
        %2243 = vmatmul.mubr.f32.gmra.mrb[0].mxu0 %v1756
        %v2244 = vpop.f32.mrb[0].mxu0
        %v2245 = vadd.f32 %v2140, %v2244
        %v2246 = vpop.f32.mrb[0].mxu0
        %2247 = vmatprep.mubr.f32.mxu0 %v1799
        %2248 = vmatmul.mubr.f32.gmra.mrb[0].mxu0 %v1757
        %v2249 = vpop.f32.mrb[0].mxu0
        %v2250 = vadd.f32 %v2145, %v2249
        %v2251 = vpop.f32.mrb[0].mxu0
        %2252 = vmatprep.mubr.f32.mxu0 %v1802
        %2253 = vmatmul.mubr.f32.gmra.mrb[0].mxu0 %v1758
        %v2254 = vpop.f32.mrb[0].mxu0
        %v2255 = vadd.f32 %v2150, %v2254
        %v2256 = vpop.f32.mrb[0].mxu0
        %2257 = vmatprep.mubr.f32.mxu0 %v1805
        %2258 = vmatmul.mubr.f32.gmra.mrb[0].mxu0 %v1759
        %v2259 = vpop.f32.mrb[0].mxu0
        %v2260 = vadd.f32 %v2155, %v2259
        %v2261 = vpop.f32.mrb[0].mxu0
        %2262 = vmatprep.mubr.f32.mxu0 %v1808
        %2263 = vmatmul.mubr.f32.gmra.mrb[0].mxu0 %v1760
        %v2264 = vpop.f32.mrb[0].mxu0
        %v2265 = vadd.f32 %v2160, %v2264
        %v2266 = vpop.f32.mrb[0].mxu0
        %2267 = vmatprep.mubr.f32.mxu0 %v1811
        %2268 = vmatmul.mubr.f32.gmra.mrb[0].mxu0 %v1761
        %v2269 = vpop.f32.mrb[0].mxu0
        %v2270 = vadd.f32 %v2165, %v2269
        %v2271 = vpop.f32.mrb[0].mxu0
        %2272 = vmatprep.mubr.f32.mxu0 %v1857
        %2273 = vmatmul.mubr.f32.gmra.mrb[0].mxu0 %v1762
        %v2274 = vpop.f32.mrb[0].mxu0
        %v2275 = vadd.f32 %v2170, %v2274
        %v2276 = vpop.f32.mrb[0].mxu0
        %2277 = vmatprep.mubr.f32.mxu0 %v1790
        %2278 = vmatmul.mubr.f32.gmra.mrb[0].mxu0 %v1754
        %v2279 = vpop.f32.mrb[0].mxu0
        %v2280 = vadd.f32 %v2175, %v2279
        %v2281 = vpop.f32.mrb[0].mxu0
        %2282 = vdwg.mxu0
        %2283 = vmatprep.subr.mxu0 0.0
        %2284 = vmatpush1.msra.mxu0 %v1019
        %2285 = vmatprep.subr.mxu0 0.0
        %2286 = vmatpush1.msra.mxu0 %v1020
        %2287 = vmatprep.subr.mxu0 0.0
        %2288 = vmatpush1.msra.mxu0 %v1021
        %2289 = vmatprep.subr.mxu0 0.0
        %2290 = vmatpush1.msra.mxu0 %v1022
        %2291 = vmatprep.subr.mxu0 0.0
        %2292 = vmatpush1.msra.mxu0 %v1023
        %2293 = vmatprep.subr.mxu0 0.0
        %2294 = vmatpush1.msra.mxu0 %v1024
        %2295 = vmatprep.subr.mxu0 0.0
        %2296 = vmatpush1.msra.mxu0 %v1025
        %2297 = vmatprep.subr.mxu0 0.0
        %2298 = vmatpush1.msra.mxu0 %v1026
        %2299 = vmatprep.subr.mxu0 0.0
        %2300 = vmatpush1.msra.mxu0 %v1027
        %2301 = vmatprep.subr.mxu0 0.0
        %2302 = vmatpush1.msra.mxu0 %v1028
        %2303 = vmatprep.subr.mxu0 0.0
        %2304 = vmatpush1.msra.mxu0 %v1029
        %2305 = vmatprep.subr.mxu0 0.0
        %2306 = vmatpush1.msra.mxu0 %v1030
        %2307 = vmatprep.subr.mxu0 0.0
        %2308 = vmatpush1.msra.mxu0 %v1031
        %2309 = vmatprep.subr.mxu0 0.0
        %2310 = vmatpush1.msra.mxu0 %v1032
        %2311 = vmatprep.subr.mxu0 0.0
        %2312 = vmatpush1.msra.mxu0 %v1033
        %2313 = vmatprep.subr.mxu0 0.0
        %2314 = vmatpush1.msra.mxu0 %v1034
        %2315 = vmatprep.subr.mxu0 0.0
        %2316 = vmatpush1.msra.mxu0 0.0
        %2317 = vmatprep.subr.mxu0 0.0
        %2318 = vmatpush1.msra.mxu0 0.0
        %2319 = vmatprep.subr.mxu0 0.0
        %2320 = vmatpush1.msra.mxu0 0.0
        %2321 = vmatprep.subr.mxu0 0.0
        %2322 = vmatpush1.msra.mxu0 0.0
        %2323 = vmatprep.subr.mxu0 0.0
        %2324 = vmatpush1.msra.mxu0 0.0
        %2325 = vmatprep.subr.mxu0 0.0
        %2326 = vmatpush1.msra.mxu0 0.0
        %2327 = vmatprep.subr.mxu0 0.0
        %2328 = vmatpush1.msra.mxu0 0.0
        %2329 = vmatprep.subr.mxu0 0.0
        %2330 = vmatpush1.msra.mxu0 0.0
        %2331 = vmatprep.subr.mxu0 0.0
        %2332 = vmatpush1.msra.mxu0 0.0
        %2333 = vmatprep.subr.mxu0 0.0
        %2334 = vmatpush1.msra.mxu0 0.0
        %2335 = vmatprep.subr.mxu0 0.0
        %2336 = vmatpush1.msra.mxu0 0.0
        %2337 = vmatprep.subr.mxu0 0.0
        %2338 = vmatpush1.msra.mxu0 0.0
        %2339 = vmatprep.subr.mxu0 0.0
        %2340 = vmatpush1.msra.mxu0 0.0
        %2341 = vmatprep.subr.mxu0 0.0
        %2342 = vmatpush1.msra.mxu0 0.0
        %2343 = vmatprep.subr.mxu0 0.0
        %2344 = vmatpush1.msra.mxu0 0.0
        %2345 = vmatprep.subr.mxu0 0.0
        %2346 = vmatpush1.msra.mxu0 0.0
        %2347 = vmatprep.mubr.f32.mxu0 0.0
        %2348 = vmatmul.mubr.f32.gmra.mrb[0].mxu0 %v1829
        %v2349 = vpop.f32.mrb[0].mxu0
        %v2350 = vadd.f32 %v2245, %v2349
        %v2351 = vpop.f32.mrb[0].mxu0
        %2352 = vmatprep.mubr.f32.mxu0 0.0
        %2353 = vmatmul.mubr.f32.gmra.mrb[0].mxu0 %v1832
        %v2354 = vpop.f32.mrb[0].mxu0
        %v2355 = vadd.f32 %v2250, %v2354
        %v2356 = vpop.f32.mrb[0].mxu0
        %2357 = vmatprep.mubr.f32.mxu0 0.0
        %2358 = vmatmul.mubr.f32.gmra.mrb[0].mxu0 %v1835
        %v2359 = vpop.f32.mrb[0].mxu0
        %v2360 = vadd.f32 %v2255, %v2359
        %v2361 = vpop.f32.mrb[0].mxu0
        %2362 = vmatprep.mubr.f32.mxu0 0.0
        %2363 = vmatmul.mubr.f32.gmra.mrb[0].mxu0 %v1838
        %v2364 = vpop.f32.mrb[0].mxu0
        %v2365 = vadd.f32 %v2260, %v2364
        %v2366 = vpop.f32.mrb[0].mxu0
        %2367 = vmatprep.mubr.f32.mxu0 0.0
        %2368 = vmatmul.mubr.f32.gmra.mrb[0].mxu0 %v1841
        %v2369 = vpop.f32.mrb[0].mxu0
        %v2370 = vadd.f32 %v2265, %v2369
        %v2371 = vpop.f32.mrb[0].mxu0
        %2372 = vmatprep.mubr.f32.mxu0 0.0
        %2373 = vmatmul.mubr.f32.gmra.mrb[0].mxu0 %v1844
        %v2374 = vpop.f32.mrb[0].mxu0
        %v2375 = vadd.f32 %v2270, %v2374
        %v2376 = vpop.f32.mrb[0].mxu0
        %2377 = vmatprep.mubr.f32.mxu0 0.0
        %2378 = vmatmul.mubr.f32.gmra.mrb[0].mxu0 %v1861
        %v2379 = vpop.f32.mrb[0].mxu0
        %v2380 = vadd.f32 %v2275, %v2379
        %v2381 = vpop.f32.mrb[0].mxu0
        %2382 = vmatprep.mubr.f32.mxu0 0.0
        %2383 = vmatmul.mubr.f32.gmra.mrb[0].mxu0 %v1823
        %v2384 = vpop.f32.mrb[0].mxu0
        %v2385 = vadd.f32 %v2280, %v2384
        %v2386 = vpop.f32.mrb[0].mxu0
        %2387 = vdwg.mxu0
        %v2388 = vlaneseq
        %v2389 = vshrl.u32 %v2388, 7
        %v2390 = vsub.s32 0, %v2389
        %v2391 = vrot.slane %v1533, %v2390
        %v2392 = vmul.f32 %v2350, %v2391
        %v2393 = vmul.f32 %v2355, %v2391
        %v2394 = vmul.f32 %v2360, %v2391
        %v2395 = vmul.f32 %v2365, %v2391
        %v2396 = vmul.f32 %v2370, %v2391
        %v2397 = vmul.f32 %v2375, %v2391
        %v2398 = vmul.f32 %v2380, %v2391
        %v2399 = vmul.f32 %v2385, %v2391
        %v2408 = vrot.slane %v2392, 7
        %v2409 = vrot.slane %v2393, 7
        %v2410 = vrot.slane %v2394, 7
        %v2411 = vrot.slane %v2395, 7
        %v2412 = vrot.slane %v2396, 7
        %v2413 = vrot.slane %v2397, 7
        %v2414 = vrot.slane %v2398, 7
        %v2415 = vrot.slane %v2399, 7
        %v2424 = vsel %vm1753, 0.0, %v2408
        %v2425 = vsel %vm1753, 0.0, %v2409
        %v2426 = vsel %vm1753, 0.0, %v2410
        %v2427 = vsel %vm1753, 0.0, %v2411
        %v2428 = vsel %vm1753, 0.0, %v2412
        %v2429 = vsel %vm1753, 0.0, %v2413
        %v2430 = vsel %vm1753, 0.0, %v2414
        %v2431 = vsel %vm1753, 0.0, %v2415
        %v2432 = vsel %vm1753, %v2408, 0.0
        %v2433 = vsel %vm1753, %v2409, 0.0
        %v2434 = vsel %vm1753, %v2410, 0.0
        %v2435 = vsel %vm1753, %v2411, 0.0
        %v2436 = vsel %vm1753, %v2412, 0.0
        %v2437 = vsel %vm1753, %v2413, 0.0
        %v2438 = vsel %vm1753, %v2414, 0.0
        %v2439 = vsel %vm1753, %v2415, 0.0
        %v2454 = vrot.slane %v2424, 1
        %v2455 = vrot.slane %v2432, 1
        %v2456 = vsel %vm1581, %v2454, %v2455
        %v2457 = vrot.slane %v2425, 1
        %v2458 = vrot.slane %v2433, 1
        %v2459 = vsel %vm1581, %v2457, %v2458
        %v2460 = vrot.slane %v2426, 1
        %v2461 = vrot.slane %v2434, 1
        %v2462 = vsel %vm1581, %v2460, %v2461
        %v2463 = vrot.slane %v2427, 1
        %v2464 = vrot.slane %v2435, 1
        %v2465 = vsel %vm1581, %v2463, %v2464
        %v2466 = vrot.slane %v2428, 1
        %v2467 = vrot.slane %v2436, 1
        %v2468 = vsel %vm1581, %v2466, %v2467
        %v2469 = vrot.slane %v2429, 1
        %v2470 = vrot.slane %v2437, 1
        %v2471 = vsel %vm1581, %v2469, %v2470
        %v2472 = vrot.slane %v2430, 1
        %v2473 = vrot.slane %v2438, 1
        %v2474 = vsel %vm1581, %v2472, %v2473
        %v2482 = vrot.slane %v2424, 2
        %v2483 = vrot.slane %v2432, 2
        %v2484 = vsel %vm1820, %v2482, %v2483
        %v2485 = vrot.slane %v2425, 2
        %v2486 = vrot.slane %v2433, 2
        %v2487 = vsel %vm1820, %v2485, %v2486
        %v2488 = vrot.slane %v2426, 2
        %v2489 = vrot.slane %v2434, 2
        %v2490 = vsel %vm1820, %v2488, %v2489
        %v2491 = vrot.slane %v2427, 2
        %v2492 = vrot.slane %v2435, 2
        %v2493 = vsel %vm1820, %v2491, %v2492
        %v2494 = vrot.slane %v2428, 2
        %v2495 = vrot.slane %v2436, 2
        %v2496 = vsel %vm1820, %v2494, %v2495
        %v2497 = vrot.slane %v2429, 2
        %v2498 = vrot.slane %v2437, 2
        %v2499 = vsel %vm1820, %v2497, %v2498
        %v2500 = vrot.slane %v2430, 2
        %v2501 = vrot.slane %v2438, 2
        %v2502 = vsel %vm1820, %v2500, %v2501
        %v2512 = vrot.slane %v2431, 1
        %v2513 = vrot.slane %v2439, 1
        %v2514 = vsel %vm1581, %v2512, %v2513
        %v2516 = vrot.slane %v2431, 2
        %v2517 = vrot.slane %v2439, 2
        %v2518 = vsel %vm1820, %v2516, %v2517
        %v2520 = vld [vmem:[%s6] sm:$0xff]
        %v2521 = vld [vmem:[%s6 + $0x8] sm:$0xff]
        %v2522 = vld [vmem:[%s6 + $0x10] sm:$0xff]
        %v2523 = vld [vmem:[%s6 + $0x18] sm:$0xff]
        %v2524 = vld [vmem:[%s6 + $0x20] sm:$0xff]
        %v2525 = vld [vmem:[%s6 + $0x28] sm:$0xff]
        %v2526 = vld [vmem:[%s6 + $0x30] sm:$0xff]
        %v2527 = vld [vmem:[%s6 + $0x38] sm:$0xff]
        %v2528 = vld [vmem:[%s6 + $0x40] sm:$0xff]
        %v2529 = vld [vmem:[%s6 + $0x48] sm:$0xff]
        %v2530 = vld [vmem:[%s6 + $0x50] sm:$0xff]
        %v2531 = vld [vmem:[%s6 + $0x58] sm:$0xff]
        %v2532 = vld [vmem:[%s6 + $0x60] sm:$0xff]
        %v2533 = vld [vmem:[%s6 + $0x68] sm:$0xff]
        %v2534 = vld [vmem:[%s6 + $0x70] sm:$0xff]
        %v2535 = vld [vmem:[%s6 + $0x78] sm:$0xff]
        %v2536 = vld [vmem:[%s6 + $0x80] sm:$0xff]
        %v2537 = vld [vmem:[%s6 + $0x88] sm:$0xff]
        %v2538 = vld [vmem:[%s6 + $0x90] sm:$0xff]
        %v2539 = vld [vmem:[%s6 + $0x98] sm:$0xff]
        %v2540 = vld [vmem:[%s6 + $0xa0] sm:$0xff]
        %v2541 = vld [vmem:[%s6 + $0xa8] sm:$0xff]
        %v2542 = vld [vmem:[%s6 + $0xb0] sm:$0xff]
        %v2543 = vld [vmem:[%s6 + $0xb8] sm:$0xff]
        %v2544 = vld [vmem:[%s6 + $0xc0] sm:$0xff]
        %v2545 = vld [vmem:[%s6 + $0xc8] sm:$0xff]
        %v2546 = vld [vmem:[%s6 + $0xd0] sm:$0xff]
        %v2547 = vld [vmem:[%s6 + $0xd8] sm:$0xff]
        %v2548 = vld [vmem:[%s6 + $0xe0] sm:$0xff]
        %v2549 = vld [vmem:[%s6 + $0xe8] sm:$0xff]
        %v2550 = vld [vmem:[%s6 + $0xf0] sm:$0xff]
        %v2551 = vld [vmem:[%s6 + $0xf8] sm:$0xff]
        %v2552 = vld [vmem:[%s6 + $0x100] sm:$0xff]
        %v2553 = vld [vmem:[%s6 + $0x108] sm:$0xff]
        %v2554 = vld [vmem:[%s6 + $0x110] sm:$0xff]
        %v2555 = vld [vmem:[%s6 + $0x118] sm:$0xff]
        %v2556 = vld [vmem:[%s6 + $0x120] sm:$0xff]
        %v2557 = vld [vmem:[%s6 + $0x128] sm:$0xff]
        %v2558 = vld [vmem:[%s6 + $0x130] sm:$0xff]
        %v2559 = vld [vmem:[%s6 + $0x138] sm:$0xff]
        %v2560 = vld [vmem:[%s6 + $0x140] sm:$0xff]
        %v2561 = vld [vmem:[%s6 + $0x148] sm:$0xff]
        %v2562 = vld [vmem:[%s6 + $0x150] sm:$0xff]
        %v2563 = vld [vmem:[%s6 + $0x158] sm:$0xff]
        %v2564 = vld [vmem:[%s6 + $0x160] sm:$0xff]
        %v2565 = vld [vmem:[%s6 + $0x168] sm:$0xff]
        %v2566 = vld [vmem:[%s6 + $0x170] sm:$0xff]
        %v2567 = vld [vmem:[%s6 + $0x178] sm:$0xff]
        %v2568 = vld [vmem:[%s6 + $0x180] sm:$0xff]
        %v2569 = vld [vmem:[%s6 + $0x188] sm:$0xff]
        %v2570 = vld [vmem:[%s6 + $0x190] sm:$0xff]
        %v2571 = vld [vmem:[%s6 + $0x198] sm:$0xff]
        %v2572 = vld [vmem:[%s6 + $0x1a0] sm:$0xff]
        %v2573 = vld [vmem:[%s6 + $0x1a8] sm:$0xff]
        %v2574 = vld [vmem:[%s6 + $0x1b0] sm:$0xff]
        %v2575 = vld [vmem:[%s6 + $0x1b8] sm:$0xff]
        %v2576 = vld [vmem:[%s6 + $0x1c0] sm:$0xff]
        %v2577 = vld [vmem:[%s6 + $0x1c8] sm:$0xff]
        %v2578 = vld [vmem:[%s6 + $0x1d0] sm:$0xff]
        %v2579 = vld [vmem:[%s6 + $0x1d8] sm:$0xff]
        %v2580 = vld [vmem:[%s6 + $0x1e0] sm:$0xff]
        %v2581 = vld [vmem:[%s6 + $0x1e8] sm:$0xff]
        %v2582 = vld [vmem:[%s6 + $0x1f0] sm:$0xff]
        %v2583 = vld [vmem:[%s6 + $0x1f8] sm:$0xff]
        %v2584 = vld [vmem:[%s6 + $0x200] sm:$0xff]
        %v2585 = vld [vmem:[%s6 + $0x208] sm:$0xff]
        %v2586 = vld [vmem:[%s6 + $0x210] sm:$0xff]
        %v2587 = vld [vmem:[%s6 + $0x218] sm:$0xff]
        %v2588 = vld [vmem:[%s6 + $0x220] sm:$0xff]
        %v2589 = vld [vmem:[%s6 + $0x228] sm:$0xff]
        %v2590 = vld [vmem:[%s6 + $0x230] sm:$0xff]
        %v2591 = vld [vmem:[%s6 + $0x238] sm:$0xff]
        %v2592 = vld [vmem:[%s6 + $0x240] sm:$0xff]
        %v2593 = vld [vmem:[%s6 + $0x248] sm:$0xff]
        %v2594 = vld [vmem:[%s6 + $0x250] sm:$0xff]
        %v2595 = vld [vmem:[%s6 + $0x258] sm:$0xff]
        %v2596 = vld [vmem:[%s6 + $0x260] sm:$0xff]
        %v2597 = vld [vmem:[%s6 + $0x268] sm:$0xff]
        %v2598 = vld [vmem:[%s6 + $0x270] sm:$0xff]
        %v2599 = vld [vmem:[%s6 + $0x278] sm:$0xff]
        %v2600 = vld [vmem:[%s6 + $0x280] sm:$0xff]
        %v2601 = vld [vmem:[%s6 + $0x288] sm:$0xff]
        %v2602 = vld [vmem:[%s6 + $0x290] sm:$0xff]
        %v2603 = vld [vmem:[%s6 + $0x298] sm:$0xff]
        %v2604 = vld [vmem:[%s6 + $0x2a0] sm:$0xff]
        %v2605 = vld [vmem:[%s6 + $0x2a8] sm:$0xff]
        %v2606 = vld [vmem:[%s6 + $0x2b0] sm:$0xff]
        %v2607 = vld [vmem:[%s6 + $0x2b8] sm:$0xff]
        %v2608 = vld [vmem:[%s6 + $0x2c0] sm:$0xff]
        %v2609 = vld [vmem:[%s6 + $0x2c8] sm:$0xff]
        %v2610 = vld [vmem:[%s6 + $0x2d0] sm:$0xff]
        %v2611 = vld [vmem:[%s6 + $0x2d8] sm:$0xff]
        %v2612 = vld [vmem:[%s6 + $0x2e0] sm:$0xff]
        %v2613 = vld [vmem:[%s6 + $0x2e8] sm:$0xff]
        %v2614 = vld [vmem:[%s6 + $0x2f0] sm:$0xff]
        %v2615 = vld [vmem:[%s6 + $0x2f8] sm:$0xff]
        %v2616 = vld [vmem:[%s6 + $0x300] sm:$0xff]
        %v2617 = vld [vmem:[%s6 + $0x308] sm:$0xff]
        %v2618 = vld [vmem:[%s6 + $0x310] sm:$0xff]
        %v2619 = vld [vmem:[%s6 + $0x318] sm:$0xff]
        %v2620 = vld [vmem:[%s6 + $0x320] sm:$0xff]
        %v2621 = vld [vmem:[%s6 + $0x328] sm:$0xff]
        %v2622 = vld [vmem:[%s6 + $0x330] sm:$0xff]
        %v2623 = vld [vmem:[%s6 + $0x338] sm:$0xff]
        %v2624 = vld [vmem:[%s6 + $0x340] sm:$0xff]
        %v2625 = vld [vmem:[%s6 + $0x348] sm:$0xff]
        %v2626 = vld [vmem:[%s6 + $0x350] sm:$0xff]
        %v2627 = vld [vmem:[%s6 + $0x358] sm:$0xff]
        %v2628 = vld [vmem:[%s6 + $0x360] sm:$0xff]
        %v2629 = vld [vmem:[%s6 + $0x368] sm:$0xff]
        %v2630 = vld [vmem:[%s6 + $0x370] sm:$0xff]
        %v2631 = vld [vmem:[%s6 + $0x378] sm:$0xff]
        %v2632 = vld [vmem:[%s6 + $0x380] sm:$0xff]
        %v2633 = vld [vmem:[%s6 + $0x388] sm:$0xff]
        %v2634 = vld [vmem:[%s6 + $0x390] sm:$0xff]
        %v2635 = vld [vmem:[%s6 + $0x398] sm:$0xff]
        %v2636 = vld [vmem:[%s6 + $0x3a0] sm:$0xff]
        %v2637 = vld [vmem:[%s6 + $0x3a8] sm:$0xff]
        %v2638 = vld [vmem:[%s6 + $0x3b0] sm:$0xff]
        %v2639 = vld [vmem:[%s6 + $0x3b8] sm:$0xff]
        %v2640 = vld [vmem:[%s6 + $0x3c0] sm:$0xff]
        %v2641 = vld [vmem:[%s6 + $0x3c8] sm:$0xff]
        %v2642 = vld [vmem:[%s6 + $0x3d0] sm:$0xff]
        %v2643 = vld [vmem:[%s6 + $0x3d8] sm:$0xff]
        %v2644 = vld [vmem:[%s6 + $0x3e0] sm:$0xff]
        %v2645 = vld [vmem:[%s6 + $0x3e8] sm:$0xff]
        %v2646 = vld [vmem:[%s6 + $0x3f0] sm:$0xff]
        %v2647 = vld [vmem:[%s6 + $0x3f8] sm:$0xff]
        %v2648 = vld [vmem:[%s6 + $0x400] sm:$0xff]
        %v2649 = vld [vmem:[%s6 + $0x408] sm:$0xff]
        %v2650 = vld [vmem:[%s6 + $0x410] sm:$0xff]
        %v2651 = vld [vmem:[%s6 + $0x418] sm:$0xff]
        %v2652 = vld [vmem:[%s6 + $0x420] sm:$0xff]
        %v2653 = vld [vmem:[%s6 + $0x428] sm:$0xff]
        %v2654 = vld [vmem:[%s6 + $0x430] sm:$0xff]
        %v2655 = vld [vmem:[%s6 + $0x438] sm:$0xff]
        %v2656 = vld [vmem:[%s6 + $0x440] sm:$0xff]
        %v2657 = vld [vmem:[%s6 + $0x448] sm:$0xff]
        %v2658 = vld [vmem:[%s6 + $0x450] sm:$0xff]
        %v2659 = vld [vmem:[%s6 + $0x458] sm:$0xff]
        %v2660 = vld [vmem:[%s6 + $0x460] sm:$0xff]
        %v2661 = vld [vmem:[%s6 + $0x468] sm:$0xff]
        %v2662 = vld [vmem:[%s6 + $0x470] sm:$0xff]
        %v2663 = vld [vmem:[%s6 + $0x478] sm:$0xff]
        %s2664 = sld [smem:[#allocation2]]
        %v2665 = vstv %s2664
        %2666 = vmatprep.subr.mxu0 0.0
        %2667 = vmatpush1.msra.mxu0 %v2520
        %2668 = vmatprep.subr.mxu0 0.0
        %2669 = vmatpush1.msra.mxu0 %v2521
        %2670 = vmatprep.subr.mxu0 0.0
        %2671 = vmatpush1.msra.mxu0 %v2522
        %2672 = vmatprep.subr.mxu0 0.0
        %2673 = vmatpush1.msra.mxu0 %v2523
        %2674 = vmatprep.subr.mxu0 0.0
        %2675 = vmatpush1.msra.mxu0 %v2524
        %2676 = vmatprep.subr.mxu0 0.0
        %2677 = vmatpush1.msra.mxu0 %v2525
        %2678 = vmatprep.subr.mxu0 0.0
        %2679 = vmatpush1.msra.mxu0 %v2526
        %2680 = vmatprep.subr.mxu0 0.0
        %2681 = vmatpush1.msra.mxu0 %v2527
        %2682 = vmatprep.subr.mxu0 0.0
        %2683 = vmatpush1.msra.mxu0 %v2528
        %2684 = vmatprep.subr.mxu0 0.0
        %2685 = vmatpush1.msra.mxu0 %v2529
        %2686 = vmatprep.subr.mxu0 0.0
        %2687 = vmatpush1.msra.mxu0 %v2530
        %2688 = vmatprep.subr.mxu0 0.0
        %2689 = vmatpush1.msra.mxu0 %v2531
        %2690 = vmatprep.subr.mxu0 0.0
        %2691 = vmatpush1.msra.mxu0 %v2532
        %2692 = vmatprep.subr.mxu0 0.0
        %2693 = vmatpush1.msra.mxu0 %v2533
        %2694 = vmatprep.subr.mxu0 0.0
        %2695 = vmatpush1.msra.mxu0 %v2534
        %2696 = vmatprep.subr.mxu0 0.0
        %2697 = vmatpush1.msra.mxu0 %v2535
        %2698 = vmatprep.subr.mxu0 0.0
        %2699 = vmatpush1.msra.mxu0 %v2536
        %2700 = vmatprep.subr.mxu0 0.0
        %2701 = vmatpush1.msra.mxu0 %v2537
        %2702 = vmatprep.subr.mxu0 0.0
        %2703 = vmatpush1.msra.mxu0 %v2538
        %2704 = vmatprep.subr.mxu0 0.0
        %2705 = vmatpush1.msra.mxu0 %v2539
        %2706 = vmatprep.subr.mxu0 0.0
        %2707 = vmatpush1.msra.mxu0 %v2540
        %2708 = vmatprep.subr.mxu0 0.0
        %2709 = vmatpush1.msra.mxu0 %v2541
        %2710 = vmatprep.subr.mxu0 0.0
        %2711 = vmatpush1.msra.mxu0 %v2542
        %2712 = vmatprep.subr.mxu0 0.0
        %2713 = vmatpush1.msra.mxu0 %v2543
        %2714 = vmatprep.subr.mxu0 0.0
        %2715 = vmatpush1.msra.mxu0 %v2544
        %2716 = vmatprep.subr.mxu0 0.0
        %2717 = vmatpush1.msra.mxu0 %v2545
        %2718 = vmatprep.subr.mxu0 0.0
        %2719 = vmatpush1.msra.mxu0 %v2546
        %2720 = vmatprep.subr.mxu0 0.0
        %2721 = vmatpush1.msra.mxu0 %v2547
        %2722 = vmatprep.subr.mxu0 0.0
        %2723 = vmatpush1.msra.mxu0 %v2548
        %2724 = vmatprep.subr.mxu0 0.0
        %2725 = vmatpush1.msra.mxu0 %v2549
        %2726 = vmatprep.subr.mxu0 0.0
        %2727 = vmatpush1.msra.mxu0 %v2550
        %2728 = vmatprep.subr.mxu0 0.0
        %2729 = vmatpush1.msra.mxu0 %v2551
        %2730 = vmatprep.mubr.f32.mxu0 %v1790
        %2731 = vmatmul.mubr.f32.gmra.mrb[0].mxu0 %v1754
        %v2732 = vpop.f32.mrb[0].mxu0
        %v2733 = vadd.f32 %v2665, %v2732
        %v2734 = vpop.f32.mrb[0].mxu0
        %2735 = vmatprep.mubr.f32.mxu0 %v2456
        %2736 = vmatmul.mubr.f32.gmra.mrb[0].mxu0 %v2424
        %v2737 = vpop.f32.mrb[0].mxu0
        %v2738 = vadd.f32 %v2665, %v2737
        %v2739 = vpop.f32.mrb[0].mxu0
        %2740 = vmatprep.mubr.f32.mxu0 %v2459
        %2741 = vmatmul.mubr.f32.gmra.mrb[0].mxu0 %v2425
        %v2742 = vpop.f32.mrb[0].mxu0
        %v2743 = vadd.f32 %v2665, %v2742
        %v2744 = vpop.f32.mrb[0].mxu0
        %2745 = vmatprep.mubr.f32.mxu0 %v2462
        %2746 = vmatmul.mubr.f32.gmra.mrb[0].mxu0 %v2426
        %v2747 = vpop.f32.mrb[0].mxu0
        %v2748 = vadd.f32 %v2665, %v2747
        %v2749 = vpop.f32.mrb[0].mxu0
        %2750 = vmatprep.mubr.f32.mxu0 %v2465
        %2751 = vmatmul.mubr.f32.gmra.mrb[0].mxu0 %v2427
        %v2752 = vpop.f32.mrb[0].mxu0
        %v2753 = vadd.f32 %v2665, %v2752
        %v2754 = vpop.f32.mrb[0].mxu0
        %2755 = vmatprep.mubr.f32.mxu0 %v2468
        %2756 = vmatmul.mubr.f32.gmra.mrb[0].mxu0 %v2428
        %v2757 = vpop.f32.mrb[0].mxu0
        %v2758 = vadd.f32 %v2665, %v2757
        %v2759 = vpop.f32.mrb[0].mxu0
        %2760 = vmatprep.mubr.f32.mxu0 %v2471
        %2761 = vmatmul.mubr.f32.gmra.mrb[0].mxu0 %v2429
        %v2762 = vpop.f32.mrb[0].mxu0
        %v2763 = vadd.f32 %v2665, %v2762
        %v2764 = vpop.f32.mrb[0].mxu0
        %2765 = vmatprep.mubr.f32.mxu0 %v2474
        %2766 = vmatmul.mubr.f32.gmra.mrb[0].mxu0 %v2430
        %v2767 = vpop.f32.mrb[0].mxu0
        %v2768 = vadd.f32 %v2665, %v2767
        %v2769 = vpop.f32.mrb[0].mxu0
        %2770 = vdwg.mxu0
        %2771 = vmatprep.subr.mxu0 0.0
        %2772 = vmatpush1.msra.mxu0 %v2552
        %2773 = vmatprep.subr.mxu0 0.0
        %2774 = vmatpush1.msra.mxu0 %v2553
        %2775 = vmatprep.subr.mxu0 0.0
        %2776 = vmatpush1.msra.mxu0 %v2554
        %2777 = vmatprep.subr.mxu0 0.0
        %2778 = vmatpush1.msra.mxu0 %v2555
        %2779 = vmatprep.subr.mxu0 0.0
        %2780 = vmatpush1.msra.mxu0 %v2556
        %2781 = vmatprep.subr.mxu0 0.0
        %2782 = vmatpush1.msra.mxu0 %v2557
        %2783 = vmatprep.subr.mxu0 0.0
        %2784 = vmatpush1.msra.mxu0 %v2558
        %2785 = vmatprep.subr.mxu0 0.0
        %2786 = vmatpush1.msra.mxu0 %v2559
        %2787 = vmatprep.subr.mxu0 0.0
        %2788 = vmatpush1.msra.mxu0 %v2560
        %2789 = vmatprep.subr.mxu0 0.0
        %2790 = vmatpush1.msra.mxu0 %v2561
        %2791 = vmatprep.subr.mxu0 0.0
        %2792 = vmatpush1.msra.mxu0 %v2562
        %2793 = vmatprep.subr.mxu0 0.0
        %2794 = vmatpush1.msra.mxu0 %v2563
        %2795 = vmatprep.subr.mxu0 0.0
        %2796 = vmatpush1.msra.mxu0 %v2564
        %2797 = vmatprep.subr.mxu0 0.0
        %2798 = vmatpush1.msra.mxu0 %v2565
        %2799 = vmatprep.subr.mxu0 0.0
        %2800 = vmatpush1.msra.mxu0 %v2566
        %2801 = vmatprep.subr.mxu0 0.0
        %2802 = vmatpush1.msra.mxu0 %v2567
        %2803 = vmatprep.subr.mxu0 0.0
        %2804 = vmatpush1.msra.mxu0 %v2568
        %2805 = vmatprep.subr.mxu0 0.0
        %2806 = vmatpush1.msra.mxu0 %v2569
        %2807 = vmatprep.subr.mxu0 0.0
        %2808 = vmatpush1.msra.mxu0 %v2570
        %2809 = vmatprep.subr.mxu0 0.0
        %2810 = vmatpush1.msra.mxu0 %v2571
        %2811 = vmatprep.subr.mxu0 0.0
        %2812 = vmatpush1.msra.mxu0 %v2572
        %2813 = vmatprep.subr.mxu0 0.0
        %2814 = vmatpush1.msra.mxu0 %v2573
        %2815 = vmatprep.subr.mxu0 0.0
        %2816 = vmatpush1.msra.mxu0 %v2574
        %2817 = vmatprep.subr.mxu0 0.0
        %2818 = vmatpush1.msra.mxu0 %v2575
        %2819 = vmatprep.subr.mxu0 0.0
        %2820 = vmatpush1.msra.mxu0 %v2576
        %2821 = vmatprep.subr.mxu0 0.0
        %2822 = vmatpush1.msra.mxu0 %v2577
        %2823 = vmatprep.subr.mxu0 0.0
        %2824 = vmatpush1.msra.mxu0 %v2578
        %2825 = vmatprep.subr.mxu0 0.0
        %2826 = vmatpush1.msra.mxu0 %v2579
        %2827 = vmatprep.subr.mxu0 0.0
        %2828 = vmatpush1.msra.mxu0 %v2580
        %2829 = vmatprep.subr.mxu0 0.0
        %2830 = vmatpush1.msra.mxu0 %v2581
        %2831 = vmatprep.subr.mxu0 0.0
        %2832 = vmatpush1.msra.mxu0 %v2582
        %2833 = vmatprep.subr.mxu0 0.0
        %2834 = vmatpush1.msra.mxu0 %v2583
        %2835 = vmatprep.mubr.f32.mxu0 %v2424
        %2836 = vmatmul.mubr.f32.gmra.mrb[0].mxu0 %v1823
        %v2837 = vpop.f32.mrb[0].mxu0
        %v2838 = vadd.f32 %v2733, %v2837
        %v2839 = vpop.f32.mrb[0].mxu0
        %2840 = vmatprep.mubr.f32.mxu0 %v2425
        %2841 = vmatmul.mubr.f32.gmra.mrb[0].mxu0 %v2484
        %v2842 = vpop.f32.mrb[0].mxu0
        %v2843 = vadd.f32 %v2738, %v2842
        %v2844 = vpop.f32.mrb[0].mxu0
        %2845 = vmatprep.mubr.f32.mxu0 %v2426
        %2846 = vmatmul.mubr.f32.gmra.mrb[0].mxu0 %v2487
        %v2847 = vpop.f32.mrb[0].mxu0
        %v2848 = vadd.f32 %v2743, %v2847
        %v2849 = vpop.f32.mrb[0].mxu0
        %2850 = vmatprep.mubr.f32.mxu0 %v2427
        %2851 = vmatmul.mubr.f32.gmra.mrb[0].mxu0 %v2490
        %v2852 = vpop.f32.mrb[0].mxu0
        %v2853 = vadd.f32 %v2748, %v2852
        %v2854 = vpop.f32.mrb[0].mxu0
        %2855 = vmatprep.mubr.f32.mxu0 %v2428
        %2856 = vmatmul.mubr.f32.gmra.mrb[0].mxu0 %v2493
        %v2857 = vpop.f32.mrb[0].mxu0
        %v2858 = vadd.f32 %v2753, %v2857
        %v2859 = vpop.f32.mrb[0].mxu0
        %2860 = vmatprep.mubr.f32.mxu0 %v2429
        %2861 = vmatmul.mubr.f32.gmra.mrb[0].mxu0 %v2496
        %v2862 = vpop.f32.mrb[0].mxu0
        %v2863 = vadd.f32 %v2758, %v2862
        %v2864 = vpop.f32.mrb[0].mxu0
        %2865 = vmatprep.mubr.f32.mxu0 %v2430
        %2866 = vmatmul.mubr.f32.gmra.mrb[0].mxu0 %v2499
        %v2867 = vpop.f32.mrb[0].mxu0
        %v2868 = vadd.f32 %v2763, %v2867
        %v2869 = vpop.f32.mrb[0].mxu0
        %2870 = vmatprep.mubr.f32.mxu0 %v2431
        %2871 = vmatmul.mubr.f32.gmra.mrb[0].mxu0 %v2502
        %v2872 = vpop.f32.mrb[0].mxu0
        %v2873 = vadd.f32 %v2768, %v2872
        %v2874 = vpop.f32.mrb[0].mxu0
        %2875 = vdwg.mxu0
        %2876 = vmatprep.subr.mxu0 0.0
        %2877 = vmatpush1.msra.mxu0 %v2584
        %2878 = vmatprep.subr.mxu0 0.0
        %2879 = vmatpush1.msra.mxu0 %v2585
        %2880 = vmatprep.subr.mxu0 0.0
        %2881 = vmatpush1.msra.mxu0 %v2586
        %2882 = vmatprep.subr.mxu0 0.0
        %2883 = vmatpush1.msra.mxu0 %v2587
        %2884 = vmatprep.subr.mxu0 0.0
        %2885 = vmatpush1.msra.mxu0 %v2588
        %2886 = vmatprep.subr.mxu0 0.0
        %2887 = vmatpush1.msra.mxu0 %v2589
        %2888 = vmatprep.subr.mxu0 0.0
        %2889 = vmatpush1.msra.mxu0 %v2590
        %2890 = vmatprep.subr.mxu0 0.0
        %2891 = vmatpush1.msra.mxu0 %v2591
        %2892 = vmatprep.subr.mxu0 0.0
        %2893 = vmatpush1.msra.mxu0 %v2592
        %2894 = vmatprep.subr.mxu0 0.0
        %2895 = vmatpush1.msra.mxu0 %v2593
        %2896 = vmatprep.subr.mxu0 0.0
        %2897 = vmatpush1.msra.mxu0 %v2594
        %2898 = vmatprep.subr.mxu0 0.0
        %2899 = vmatpush1.msra.mxu0 %v2595
        %2900 = vmatprep.subr.mxu0 0.0
        %2901 = vmatpush1.msra.mxu0 %v2596
        %2902 = vmatprep.subr.mxu0 0.0
        %2903 = vmatpush1.msra.mxu0 %v2597
        %2904 = vmatprep.subr.mxu0 0.0
        %2905 = vmatpush1.msra.mxu0 %v2598
        %2906 = vmatprep.subr.mxu0 0.0
        %2907 = vmatpush1.msra.mxu0 %v2599
        %2908 = vmatprep.subr.mxu0 0.0
        %2909 = vmatpush1.msra.mxu0 %v2600
        %2910 = vmatprep.subr.mxu0 0.0
        %2911 = vmatpush1.msra.mxu0 %v2601
        %2912 = vmatprep.subr.mxu0 0.0
        %2913 = vmatpush1.msra.mxu0 %v2602
        %2914 = vmatprep.subr.mxu0 0.0
        %2915 = vmatpush1.msra.mxu0 %v2603
        %2916 = vmatprep.subr.mxu0 0.0
        %2917 = vmatpush1.msra.mxu0 %v2604
        %2918 = vmatprep.subr.mxu0 0.0
        %2919 = vmatpush1.msra.mxu0 %v2605
        %2920 = vmatprep.subr.mxu0 0.0
        %2921 = vmatpush1.msra.mxu0 %v2606
        %2922 = vmatprep.subr.mxu0 0.0
        %2923 = vmatpush1.msra.mxu0 %v2607
        %2924 = vmatprep.subr.mxu0 0.0
        %2925 = vmatpush1.msra.mxu0 %v2608
        %2926 = vmatprep.subr.mxu0 0.0
        %2927 = vmatpush1.msra.mxu0 %v2609
        %2928 = vmatprep.subr.mxu0 0.0
        %2929 = vmatpush1.msra.mxu0 %v2610
        %2930 = vmatprep.subr.mxu0 0.0
        %2931 = vmatpush1.msra.mxu0 %v2611
        %2932 = vmatprep.subr.mxu0 0.0
        %2933 = vmatpush1.msra.mxu0 %v2612
        %2934 = vmatprep.subr.mxu0 0.0
        %2935 = vmatpush1.msra.mxu0 %v2613
        %2936 = vmatprep.subr.mxu0 0.0
        %2937 = vmatpush1.msra.mxu0 %v2614
        %2938 = vmatprep.subr.mxu0 0.0
        %2939 = vmatpush1.msra.mxu0 %v2615
        %2940 = vmatprep.mubr.f32.mxu0 %v2484
        %2941 = vmatmul.mubr.f32.gmra.mrb[0].mxu0 %v2456
        %v2942 = vpop.f32.mrb[0].mxu0
        %v2943 = vadd.f32 %v2838, %v2942
        %v2944 = vpop.f32.mrb[0].mxu0
        %2945 = vmatprep.mubr.f32.mxu0 %v2487
        %2946 = vmatmul.mubr.f32.gmra.mrb[0].mxu0 %v2459
        %v2947 = vpop.f32.mrb[0].mxu0
        %v2948 = vadd.f32 %v2843, %v2947
        %v2949 = vpop.f32.mrb[0].mxu0
        %2950 = vmatprep.mubr.f32.mxu0 %v2490
        %2951 = vmatmul.mubr.f32.gmra.mrb[0].mxu0 %v2462
        %v2952 = vpop.f32.mrb[0].mxu0
        %v2953 = vadd.f32 %v2848, %v2952
        %v2954 = vpop.f32.mrb[0].mxu0
        %2955 = vmatprep.mubr.f32.mxu0 %v2493
        %2956 = vmatmul.mubr.f32.gmra.mrb[0].mxu0 %v2465
        %v2957 = vpop.f32.mrb[0].mxu0
        %v2958 = vadd.f32 %v2853, %v2957
        %v2959 = vpop.f32.mrb[0].mxu0
        %2960 = vmatprep.mubr.f32.mxu0 %v2496
        %2961 = vmatmul.mubr.f32.gmra.mrb[0].mxu0 %v2468
        %v2962 = vpop.f32.mrb[0].mxu0
        %v2963 = vadd.f32 %v2858, %v2962
        %v2964 = vpop.f32.mrb[0].mxu0
        %2965 = vmatprep.mubr.f32.mxu0 %v2499
        %2966 = vmatmul.mubr.f32.gmra.mrb[0].mxu0 %v2471
        %v2967 = vpop.f32.mrb[0].mxu0
        %v2968 = vadd.f32 %v2863, %v2967
        %v2969 = vpop.f32.mrb[0].mxu0
        %2970 = vmatprep.mubr.f32.mxu0 %v2502
        %2971 = vmatmul.mubr.f32.gmra.mrb[0].mxu0 %v2474
        %v2972 = vpop.f32.mrb[0].mxu0
        %v2973 = vadd.f32 %v2868, %v2972
        %v2974 = vpop.f32.mrb[0].mxu0
        %2975 = vmatprep.mubr.f32.mxu0 %v2518
        %2976 = vmatmul.mubr.f32.gmra.mrb[0].mxu0 %v2514
        %v2977 = vpop.f32.mrb[0].mxu0
        %v2978 = vadd.f32 %v2873, %v2977
        %v2979 = vpop.f32.mrb[0].mxu0
        %2980 = vdwg.mxu0
        %2981 = vmatprep.subr.mxu0 0.0
        %2982 = vmatpush1.msra.mxu0 %v2616
        %2983 = vmatprep.subr.mxu0 0.0
        %2984 = vmatpush1.msra.mxu0 %v2617
        %2985 = vmatprep.subr.mxu0 0.0
        %2986 = vmatpush1.msra.mxu0 %v2618
        %2987 = vmatprep.subr.mxu0 0.0
        %2988 = vmatpush1.msra.mxu0 %v2619
        %2989 = vmatprep.subr.mxu0 0.0
        %2990 = vmatpush1.msra.mxu0 %v2620
        %2991 = vmatprep.subr.mxu0 0.0
        %2992 = vmatpush1.msra.mxu0 %v2621
        %2993 = vmatprep.subr.mxu0 0.0
        %2994 = vmatpush1.msra.mxu0 %v2622
        %2995 = vmatprep.subr.mxu0 0.0
        %2996 = vmatpush1.msra.mxu0 %v2623
        %2997 = vmatprep.subr.mxu0 0.0
        %2998 = vmatpush1.msra.mxu0 %v2624
        %2999 = vmatprep.subr.mxu0 0.0
        %3000 = vmatpush1.msra.mxu0 %v2625
        %3001 = vmatprep.subr.mxu0 0.0
        %3002 = vmatpush1.msra.mxu0 %v2626
        %3003 = vmatprep.subr.mxu0 0.0
        %3004 = vmatpush1.msra.mxu0 %v2627
        %3005 = vmatprep.subr.mxu0 0.0
        %3006 = vmatpush1.msra.mxu0 %v2628
        %3007 = vmatprep.subr.mxu0 0.0
        %3008 = vmatpush1.msra.mxu0 %v2629
        %3009 = vmatprep.subr.mxu0 0.0
        %3010 = vmatpush1.msra.mxu0 %v2630
        %3011 = vmatprep.subr.mxu0 0.0
        %3012 = vmatpush1.msra.mxu0 %v2631
        %3013 = vmatprep.subr.mxu0 0.0
        %3014 = vmatpush1.msra.mxu0 %v2632
        %3015 = vmatprep.subr.mxu0 0.0
        %3016 = vmatpush1.msra.mxu0 %v2633
        %3017 = vmatprep.subr.mxu0 0.0
        %3018 = vmatpush1.msra.mxu0 %v2634
        %3019 = vmatprep.subr.mxu0 0.0
        %3020 = vmatpush1.msra.mxu0 %v2635
        %3021 = vmatprep.subr.mxu0 0.0
        %3022 = vmatpush1.msra.mxu0 %v2636
        %3023 = vmatprep.subr.mxu0 0.0
        %3024 = vmatpush1.msra.mxu0 %v2637
        %3025 = vmatprep.subr.mxu0 0.0
        %3026 = vmatpush1.msra.mxu0 %v2638
        %3027 = vmatprep.subr.mxu0 0.0
        %3028 = vmatpush1.msra.mxu0 %v2639
        %3029 = vmatprep.subr.mxu0 0.0
        %3030 = vmatpush1.msra.mxu0 %v2640
        %3031 = vmatprep.subr.mxu0 0.0
        %3032 = vmatpush1.msra.mxu0 %v2641
        %3033 = vmatprep.subr.mxu0 0.0
        %3034 = vmatpush1.msra.mxu0 %v2642
        %3035 = vmatprep.subr.mxu0 0.0
        %3036 = vmatpush1.msra.mxu0 %v2643
        %3037 = vmatprep.subr.mxu0 0.0
        %3038 = vmatpush1.msra.mxu0 %v2644
        %3039 = vmatprep.subr.mxu0 0.0
        %3040 = vmatpush1.msra.mxu0 %v2645
        %3041 = vmatprep.subr.mxu0 0.0
        %3042 = vmatpush1.msra.mxu0 %v2646
        %3043 = vmatprep.subr.mxu0 0.0
        %3044 = vmatpush1.msra.mxu0 %v2647
        %3045 = vmatprep.mubr.f32.mxu0 %v2459
        %3046 = vmatmul.mubr.f32.gmra.mrb[0].mxu0 %v2425
        %v3047 = vpop.f32.mrb[0].mxu0
        %v3048 = vadd.f32 %v2943, %v3047
        %v3049 = vpop.f32.mrb[0].mxu0
        %3050 = vmatprep.mubr.f32.mxu0 %v2462
        %3051 = vmatmul.mubr.f32.gmra.mrb[0].mxu0 %v2426
        %v3052 = vpop.f32.mrb[0].mxu0
        %v3053 = vadd.f32 %v2948, %v3052
        %v3054 = vpop.f32.mrb[0].mxu0
        %3055 = vmatprep.mubr.f32.mxu0 %v2465
        %3056 = vmatmul.mubr.f32.gmra.mrb[0].mxu0 %v2427
        %v3057 = vpop.f32.mrb[0].mxu0
        %v3058 = vadd.f32 %v2953, %v3057
        %v3059 = vpop.f32.mrb[0].mxu0
        %3060 = vmatprep.mubr.f32.mxu0 %v2468
        %3061 = vmatmul.mubr.f32.gmra.mrb[0].mxu0 %v2428
        %v3062 = vpop.f32.mrb[0].mxu0
        %v3063 = vadd.f32 %v2958, %v3062
        %v3064 = vpop.f32.mrb[0].mxu0
        %3065 = vmatprep.mubr.f32.mxu0 %v2471
        %3066 = vmatmul.mubr.f32.gmra.mrb[0].mxu0 %v2429
        %v3067 = vpop.f32.mrb[0].mxu0
        %v3068 = vadd.f32 %v2963, %v3067
        %v3069 = vpop.f32.mrb[0].mxu0
        %3070 = vmatprep.mubr.f32.mxu0 %v2474
        %3071 = vmatmul.mubr.f32.gmra.mrb[0].mxu0 %v2430
        %v3072 = vpop.f32.mrb[0].mxu0
        %v3073 = vadd.f32 %v2968, %v3072
        %v3074 = vpop.f32.mrb[0].mxu0
        %3075 = vmatprep.mubr.f32.mxu0 %v2514
        %3076 = vmatmul.mubr.f32.gmra.mrb[0].mxu0 %v2431
        %v3077 = vpop.f32.mrb[0].mxu0
        %v3078 = vadd.f32 %v2973, %v3077
        %v3079 = vpop.f32.mrb[0].mxu0
        %3080 = vmatprep.mubr.f32.mxu0 %v1790
        %3081 = vmatmul.mubr.f32.gmra.mrb[0].mxu0 %v1754
        %v3082 = vpop.f32.mrb[0].mxu0
        %v3083 = vadd.f32 %v2978, %v3082
        %v3084 = vpop.f32.mrb[0].mxu0
        %3085 = vdwg.mxu0
        %3086 = vmatprep.subr.mxu0 0.0
        %3087 = vmatpush1.msra.mxu0 %v2648
        %3088 = vmatprep.subr.mxu0 0.0
        %3089 = vmatpush1.msra.mxu0 %v2649
        %3090 = vmatprep.subr.mxu0 0.0
        %3091 = vmatpush1.msra.mxu0 %v2650
        %3092 = vmatprep.subr.mxu0 0.0
        %3093 = vmatpush1.msra.mxu0 %v2651
        %3094 = vmatprep.subr.mxu0 0.0
        %3095 = vmatpush1.msra.mxu0 %v2652
        %3096 = vmatprep.subr.mxu0 0.0
        %3097 = vmatpush1.msra.mxu0 %v2653
        %3098 = vmatprep.subr.mxu0 0.0
        %3099 = vmatpush1.msra.mxu0 %v2654
        %3100 = vmatprep.subr.mxu0 0.0
        %3101 = vmatpush1.msra.mxu0 %v2655
        %3102 = vmatprep.subr.mxu0 0.0
        %3103 = vmatpush1.msra.mxu0 %v2656
        %3104 = vmatprep.subr.mxu0 0.0
        %3105 = vmatpush1.msra.mxu0 %v2657
        %3106 = vmatprep.subr.mxu0 0.0
        %3107 = vmatpush1.msra.mxu0 %v2658
        %3108 = vmatprep.subr.mxu0 0.0
        %3109 = vmatpush1.msra.mxu0 %v2659
        %3110 = vmatprep.subr.mxu0 0.0
        %3111 = vmatpush1.msra.mxu0 %v2660
        %3112 = vmatprep.subr.mxu0 0.0
        %3113 = vmatpush1.msra.mxu0 %v2661
        %3114 = vmatprep.subr.mxu0 0.0
        %3115 = vmatpush1.msra.mxu0 %v2662
        %3116 = vmatprep.subr.mxu0 0.0
        %3117 = vmatpush1.msra.mxu0 %v2663
        %3118 = vmatprep.subr.mxu0 0.0
        %3119 = vmatpush1.msra.mxu0 0.0
        %3120 = vmatprep.subr.mxu0 0.0
        %3121 = vmatpush1.msra.mxu0 0.0
        %3122 = vmatprep.subr.mxu0 0.0
        %3123 = vmatpush1.msra.mxu0 0.0
        %3124 = vmatprep.subr.mxu0 0.0
        %3125 = vmatpush1.msra.mxu0 0.0
        %3126 = vmatprep.subr.mxu0 0.0
        %3127 = vmatpush1.msra.mxu0 0.0
        %3128 = vmatprep.subr.mxu0 0.0
        %3129 = vmatpush1.msra.mxu0 0.0
        %3130 = vmatprep.subr.mxu0 0.0
        %3131 = vmatpush1.msra.mxu0 0.0
        %3132 = vmatprep.subr.mxu0 0.0
        %3133 = vmatpush1.msra.mxu0 0.0
        %3134 = vmatprep.subr.mxu0 0.0
        %3135 = vmatpush1.msra.mxu0 0.0
        %3136 = vmatprep.subr.mxu0 0.0
        %3137 = vmatpush1.msra.mxu0 0.0
        %3138 = vmatprep.subr.mxu0 0.0
        %3139 = vmatpush1.msra.mxu0 0.0
        %3140 = vmatprep.subr.mxu0 0.0
        %3141 = vmatpush1.msra.mxu0 0.0
        %3142 = vmatprep.subr.mxu0 0.0
        %3143 = vmatpush1.msra.mxu0 0.0
        %3144 = vmatprep.subr.mxu0 0.0
        %3145 = vmatpush1.msra.mxu0 0.0
        %3146 = vmatprep.subr.mxu0 0.0
        %3147 = vmatpush1.msra.mxu0 0.0
        %3148 = vmatprep.subr.mxu0 0.0
        %3149 = vmatpush1.msra.mxu0 0.0
        %3150 = vmatprep.mubr.f32.mxu0 0.0
        %3151 = vmatmul.mubr.f32.gmra.mrb[0].mxu0 %v2487
        %v3152 = vpop.f32.mrb[0].mxu0
        %v3153 = vadd.f32 %v3048, %v3152
        %v3154 = vpop.f32.mrb[0].mxu0
        %3155 = vmatprep.mubr.f32.mxu0 0.0
        %3156 = vmatmul.mubr.f32.gmra.mrb[0].mxu0 %v2490
        %v3157 = vpop.f32.mrb[0].mxu0
        %v3158 = vadd.f32 %v3053, %v3157
        %v3159 = vpop.f32.mrb[0].mxu0
        %3160 = vmatprep.mubr.f32.mxu0 0.0
        %3161 = vmatmul.mubr.f32.gmra.mrb[0].mxu0 %v2493
        %v3162 = vpop.f32.mrb[0].mxu0
        %v3163 = vadd.f32 %v3058, %v3162
        %v3164 = vpop.f32.mrb[0].mxu0
        %3165 = vmatprep.mubr.f32.mxu0 0.0
        %3166 = vmatmul.mubr.f32.gmra.mrb[0].mxu0 %v2496
        %v3167 = vpop.f32.mrb[0].mxu0
        %v3168 = vadd.f32 %v3063, %v3167
        %v3169 = vpop.f32.mrb[0].mxu0
        %3170 = vmatprep.mubr.f32.mxu0 0.0
        %3171 = vmatmul.mubr.f32.gmra.mrb[0].mxu0 %v2499
        %v3172 = vpop.f32.mrb[0].mxu0
        %v3173 = vadd.f32 %v3068, %v3172
        %v3174 = vpop.f32.mrb[0].mxu0
        %3175 = vmatprep.mubr.f32.mxu0 0.0
        %3176 = vmatmul.mubr.f32.gmra.mrb[0].mxu0 %v2502
        %v3177 = vpop.f32.mrb[0].mxu0
        %v3178 = vadd.f32 %v3073, %v3177
        %v3179 = vpop.f32.mrb[0].mxu0
        %3180 = vmatprep.mubr.f32.mxu0 0.0
        %3181 = vmatmul.mubr.f32.gmra.mrb[0].mxu0 %v2518
        %v3182 = vpop.f32.mrb[0].mxu0
        %v3183 = vadd.f32 %v3078, %v3182
        %v3184 = vpop.f32.mrb[0].mxu0
        %3185 = vmatprep.mubr.f32.mxu0 0.0
        %3186 = vmatmul.mubr.f32.gmra.mrb[0].mxu0 %v1823
        %v3187 = vpop.f32.mrb[0].mxu0
        %v3188 = vadd.f32 %v3083, %v3187
        %v3189 = vpop.f32.mrb[0].mxu0
        %3190 = vdwg.mxu0
        %vm3191 = vcmask 7168
        %3192 = vst.msk [vmem:[%s307] sm:$0xff] %vm3191, %v3153
        %3193 = vst.msk [vmem:[%s307 + $0x8] sm:$0xff] %vm3191, %v3158
        %3194 = vst.msk [vmem:[%s307 + $0x10] sm:$0xff] %vm3191, %v3163
        %3195 = vst.msk [vmem:[%s307 + $0x18] sm:$0xff] %vm3191, %v3168
        %3196 = vst.msk [vmem:[%s307 + $0x20] sm:$0xff] %vm3191, %v3173
        %3197 = vst.msk [vmem:[%s307 + $0x28] sm:$0xff] %vm3191, %v3178
        %3198 = vst.msk [vmem:[%s307 + $0x30] sm:$0xff] %vm3191, %v3183
        %3199 = vst.msk [vmem:[%s307 + $0x38] sm:$0xff] %vm3191, %v3188
        %p3200 = scmp.lt.s32.totalorder %s20, 1
        %s3201 = scalar_select %p3200, %s20, 1
        %s3202 = smul.addr %s3201, 8
        %s3203 = smul.addr %s3202, 8
        %s3204 = scalar_lea.vmem %s7, %s3203
        // Predicated region
        $region53: #{vision_aided_discriminator_forward.4} parent=47 // pred_check
          %p3205 = pneg %p195
        $region54: #{vision_aided_discriminator_forward.4} parent=47 // pred_check_branch
          %3207 = sbr.rel (%p3205) target = $region56
        $region55: #{vision_aided_discriminator_forward.4} parent=47 // pred_region
          _
        $region56: #{vision_aided_discriminator_forward.4} parent=47 // pred_fallthru
          _
      $region48: #{vision_aided_discriminator_forward.4} parent=5 // pred_fallthru
        _
      %p3208 = scmp.le.s32.totalorder 2, %s15
      // Predicated region
      $region57: #{vision_aided_discriminator_forward.4} parent=5 // pred_check
        %p3209 = pneg %p3208
      $region58: #{vision_aided_discriminator_forward.4} parent=5 // pred_check_branch
        %3211 = sbr.rel (%p3209) target = $region60
      $region59: #{vision_aided_discriminator_forward.4} parent=5 // pred_region
        %s3212 = ssub.s32 %s15, 2
        // Predicated region
        $region61: #{vision_aided_discriminator_forward.4} parent=59 // pred_check
          %p3213 = pneg %p201
        $region62: #{vision_aided_discriminator_forward.4} parent=59 // pred_check_branch
          %3215 = sbr.rel (%p3213) target = $region64
        $region63: #{vision_aided_discriminator_forward.4} parent=59 // pred_region
          %p3216 = scmp.lt.s32.totalorder %s21, 1
          %s3217 = scalar_select %p3216, %s21, 1
          %s3218 = smul.addr %s3217, 8
          %s3219 = smul.addr %s3218, 8
          %s3220 = scalar_lea.vmem %s7, %s3219
        $region64: #{vision_aided_discriminator_forward.4} parent=59 // pred_fallthru
          _
      $region60: #{vision_aided_discriminator_forward.4} parent=5 // pred_fallthru
        _
    $region6: #{vision_aided_discriminator_forward.4} parent=1 // loop_footer
      %s19 = sadd.s32 1, %s15
    $region7: #{vision_aided_discriminator_forward.4} parent=1 // loop_footer_branch
      %14 = sbr.rel target = $region3
    $region8: #{vision_aided_discriminator_forward.4} parent=1 // loop_exit
      _
    %3221 = vsyncpa [#allocation4], 1
    %s3222 = scalar_lea.sflag [#allocation4], 1
    %3223 = vsyncpa %s3222, 1

</llo_original>
